<compile_context>
chip_gen: v5e
topology: v5e:2x2
jax: 0.10.0
libtpu: 0.0.40
codegen_flags: <defaults>
</compile_context>

<pallas_src>
import functools

import jax
import jax.numpy as jnp
from jax import lax
from jax.experimental import pallas as pl
from jax.experimental.pallas import tpu as pltpu


def _nll_kernel(data_ref, w_ref, out_ref, acc_ref,
                *, s_nvals, a_nvals, r_nvals, neg_inv_n):
    S, A, R = s_nvals, a_nvals, r_nvals
    SA = S * A
    C_pad, K = w_ref.shape          # (padded S+R+A, padded S*A + S -> 128)
    tn = data_ref.shape[1]          # lane-dense tile of index columns

    # Accumulator persists across grid steps; init once.
    @pl.when(pl.program_id(0) == 0)
    def _init():
        acc_ref[...] = jnp.zeros_like(acc_ref)

    data = data_ref[...]            # (4, TN) int32
    s = data[0:1, :]                # (1, TN)
    a = data[1:2, :]
    r = data[2:3, :]
    sn = data[3:4, :]

    # Fused one-hot LHS^T (K, TN): rows [0, S*A) select (s*A + a),
    # rows [S*A, S*A+S) select s.  Padded samples (s = K) match nothing.
    sa_row = s * A + a
    s_row = s + SA
    iota_k = lax.broadcasted_iota(jnp.int32, (K, tn), 0)
    oh = jnp.where((iota_k == sa_row) | (iota_k == s_row),
                   jnp.float32(1.0), jnp.float32(0.0))                # (K, TN)

    # One fused MXU matmul: (C_pad, 128) @ (128, TN) -> (C_pad, TN).
    lp_all = jnp.dot(w_ref[...], oh, preferred_element_type=jnp.float32)

    # Combined gather mask over output categories:
    #   rows [0, S)       -> s_next one-hot   (from lq_snext_sa)
    #   rows [S, S+R)     -> r one-hot        (from lq_r_s)
    #   rows [S+R, S+R+A) -> a one-hot        (from lq_a_s)
    # Validity (s < S and s_next < S) and the -1/N scale are folded in, so
    # invalid / padded columns contribute exactly 0 and no finalize rescale
    # is needed.
    iota_c = lax.broadcasted_iota(jnp.int32, (C_pad, tn), 0)
    gather = (iota_c == sn) | (iota_c == (r + S)) | (iota_c == (a + S + R))
    valid = jnp.logical_and(s < S, sn < S)                             # (1, TN)
    scale = jnp.where(gather & valid,
                      jnp.float32(neg_inv_n), jnp.float32(0.0))        # (C_pad, TN)

    acc_ref[...] = acc_ref[...] + lp_all * scale

    # Single cross-lane/sublane reduce + scalar store, only on the last step.
    @pl.when(pl.program_id(0) == pl.num_programs(0) - 1)
    def _finalize():
        out_ref[...] = jnp.sum(acc_ref[...], keepdims=True)


def tabular_nll_loss(params_s_sa, params_r_s, params_a_s, data_idx,
                     *, tile_n=4096):
    """params_s_sa: (S,A,S), params_r_s: (S,R), params_a_s: (S,A),
    data_idx: (N,4) int32 rows [s, a, r, s_next].  Returns scalar NLL loss."""
    S, A, _ = params_s_sa.shape
    R = params_r_s.shape[1]
    N = data_idx.shape[0]
    if N == 0:
        return jnp.float32(0.0)

    # ---- hoisted log_softmax tables, fused into one block-diagonal RHS ----
    lq_sa = jax.nn.log_softmax(params_s_sa.astype(jnp.float32), axis=-1)
    lq_sa = lq_sa.reshape(S * A, S)                   # row = s*A + a
    lq_r = jax.nn.log_softmax(params_r_s.astype(jnp.float32), axis=-1)   # (S, R)
    lq_a = jax.nn.log_softmax(params_a_s.astype(jnp.float32), axis=-1)   # (S, A)

    K_used = S * A + S
    K = max(128, ((K_used + 127) // 128) * 128)        # lane-aligned contraction
    C = S + R + A
    C_pad = max(8, ((C + 7) // 8) * 8)                 # sublane-friendly rows
    w = jnp.zeros((C_pad, K), jnp.float32)
    w = w.at[:S, :S * A].set(lq_sa.T)                  # s_next | (s, a)
    w = w.at[S:S + R, S * A:K_used].set(lq_r.T)        # r      | s
    w = w.at[S + R:C, S * A:K_used].set(lq_a.T)        # a      | s

    # ---- lane-dense (4, N) index layout ----
    # Clamp tile_n to a 128-multiple near N so the whole N fits in 1-2 steps
    # without gross over-padding for tiny inputs.
    tn = max(128, min(((tile_n + 127) // 128) * 128,
                      ((N + 127) // 128) * 128))
    n_pad = ((N + tn - 1) // tn) * tn
    data_t = data_idx.astype(jnp.int32).T              # (4, N)
    if n_pad != N:
        # Sentinel K: >= S (masked invalid) and every derived row index lands
        # outside [0, K) / [0, C_pad), so padded columns are exact zeros.
        pad = jnp.full((4, n_pad - N), K, dtype=jnp.int32)
        data_t = jnp.concatenate([data_t, pad], axis=1)
    n_tiles = n_pad // tn

    kernel = functools.partial(
        _nll_kernel, s_nvals=S, a_nvals=A, r_nvals=R, neg_inv_n=-1.0 / N)

    out = pl.pallas_call(
        kernel,
        out_shape=jax.ShapeDtypeStruct((1, 1), jnp.float32),
        grid=(n_tiles,),
        in_specs=[
            # index stream: tiled along the lane-dense N axis
            pl.BlockSpec((4, tn), lambda i: (0, i)),
            # fused log-prob table: constant index_map -> resident across grid
            pl.BlockSpec((C_pad, K), lambda i: (0, 0)),
        ],
        out_specs=pl.BlockSpec((1, 1), lambda i: (0, 0)),
        scratch_shapes=[pltpu.VMEM((C_pad, tn), jnp.float32)],
        compiler_params=pltpu.CompilerParams(
            dimension_semantics=("arbitrary",)),
    )(data_t, w)

    return out[0, 0]


def _reference_loss(params_s_sa, params_r_s, params_a_s, data_idx):
    """Pure-JAX (vectorized) replica of TabularAugmentedModel.loss_nll."""
    S = params_s_sa.shape[0]
    lq_sa = jax.nn.log_softmax(params_s_sa.astype(jnp.float32), axis=-1)
    lq_r = jax.nn.log_softmax(params_r_s.astype(jnp.float32), axis=-1)
    lq_a = jax.nn.log_softmax(params_a_s.astype(jnp.float32), axis=-1)
    s, a, r, sn = (data_idx[:, k] for k in range(4))
    valid = (s < S) & (sn < S)
    s_c = jnp.clip(s, 0, S - 1)
    sn_c = jnp.clip(sn, 0, S - 1)
    a_c = jnp.clip(a, 0, params_a_s.shape[1] - 1)
    r_c = jnp.clip(r, 0, params_r_s.shape[1] - 1)
    lp = lq_sa[s_c, a_c, sn_c] + lq_r[s_c, r_c] + lq_a[s_c, a_c]
    return -jnp.sum(jnp.where(valid, lp, 0.0)) / data_idx.shape[0]


if __name__ == "__main__":
    S_NVALS, A_NVALS, R_NVALS = 16, 4, 2
    N = 4000

    key = jax.random.PRNGKey(0)
    k1, k2, k3, k4, k5, k6, k7 = jax.random.split(key, 7)

    # Deterministic parameter init (mirrors torch.randn shapes).
    params_s_sa = jax.random.normal(k1, (S_NVALS, A_NVALS, S_NVALS), jnp.float32)
    params_r_s = jax.random.normal(k2, (S_NVALS, R_NVALS), jnp.float32)
    params_a_s = jax.random.normal(k3, (S_NVALS, A_NVALS), jnp.float32)

    # Synthetic transition tuples (s, a, r, s_next); out-of-range samples
    # exercise the skip-mask path; N not a multiple of the tile exercises
    # the padded last tile.
    s_idx = jax.random.randint(k4, (N,), 0, S_NVALS, jnp.int32)
    a_idx = jax.random.randint(k5, (N,), 0, A_NVALS, jnp.int32)
    r_idx = jax.random.randint(k6, (N,), 0, R_NVALS, jnp.int32)
    sn_idx = jax.random.randint(k7, (N,), 0, S_NVALS, jnp.int32)
    s_idx = s_idx.at[0].set(S_NVALS)      # invalid s      -> skipped
    sn_idx = sn_idx.at[1].set(S_NVALS)    # invalid s_next -> skipped
    data_idx = jnp.stack([s_idx, a_idx, r_idx, sn_idx], axis=1).astype(jnp.int32)

    loss = tabular_nll_loss(params_s_sa, params_r_s, params_a_s, data_idx)
    loss = jax.block_until_ready(loss)

    ref = float(_reference_loss(params_s_sa, params_r_s, params_a_s, data_idx))
    assert abs(float(loss) - ref) < 2e-3 * max(1.0, abs(ref)), (float(loss), ref)
    print("KERNEL_OK")
</pallas_src>

<mosaic_0001>
module attributes {stable_mosaic.version = 11 : i64} {
  func.func @_nll_kernel(%arg0: i32, %arg1: memref<4x4096xi32, #tpu.memory_space<vmem>>, %arg2: memref<24x128xf32, #tpu.memory_space<vmem>>, %arg3: memref<1x1xf32, #tpu.memory_space<vmem>>, %arg4: memref<24x4096xf32, #tpu.memory_space<vmem>>) attributes {dimension_semantics = [#tpu.dimension_semantics<arbitrary>], iteration_bounds = array<i64: 1>, scalar_prefetch = 0 : i64, scratch_operands = 1 : i64, tpu.core_type = #tpu.core_type<tc>, window_params = [{transform_indices = @transform_0, window_bounds = array<i64: 4, 4096>}, {pipeline_mode = #tpu.pipeline_mode<synchronous>, transform_indices = @transform_1, window_bounds = array<i64: 24, 128>}, {pipeline_mode = #tpu.pipeline_mode<synchronous>, transform_indices = @transform_2, window_bounds = array<i64: 1, 1>}]} {
    %c0_i32 = arith.constant 0 : i32
    %0 = arith.cmpi eq, %arg0, %c0_i32 : i32
    %1 = arith.extui %0 : i1 to i32
    %c0_i32_0 = arith.constant 0 : i32
    %2 = arith.cmpi ne, %1, %c0_i32_0 : i32
    scf.if %2 {
      %cst_17 = arith.constant 0.000000e+00 : f32
      %56 = vector.broadcast %cst_17 : f32 to vector<24x4096xf32>
      %c0_18 = arith.constant 0 : index
      %c0_19 = arith.constant 0 : index
      %57 = vector.load %arg4[%c0_18, %c0_19] : memref<24x4096xf32, #tpu.memory_space<vmem>>, vector<24x4096xf32>
      tpu.vector_store %arg4[%c0_18, %c0_19], %56 {strides = array<i32>} : memref<24x4096xf32, #tpu.memory_space<vmem>>, vector<24x4096xf32>,
    } else {
    }
    %c0 = arith.constant 0 : index
    %c0_1 = arith.constant 0 : index
    %3 = vector.load %arg1[%c0, %c0_1] : memref<4x4096xi32, #tpu.memory_space<vmem>>, vector<4x4096xi32>
    %4 = vector.extract_strided_slice %3 {offsets = [0, 0], sizes = [1, 4096], strides = [1, 1]} : vector<4x4096xi32> to vector<1x4096xi32>
    %5 = vector.extract_strided_slice %3 {offsets = [1, 0], sizes = [1, 4096], strides = [1, 1]} : vector<4x4096xi32> to vector<1x4096xi32>
    %6 = vector.extract_strided_slice %3 {offsets = [2, 0], sizes = [1, 4096], strides = [1, 1]} : vector<4x4096xi32> to vector<1x4096xi32>
    %7 = vector.extract_strided_slice %3 {offsets = [3, 0], sizes = [1, 4096], strides = [1, 1]} : vector<4x4096xi32> to vector<1x4096xi32>
    %c4_i32 = arith.constant 4 : i32
    %8 = vector.broadcast %c4_i32 : i32 to vector<1x4096xi32>
    %9 = arith.muli %4, %8 : vector<1x4096xi32>
    %10 = arith.addi %9, %5 : vector<1x4096xi32>
    %c64_i32 = arith.constant 64 : i32
    %11 = vector.broadcast %c64_i32 : i32 to vector<1x4096xi32>
    %12 = arith.addi %4, %11 : vector<1x4096xi32>
    %13 = tpu.iota {dimensions = array<i32: 0>} : vector<128x4096xi32>
    %14 = vector.broadcast %10 : vector<1x4096xi32> to vector<128x4096xi32>
    %15 = arith.cmpi eq, %13, %14 : vector<128x4096xi32>
    %16 = vector.broadcast %12 : vector<1x4096xi32> to vector<128x4096xi32>
    %17 = arith.cmpi eq, %13, %16 : vector<128x4096xi32>
    %18 = arith.ori %15, %17 : vector<128x4096xi1>
    %cst = arith.constant 1.000000e+00 : f32
    %cst_2 = arith.constant 0.000000e+00 : f32
    %19 = vector.broadcast %cst : f32 to vector<128x4096xf32>
    %20 = vector.broadcast %cst_2 : f32 to vector<128x4096xf32>
    %21 = arith.select %18, %19, %20 : vector<128x4096xi1>, vector<128x4096xf32>
    %c0_3 = arith.constant 0 : index
    %c0_4 = arith.constant 0 : index
    %22 = vector.load %arg2[%c0_3, %c0_4] : memref<24x128xf32, #tpu.memory_space<vmem>>, vector<24x128xf32>
    %cst_5 = arith.constant dense<0.000000e+00> : vector<24x4096xf32>
    %23 = tpu.matmul %22, %21, %cst_5 {dimension_numbers = #tpu.dot_dimension_numbers<[1], [0], [0], [1], [0, 0, 1, 1], [], []>} : vector<24x128xf32>, vector<128x4096xf32>, vector<24x4096xf32> -> vector<24x4096xf32>
    %24 = tpu.iota {dimensions = array<i32: 0>} : vector<24x4096xi32>
    %25 = vector.broadcast %7 : vector<1x4096xi32> to vector<24x4096xi32>
    %26 = arith.cmpi eq, %24, %25 : vector<24x4096xi32>
    %c16_i32 = arith.constant 16 : i32
    %27 = vector.broadcast %c16_i32 : i32 to vector<1x4096xi32>
    %28 = arith.addi %6, %27 : vector<1x4096xi32>
    %29 = vector.broadcast %28 : vector<1x4096xi32> to vector<24x4096xi32>
    %30 = arith.cmpi eq, %24, %29 : vector<24x4096xi32>
    %31 = arith.ori %26, %30 : vector<24x4096xi1>
    %c16_i32_6 = arith.constant 16 : i32
    %32 = vector.broadcast %c16_i32_6 : i32 to vector<1x4096xi32>
    %33 = arith.addi %5, %32 : vector<1x4096xi32>
    %c2_i32 = arith.constant 2 : i32
    %34 = vector.broadcast %c2_i32 : i32 to vector<1x4096xi32>
    %35 = arith.addi %33, %34 : vector<1x4096xi32>
    %36 = vector.broadcast %35 : vector<1x4096xi32> to vector<24x4096xi32>
    %37 = arith.cmpi eq, %24, %36 : vector<24x4096xi32>
    %38 = arith.ori %31, %37 : vector<24x4096xi1>
    %c16_i32_7 = arith.constant 16 : i32
    %39 = vector.broadcast %c16_i32_7 : i32 to vector<1x4096xi32>
    %40 = arith.cmpi slt, %4, %39 : vector<1x4096xi32>
    %c16_i32_8 = arith.constant 16 : i32
    %41 = vector.broadcast %c16_i32_8 : i32 to vector<1x4096xi32>
    %42 = arith.cmpi slt, %7, %41 : vector<1x4096xi32>
    %43 = arith.andi %40, %42 : vector<1x4096xi1>
    %44 = vector.broadcast %43 : vector<1x4096xi1> to vector<24x4096xi1>
    %45 = arith.andi %38, %44 : vector<24x4096xi1>
    %cst_9 = arith.constant -2.500000e-04 : f32
    %cst_10 = arith.constant 0.000000e+00 : f32
    %46 = vector.broadcast %cst_9 : f32 to vector<24x4096xf32>
    %47 = vector.broadcast %cst_10 : f32 to vector<24x4096xf32>
    %48 = arith.select %45, %46, %47 : vector<24x4096xi1>, vector<24x4096xf32>
    %c0_11 = arith.constant 0 : index
    %c0_12 = arith.constant 0 : index
    %49 = vector.load %arg4[%c0_11, %c0_12] : memref<24x4096xf32, #tpu.memory_space<vmem>>, vector<24x4096xf32>
    %50 = arith.mulf %23, %48 : vector<24x4096xf32>
    %51 = arith.addf %49, %50 : vector<24x4096xf32>
    %c0_13 = arith.constant 0 : index
    %c0_14 = arith.constant 0 : index
    %52 = vector.load %arg4[%c0_13, %c0_14] : memref<24x4096xf32, #tpu.memory_space<vmem>>, vector<24x4096xf32>
    tpu.vector_store %arg4[%c0_13, %c0_14], %51 {strides = array<i32>} : memref<24x4096xf32, #tpu.memory_space<vmem>>, vector<24x4096xf32>,
    %c0_i32_15 = arith.constant 0 : i32
    %53 = arith.cmpi eq, %arg0, %c0_i32_15 : i32
    %54 = arith.extui %53 : i1 to i32
    %c0_i32_16 = arith.constant 0 : i32
    %55 = arith.cmpi ne, %54, %c0_i32_16 : i32
    scf.if %55 {
      %c0_17 = arith.constant 0 : index
      %c0_18 = arith.constant 0 : index
      %56 = vector.load %arg4[%c0_17, %c0_18] : memref<24x4096xf32, #tpu.memory_space<vmem>>, vector<24x4096xf32>
      %57 = vector.shape_cast %56 : vector<24x4096xf32> to vector<1x24x4096xf32>
      %cst_19 = arith.constant dense<0.000000e+00> : vector<1xf32>
      %58 = vector.multi_reduction <add>, %57, %cst_19 [1, 2] : vector<1x24x4096xf32> to vector<1xf32>
      %59 = vector.shape_cast %58 : vector<1xf32> to vector<1x1x1xf32>
      %60 = vector.extract %59[0, 0, 0] : f32 from vector<1x1x1xf32>
      %61 = vector.broadcast %60 : f32 to vector<1x1xf32>
      %c0_20 = arith.constant 0 : index
      %c0_21 = arith.constant 0 : index
      %62 = vector.load %arg3[%c0_20, %c0_21] : memref<1x1xf32, #tpu.memory_space<vmem>>, vector<1x1xf32>
      tpu.vector_store %arg3[%c0_20, %c0_21], %61 {strides = array<i32>} : memref<1x1xf32, #tpu.memory_space<vmem>>, vector<1x1xf32>,
    } else {
    }
    return
  }
  func.func @transform_0(%arg0: i32) -> (i32, i32) {
    %c0_i32 = arith.constant 0 : i32
    %c0_i32_0 = arith.constant 0 : i32
    return %c0_i32, %arg0 : i32, i32
  }
  func.func @transform_1(%arg0: i32) -> (i32, i32) {
    %c0_i32 = arith.constant 0 : i32
    %c0_i32_0 = arith.constant 0 : i32
    %c0_i32_1 = arith.constant 0 : i32
    return %c0_i32, %c0_i32_0 : i32, i32
  }
  func.func @transform_2(%arg0: i32) -> (i32, i32) {
    %c0_i32 = arith.constant 0 : i32
    %c0_i32_0 = arith.constant 0 : i32
    %c0_i32_1 = arith.constant 0 : i32
    return %c0_i32, %c0_i32_0 : i32, i32
  }
}

</mosaic_0001>

<llo_original>
// kernel: tpu_custom_call.1
$region0: #{tpu_custom_call.1}
  #allocation0 [shape = 'u32[]', space=smem, size = 0x4, offset = 0x4, fixed_abs, tag = 'smem constant byte address 0x4 - core index']
  #allocation1 [shape = 'u32[72,128]{1,0:T(1,128)}', space=vmem, size = 0x9000, scoped, tag = 'internal scratch']
  #allocation2 [shape = 'f32[24,4096]{1,0:T(8,128)}', space=vmem, size = 0x60000, scoped, tag = 'scratch operand']
  %s0 = inlined_call_operand.hbm [shape: s32[4,4096], index: 0, kind: input, shape index: {}]
  %s1 = inlined_call_operand.hbm [shape: f32[24,128], index: 1, kind: input, shape index: {}]
  %s2 = inlined_call_operand.hbm [shape: f32[1,1], index: 2, kind: output, shape index: {}]
  %s3 = sld [smem:[#allocation0]]
  $region34: #{tpu_custom_call.1} parent=0
    _
  %s5 = ssub.s32 1, %s3
  %s6 = scalar_select 0, %s5, %s3
  $region1: #{tpu_custom_call.1} parent=0
    #allocation3 [shape = 'u8[65536]{0}', space=vmem, size = 0x10000, scoped, tag = 'input window, operand 0, single buffered']
    #allocation4 [shape = 's32[1]{0}', space=sflag, size = 0x4, scoped, tag = 'scoped memory for tpu_custom_call.1']
    #allocation5 [shape = 's32[1]{0}', space=sflag, size = 0x4, scoped, tag = 'scoped memory for tpu_custom_call.1']
    #allocation6 [shape = 'u8[12288]{0}', space=vmem, size = 0x3000, scoped, tag = 'input window, operand 1, single buffered']
    #allocation7 [shape = 's32[1]{0}', space=sflag, size = 0x4, scoped, tag = 'scoped memory for tpu_custom_call.1']
    #allocation8 [shape = 'u8[512]{0}', space=vmem, size = 0x400, scoped, tag = 'output window, operand 0, single buffered']
    %7 = vsyncpa [#allocation4], 0
    %8 = vsyncpa [#allocation7], 0
    %9 = vsyncpa [#allocation5], 0
    // Predicated region
    $region2: #{tpu_custom_call.1} parent=1 // pred_check
      _
    $region3: #{tpu_custom_call.1} parent=1 // pred_check_branch
      %11 = sbr.rel (0) target = $region5
    $region4: #{tpu_custom_call.1} parent=1 // pred_region
      %13 = vsyncadd [#allocation4], 0
      %s15 = sshll.u32 %s0, 4
      %s16 = int_to_ptr.hbm [resolvable:$true] %s15
      %s17 = sshll.u32 [#allocation3], 4
      %s18 = int_to_ptr.vmem [resolvable:$true] %s17
      %20 = dma.hbm_to_vmem [thread:$0]  %s16, 2048, %s18, [#allocation4]
    $region5: #{tpu_custom_call.1} parent=1 // pred_fallthru
      _
    // Predicated region
    $region6: #{tpu_custom_call.1} parent=1 // pred_check
      _
    $region7: #{tpu_custom_call.1} parent=1 // pred_check_branch
      %22 = sbr.rel (0) target = $region9
    $region8: #{tpu_custom_call.1} parent=1 // pred_region
      %24 = vsyncadd [#allocation7], 0
      %s25 = sshll.u32 %s1, 4
      %s26 = int_to_ptr.hbm [resolvable:$true] %s25
      %s27 = sshll.u32 [#allocation6], 4
      %s28 = int_to_ptr.vmem [resolvable:$true] %s27
      %33 = dma.hbm_to_vmem [thread:$0]  %s26, 384, %s28, [#allocation7], 128, 128, 8
    $region9: #{tpu_custom_call.1} parent=1 // pred_fallthru
      _
    // Predicated region
    $region10: #{tpu_custom_call.1} parent=1 // pred_check
      _
    $region11: #{tpu_custom_call.1} parent=1 // pred_check_branch
      %35 = sbr.rel (0) target = $region13
    $region12: #{tpu_custom_call.1} parent=1 // pred_region
      %37 = dma.done [#allocation4], 2048
    $region13: #{tpu_custom_call.1} parent=1 // pred_fallthru
      _
    // Predicated region
    $region14: #{tpu_custom_call.1} parent=1 // pred_check
      _
    $region15: #{tpu_custom_call.1} parent=1 // pred_check_branch
      %39 = sbr.rel (0) target = $region17
    $region16: #{tpu_custom_call.1} parent=1 // pred_region
      %41 = dma.done [#allocation7], 384
    $region17: #{tpu_custom_call.1} parent=1 // pred_fallthru
      _
    %p42 = scmp.eq.s32.totalorder 0, 0
    // Predicated region
    $region18: #{tpu_custom_call.1} parent=1 // pred_check
      %p43 = pneg %p42
    $region19: #{tpu_custom_call.1} parent=1 // pred_check_branch
      %45 = sbr.rel (%p43) target = $region21
    $region20: #{tpu_custom_call.1} parent=1 // pred_region
      %46 = vst [vmem:[#allocation2] sm:$0xff] 0.0
      %47 = vst [vmem:[#allocation2 + $0x8] sm:$0xff] 0.0
      %48 = vst [vmem:[#allocation2 + $0x10] sm:$0xff] 0.0
      %49 = vst [vmem:[#allocation2 + $0x18] sm:$0xff] 0.0
      %50 = vst [vmem:[#allocation2 + $0x20] sm:$0xff] 0.0
      %51 = vst [vmem:[#allocation2 + $0x28] sm:$0xff] 0.0
      %52 = vst [vmem:[#allocation2 + $0x30] sm:$0xff] 0.0
      %53 = vst [vmem:[#allocation2 + $0x38] sm:$0xff] 0.0
      %54 = vst [vmem:[#allocation2 + $0x40] sm:$0xff] 0.0
      %55 = vst [vmem:[#allocation2 + $0x48] sm:$0xff] 0.0
      %56 = vst [vmem:[#allocation2 + $0x50] sm:$0xff] 0.0
      %57 = vst [vmem:[#allocation2 + $0x58] sm:$0xff] 0.0
      %58 = vst [vmem:[#allocation2 + $0x60] sm:$0xff] 0.0
      %59 = vst [vmem:[#allocation2 + $0x68] sm:$0xff] 0.0
      %60 = vst [vmem:[#allocation2 + $0x70] sm:$0xff] 0.0
      %61 = vst [vmem:[#allocation2 + $0x78] sm:$0xff] 0.0
      %62 = vst [vmem:[#allocation2 + $0x80] sm:$0xff] 0.0
      %63 = vst [vmem:[#allocation2 + $0x88] sm:$0xff] 0.0
      %64 = vst [vmem:[#allocation2 + $0x90] sm:$0xff] 0.0
      %65 = vst [vmem:[#allocation2 + $0x98] sm:$0xff] 0.0
      %66 = vst [vmem:[#allocation2 + $0xa0] sm:$0xff] 0.0
      %67 = vst [vmem:[#allocation2 + $0xa8] sm:$0xff] 0.0
      %68 = vst [vmem:[#allocation2 + $0xb0] sm:$0xff] 0.0
      %69 = vst [vmem:[#allocation2 + $0xb8] sm:$0xff] 0.0
      %70 = vst [vmem:[#allocation2 + $0xc0] sm:$0xff] 0.0
      %71 = vst [vmem:[#allocation2 + $0xc8] sm:$0xff] 0.0
      %72 = vst [vmem:[#allocation2 + $0xd0] sm:$0xff] 0.0
      %73 = vst [vmem:[#allocation2 + $0xd8] sm:$0xff] 0.0
      %74 = vst [vmem:[#allocation2 + $0xe0] sm:$0xff] 0.0
      %75 = vst [vmem:[#allocation2 + $0xe8] sm:$0xff] 0.0
      %76 = vst [vmem:[#allocation2 + $0xf0] sm:$0xff] 0.0
      %77 = vst [vmem:[#allocation2 + $0xf8] sm:$0xff] 0.0
      %78 = vst [vmem:[#allocation2 + $0x100] sm:$0xff] 0.0
      %79 = vst [vmem:[#allocation2 + $0x108] sm:$0xff] 0.0
      %80 = vst [vmem:[#allocation2 + $0x110] sm:$0xff] 0.0
      %81 = vst [vmem:[#allocation2 + $0x118] sm:$0xff] 0.0
      %82 = vst [vmem:[#allocation2 + $0x120] sm:$0xff] 0.0
      %83 = vst [vmem:[#allocation2 + $0x128] sm:$0xff] 0.0
      %84 = vst [vmem:[#allocation2 + $0x130] sm:$0xff] 0.0
      %85 = vst [vmem:[#allocation2 + $0x138] sm:$0xff] 0.0
      %86 = vst [vmem:[#allocation2 + $0x140] sm:$0xff] 0.0
      %87 = vst [vmem:[#allocation2 + $0x148] sm:$0xff] 0.0
      %88 = vst [vmem:[#allocation2 + $0x150] sm:$0xff] 0.0
      %89 = vst [vmem:[#allocation2 + $0x158] sm:$0xff] 0.0
      %90 = vst [vmem:[#allocation2 + $0x160] sm:$0xff] 0.0
      %91 = vst [vmem:[#allocation2 + $0x168] sm:$0xff] 0.0
      %92 = vst [vmem:[#allocation2 + $0x170] sm:$0xff] 0.0
      %93 = vst [vmem:[#allocation2 + $0x178] sm:$0xff] 0.0
      %94 = vst [vmem:[#allocation2 + $0x180] sm:$0xff] 0.0
      %95 = vst [vmem:[#allocation2 + $0x188] sm:$0xff] 0.0
      %96 = vst [vmem:[#allocation2 + $0x190] sm:$0xff] 0.0
      %97 = vst [vmem:[#allocation2 + $0x198] sm:$0xff] 0.0
      %98 = vst [vmem:[#allocation2 + $0x1a0] sm:$0xff] 0.0
      %99 = vst [vmem:[#allocation2 + $0x1a8] sm:$0xff] 0.0
      %100 = vst [vmem:[#allocation2 + $0x1b0] sm:$0xff] 0.0
      %101 = vst [vmem:[#allocation2 + $0x1b8] sm:$0xff] 0.0
      %102 = vst [vmem:[#allocation2 + $0x1c0] sm:$0xff] 0.0
      %103 = vst [vmem:[#allocation2 + $0x1c8] sm:$0xff] 0.0
      %104 = vst [vmem:[#allocation2 + $0x1d0] sm:$0xff] 0.0
      %105 = vst [vmem:[#allocation2 + $0x1d8] sm:$0xff] 0.0
      %106 = vst [vmem:[#allocation2 + $0x1e0] sm:$0xff] 0.0
      %107 = vst [vmem:[#allocation2 + $0x1e8] sm:$0xff] 0.0
      %108 = vst [vmem:[#allocation2 + $0x1f0] sm:$0xff] 0.0
      %109 = vst [vmem:[#allocation2 + $0x1f8] sm:$0xff] 0.0
      %110 = vst [vmem:[#allocation2 + $0x200] sm:$0xff] 0.0
      %111 = vst [vmem:[#allocation2 + $0x208] sm:$0xff] 0.0
      %112 = vst [vmem:[#allocation2 + $0x210] sm:$0xff] 0.0
      %113 = vst [vmem:[#allocation2 + $0x218] sm:$0xff] 0.0
      %114 = vst [vmem:[#allocation2 + $0x220] sm:$0xff] 0.0
      %115 = vst [vmem:[#allocation2 + $0x228] sm:$0xff] 0.0
      %116 = vst [vmem:[#allocation2 + $0x230] sm:$0xff] 0.0
      %117 = vst [vmem:[#allocation2 + $0x238] sm:$0xff] 0.0
      %118 = vst [vmem:[#allocation2 + $0x240] sm:$0xff] 0.0
      %119 = vst [vmem:[#allocation2 + $0x248] sm:$0xff] 0.0
      %120 = vst [vmem:[#allocation2 + $0x250] sm:$0xff] 0.0
      %121 = vst [vmem:[#allocation2 + $0x258] sm:$0xff] 0.0
      %122 = vst [vmem:[#allocation2 + $0x260] sm:$0xff] 0.0
      %123 = vst [vmem:[#allocation2 + $0x268] sm:$0xff] 0.0
      %124 = vst [vmem:[#allocation2 + $0x270] sm:$0xff] 0.0
      %125 = vst [vmem:[#allocation2 + $0x278] sm:$0xff] 0.0
      %126 = vst [vmem:[#allocation2 + $0x280] sm:$0xff] 0.0
      %127 = vst [vmem:[#allocation2 + $0x288] sm:$0xff] 0.0
      %128 = vst [vmem:[#allocation2 + $0x290] sm:$0xff] 0.0
      %129 = vst [vmem:[#allocation2 + $0x298] sm:$0xff] 0.0
      %130 = vst [vmem:[#allocation2 + $0x2a0] sm:$0xff] 0.0
      %131 = vst [vmem:[#allocation2 + $0x2a8] sm:$0xff] 0.0
      %132 = vst [vmem:[#allocation2 + $0x2b0] sm:$0xff] 0.0
      %133 = vst [vmem:[#allocation2 + $0x2b8] sm:$0xff] 0.0
      %134 = vst [vmem:[#allocation2 + $0x2c0] sm:$0xff] 0.0
      %135 = vst [vmem:[#allocation2 + $0x2c8] sm:$0xff] 0.0
      %136 = vst [vmem:[#allocation2 + $0x2d0] sm:$0xff] 0.0
      %137 = vst [vmem:[#allocation2 + $0x2d8] sm:$0xff] 0.0
      %138 = vst [vmem:[#allocation2 + $0x2e0] sm:$0xff] 0.0
      %139 = vst [vmem:[#allocation2 + $0x2e8] sm:$0xff] 0.0
      %140 = vst [vmem:[#allocation2 + $0x2f0] sm:$0xff] 0.0
      %141 = vst [vmem:[#allocation2 + $0x2f8] sm:$0xff] 0.0
    $region21: #{tpu_custom_call.1} parent=1 // pred_fallthru
      _
    %v142 = vld [vmem:[#allocation3] sm:$0xff]
    %v143 = vld [vmem:[#allocation3 + $0x8] sm:$0xff]
    %v144 = vld [vmem:[#allocation3 + $0x10] sm:$0xff]
    %v145 = vld [vmem:[#allocation3 + $0x18] sm:$0xff]
    %v146 = vld [vmem:[#allocation3 + $0x20] sm:$0xff]
    %v147 = vld [vmem:[#allocation3 + $0x28] sm:$0xff]
    %v148 = vld [vmem:[#allocation3 + $0x30] sm:$0xff]
    %v149 = vld [vmem:[#allocation3 + $0x38] sm:$0xff]
    %v150 = vld [vmem:[#allocation3 + $0x40] sm:$0xff]
    %v151 = vld [vmem:[#allocation3 + $0x48] sm:$0xff]
    %v152 = vld [vmem:[#allocation3 + $0x50] sm:$0xff]
    %v153 = vld [vmem:[#allocation3 + $0x58] sm:$0xff]
    %v154 = vld [vmem:[#allocation3 + $0x60] sm:$0xff]
    %v155 = vld [vmem:[#allocation3 + $0x68] sm:$0xff]
    %v156 = vld [vmem:[#allocation3 + $0x70] sm:$0xff]
    %v157 = vld [vmem:[#allocation3 + $0x78] sm:$0xff]
    %v158 = vmul.u32 %v142, 4
    %v159 = vmul.u32 %v143, 4
    %v160 = vmul.u32 %v144, 4
    %v161 = vmul.u32 %v145, 4
    %v162 = vmul.u32 %v146, 4
    %v163 = vmul.u32 %v147, 4
    %v164 = vmul.u32 %v148, 4
    %v165 = vmul.u32 %v149, 4
    %v166 = vmul.u32 %v150, 4
    %v167 = vmul.u32 %v151, 4
    %v168 = vmul.u32 %v152, 4
    %v169 = vmul.u32 %v153, 4
    %v170 = vmul.u32 %v154, 4
    %v171 = vmul.u32 %v155, 4
    %v172 = vmul.u32 %v156, 4
    %v173 = vmul.u32 %v157, 4
    %v174 = vrot.slane %v142, 5
    %v175 = vrot.slane %v174, 4
    %v176 = vrot.slane %v143, 5
    %v177 = vrot.slane %v176, 4
    %v178 = vrot.slane %v144, 5
    %v179 = vrot.slane %v178, 4
    %v180 = vrot.slane %v145, 5
    %v181 = vrot.slane %v180, 4
    %v182 = vrot.slane %v146, 5
    %v183 = vrot.slane %v182, 4
    %v184 = vrot.slane %v147, 5
    %v185 = vrot.slane %v184, 4
    %v186 = vrot.slane %v148, 5
    %v187 = vrot.slane %v186, 4
    %v188 = vrot.slane %v149, 5
    %v189 = vrot.slane %v188, 4
    %v190 = vrot.slane %v150, 5
    %v191 = vrot.slane %v190, 4
    %v192 = vrot.slane %v151, 5
    %v193 = vrot.slane %v192, 4
    %v194 = vrot.slane %v152, 5
    %v195 = vrot.slane %v194, 4
    %v196 = vrot.slane %v153, 5
    %v197 = vrot.slane %v196, 4
    %v198 = vrot.slane %v154, 5
    %v199 = vrot.slane %v198, 4
    %v200 = vrot.slane %v155, 5
    %v201 = vrot.slane %v200, 4
    %v202 = vrot.slane %v156, 5
    %v203 = vrot.slane %v202, 4
    %v204 = vrot.slane %v157, 5
    %v205 = vrot.slane %v204, 4
    %v206 = vadd.s32 %v158, %v175
    %v207 = vadd.s32 %v159, %v177
    %v208 = vadd.s32 %v160, %v179
    %v209 = vadd.s32 %v161, %v181
    %v210 = vadd.s32 %v162, %v183
    %v211 = vadd.s32 %v163, %v185
    %v212 = vadd.s32 %v164, %v187
    %v213 = vadd.s32 %v165, %v189
    %v214 = vadd.s32 %v166, %v191
    %v215 = vadd.s32 %v167, %v193
    %v216 = vadd.s32 %v168, %v195
    %v217 = vadd.s32 %v169, %v197
    %v218 = vadd.s32 %v170, %v199
    %v219 = vadd.s32 %v171, %v201
    %v220 = vadd.s32 %v172, %v203
    %v221 = vadd.s32 %v173, %v205
    %v222 = vadd.s32 %v142, 64
    %v223 = vadd.s32 %v143, 64
    %v224 = vadd.s32 %v144, 64
    %v225 = vadd.s32 %v145, 64
    %v226 = vadd.s32 %v146, 64
    %v227 = vadd.s32 %v147, 64
    %v228 = vadd.s32 %v148, 64
    %v229 = vadd.s32 %v149, 64
    %v230 = vadd.s32 %v150, 64
    %v231 = vadd.s32 %v151, 64
    %v232 = vadd.s32 %v152, 64
    %v233 = vadd.s32 %v153, 64
    %v234 = vadd.s32 %v154, 64
    %v235 = vadd.s32 %v155, 64
    %v236 = vadd.s32 %v156, 64
    %v237 = vadd.s32 %v157, 64
    %v238 = vlaneseq
    %v239 = vshrl.u32 %v238, 7
    %v240 = vadd.s32 %v239, 8
    %v241 = vadd.s32 %v239, 16
    %v242 = vadd.s32 %v239, 24
    %v243 = vadd.s32 %v239, 32
    %v244 = vadd.s32 %v239, 40
    %v245 = vadd.s32 %v239, 48
    %v246 = vadd.s32 %v239, 56
    %v247 = vadd.s32 %v239, 64
    %v248 = vadd.s32 %v239, 72
    %v249 = vadd.s32 %v239, 80
    %v250 = vadd.s32 %v239, 88
    %v251 = vadd.s32 %v239, 96
    %v252 = vadd.s32 %v239, 104
    %v253 = vadd.s32 %v239, 112
    %v254 = vadd.s32 %v239, 120
    %v255 = vperm.slane %v206, 0
    %v256 = vperm.slane %v206, 4
    %v257 = vperm.slane %v207, 0
    %v258 = vperm.slane %v207, 4
    %v259 = vperm.slane %v208, 0
    %v260 = vperm.slane %v208, 4
    %v261 = vperm.slane %v209, 0
    %v262 = vperm.slane %v209, 4
    %v263 = vperm.slane %v210, 0
    %v264 = vperm.slane %v210, 4
    %v265 = vperm.slane %v211, 0
    %v266 = vperm.slane %v211, 4
    %v267 = vperm.slane %v212, 0
    %v268 = vperm.slane %v212, 4
    %v269 = vperm.slane %v213, 0
    %v270 = vperm.slane %v213, 4
    %v271 = vperm.slane %v214, 0
    %v272 = vperm.slane %v214, 4
    %v273 = vperm.slane %v215, 0
    %v274 = vperm.slane %v215, 4
    %v275 = vperm.slane %v216, 0
    %v276 = vperm.slane %v216, 4
    %v277 = vperm.slane %v217, 0
    %v278 = vperm.slane %v217, 4
    %v279 = vperm.slane %v218, 0
    %v280 = vperm.slane %v218, 4
    %v281 = vperm.slane %v219, 0
    %v282 = vperm.slane %v219, 4
    %v283 = vperm.slane %v220, 0
    %v284 = vperm.slane %v220, 4
    %v285 = vperm.slane %v221, 0
    %v286 = vperm.slane %v221, 4
    %v287 = vperm.slane %v255, 0
    %v288 = vperm.slane %v256, 0
    %v289 = vperm.slane %v257, 0
    %v290 = vperm.slane %v258, 0
    %v291 = vperm.slane %v259, 0
    %v292 = vperm.slane %v260, 0
    %v293 = vperm.slane %v261, 0
    %v294 = vperm.slane %v262, 0
    %v295 = vperm.slane %v263, 0
    %v296 = vperm.slane %v264, 0
    %v297 = vperm.slane %v265, 0
    %v298 = vperm.slane %v266, 0
    %v299 = vperm.slane %v267, 0
    %v300 = vperm.slane %v268, 0
    %v301 = vperm.slane %v269, 0
    %v302 = vperm.slane %v270, 0
    %v303 = vperm.slane %v271, 0
    %v304 = vperm.slane %v272, 0
    %v305 = vperm.slane %v273, 0
    %v306 = vperm.slane %v274, 0
    %v307 = vperm.slane %v275, 0
    %v308 = vperm.slane %v276, 0
    %v309 = vperm.slane %v277, 0
    %v310 = vperm.slane %v278, 0
    %v311 = vperm.slane %v279, 0
    %v312 = vperm.slane %v280, 0
    %v313 = vperm.slane %v281, 0
    %v314 = vperm.slane %v282, 0
    %v315 = vperm.slane %v283, 0
    %v316 = vperm.slane %v284, 0
    %v317 = vperm.slane %v285, 0
    %v318 = vperm.slane %v286, 0
    %vm319 = vcmp.eq.s32.totalorder %v239, %v287
    %vm320 = vcmp.eq.s32.totalorder %v239, %v288
    %vm321 = vcmp.eq.s32.totalorder %v239, %v289
    %vm322 = vcmp.eq.s32.totalorder %v239, %v290
    %vm323 = vcmp.eq.s32.totalorder %v239, %v291
    %vm324 = vcmp.eq.s32.totalorder %v239, %v292
    %vm325 = vcmp.eq.s32.totalorder %v239, %v293
    %vm326 = vcmp.eq.s32.totalorder %v239, %v294
    %vm327 = vcmp.eq.s32.totalorder %v239, %v295
    %vm328 = vcmp.eq.s32.totalorder %v239, %v296
    %vm329 = vcmp.eq.s32.totalorder %v239, %v297
    %vm330 = vcmp.eq.s32.totalorder %v239, %v298
    %vm331 = vcmp.eq.s32.totalorder %v239, %v299
    %vm332 = vcmp.eq.s32.totalorder %v239, %v300
    %vm333 = vcmp.eq.s32.totalorder %v239, %v301
    %vm334 = vcmp.eq.s32.totalorder %v239, %v302
    %vm335 = vcmp.eq.s32.totalorder %v239, %v303
    %vm336 = vcmp.eq.s32.totalorder %v239, %v304
    %vm337 = vcmp.eq.s32.totalorder %v239, %v305
    %vm338 = vcmp.eq.s32.totalorder %v239, %v306
    %vm339 = vcmp.eq.s32.totalorder %v239, %v307
    %vm340 = vcmp.eq.s32.totalorder %v239, %v308
    %vm341 = vcmp.eq.s32.totalorder %v239, %v309
    %vm342 = vcmp.eq.s32.totalorder %v239, %v310
    %vm343 = vcmp.eq.s32.totalorder %v239, %v311
    %vm344 = vcmp.eq.s32.totalorder %v239, %v312
    %vm345 = vcmp.eq.s32.totalorder %v239, %v313
    %vm346 = vcmp.eq.s32.totalorder %v239, %v314
    %vm347 = vcmp.eq.s32.totalorder %v239, %v315
    %vm348 = vcmp.eq.s32.totalorder %v239, %v316
    %vm349 = vcmp.eq.s32.totalorder %v239, %v317
    %vm350 = vcmp.eq.s32.totalorder %v239, %v318
    %vm351 = vcmp.eq.s32.totalorder %v240, %v287
    %vm352 = vcmp.eq.s32.totalorder %v240, %v288
    %vm353 = vcmp.eq.s32.totalorder %v240, %v289
    %vm354 = vcmp.eq.s32.totalorder %v240, %v290
    %vm355 = vcmp.eq.s32.totalorder %v240, %v291
    %vm356 = vcmp.eq.s32.totalorder %v240, %v292
    %vm357 = vcmp.eq.s32.totalorder %v240, %v293
    %vm358 = vcmp.eq.s32.totalorder %v240, %v294
    %vm359 = vcmp.eq.s32.totalorder %v240, %v295
    %vm360 = vcmp.eq.s32.totalorder %v240, %v296
    %vm361 = vcmp.eq.s32.totalorder %v240, %v297
    %vm362 = vcmp.eq.s32.totalorder %v240, %v298
    %vm363 = vcmp.eq.s32.totalorder %v240, %v299
    %vm364 = vcmp.eq.s32.totalorder %v240, %v300
    %vm365 = vcmp.eq.s32.totalorder %v240, %v301
    %vm366 = vcmp.eq.s32.totalorder %v240, %v302
    %vm367 = vcmp.eq.s32.totalorder %v240, %v303
    %vm368 = vcmp.eq.s32.totalorder %v240, %v304
    %vm369 = vcmp.eq.s32.totalorder %v240, %v305
    %vm370 = vcmp.eq.s32.totalorder %v240, %v306
    %vm371 = vcmp.eq.s32.totalorder %v240, %v307
    %vm372 = vcmp.eq.s32.totalorder %v240, %v308
    %vm373 = vcmp.eq.s32.totalorder %v240, %v309
    %vm374 = vcmp.eq.s32.totalorder %v240, %v310
    %vm375 = vcmp.eq.s32.totalorder %v240, %v311
    %vm376 = vcmp.eq.s32.totalorder %v240, %v312
    %vm377 = vcmp.eq.s32.totalorder %v240, %v313
    %vm378 = vcmp.eq.s32.totalorder %v240, %v314
    %vm379 = vcmp.eq.s32.totalorder %v240, %v315
    %vm380 = vcmp.eq.s32.totalorder %v240, %v316
    %vm381 = vcmp.eq.s32.totalorder %v240, %v317
    %vm382 = vcmp.eq.s32.totalorder %v240, %v318
    %vm383 = vcmp.eq.s32.totalorder %v241, %v287
    %vm384 = vcmp.eq.s32.totalorder %v241, %v288
    %vm385 = vcmp.eq.s32.totalorder %v241, %v289
    %vm386 = vcmp.eq.s32.totalorder %v241, %v290
    %vm387 = vcmp.eq.s32.totalorder %v241, %v291
    %vm388 = vcmp.eq.s32.totalorder %v241, %v292
    %vm389 = vcmp.eq.s32.totalorder %v241, %v293
    %vm390 = vcmp.eq.s32.totalorder %v241, %v294
    %vm391 = vcmp.eq.s32.totalorder %v241, %v295
    %vm392 = vcmp.eq.s32.totalorder %v241, %v296
    %vm393 = vcmp.eq.s32.totalorder %v241, %v297
    %vm394 = vcmp.eq.s32.totalorder %v241, %v298
    %vm395 = vcmp.eq.s32.totalorder %v241, %v299
    %vm396 = vcmp.eq.s32.totalorder %v241, %v300
    %vm397 = vcmp.eq.s32.totalorder %v241, %v301
    %vm398 = vcmp.eq.s32.totalorder %v241, %v302
    %vm399 = vcmp.eq.s32.totalorder %v241, %v303
    %vm400 = vcmp.eq.s32.totalorder %v241, %v304
    %vm401 = vcmp.eq.s32.totalorder %v241, %v305
    %vm402 = vcmp.eq.s32.totalorder %v241, %v306
    %vm403 = vcmp.eq.s32.totalorder %v241, %v307
    %vm404 = vcmp.eq.s32.totalorder %v241, %v308
    %vm405 = vcmp.eq.s32.totalorder %v241, %v309
    %vm406 = vcmp.eq.s32.totalorder %v241, %v310
    %vm407 = vcmp.eq.s32.totalorder %v241, %v311
    %vm408 = vcmp.eq.s32.totalorder %v241, %v312
    %vm409 = vcmp.eq.s32.totalorder %v241, %v313
    %vm410 = vcmp.eq.s32.totalorder %v241, %v314
    %vm411 = vcmp.eq.s32.totalorder %v241, %v315
    %vm412 = vcmp.eq.s32.totalorder %v241, %v316
    %vm413 = vcmp.eq.s32.totalorder %v241, %v317
    %vm414 = vcmp.eq.s32.totalorder %v241, %v318
    %vm415 = vcmp.eq.s32.totalorder %v242, %v287
    %vm416 = vcmp.eq.s32.totalorder %v242, %v288
    %vm417 = vcmp.eq.s32.totalorder %v242, %v289
    %vm418 = vcmp.eq.s32.totalorder %v242, %v290
    %vm419 = vcmp.eq.s32.totalorder %v242, %v291
    %vm420 = vcmp.eq.s32.totalorder %v242, %v292
    %vm421 = vcmp.eq.s32.totalorder %v242, %v293
    %vm422 = vcmp.eq.s32.totalorder %v242, %v294
    %vm423 = vcmp.eq.s32.totalorder %v242, %v295
    %vm424 = vcmp.eq.s32.totalorder %v242, %v296
    %vm425 = vcmp.eq.s32.totalorder %v242, %v297
    %vm426 = vcmp.eq.s32.totalorder %v242, %v298
    %vm427 = vcmp.eq.s32.totalorder %v242, %v299
    %vm428 = vcmp.eq.s32.totalorder %v242, %v300
    %vm429 = vcmp.eq.s32.totalorder %v242, %v301
    %vm430 = vcmp.eq.s32.totalorder %v242, %v302
    %vm431 = vcmp.eq.s32.totalorder %v242, %v303
    %vm432 = vcmp.eq.s32.totalorder %v242, %v304
    %vm433 = vcmp.eq.s32.totalorder %v242, %v305
    %vm434 = vcmp.eq.s32.totalorder %v242, %v306
    %vm435 = vcmp.eq.s32.totalorder %v242, %v307
    %vm436 = vcmp.eq.s32.totalorder %v242, %v308
    %vm437 = vcmp.eq.s32.totalorder %v242, %v309
    %vm438 = vcmp.eq.s32.totalorder %v242, %v310
    %vm439 = vcmp.eq.s32.totalorder %v242, %v311
    %vm440 = vcmp.eq.s32.totalorder %v242, %v312
    %vm441 = vcmp.eq.s32.totalorder %v242, %v313
    %vm442 = vcmp.eq.s32.totalorder %v242, %v314
    %vm443 = vcmp.eq.s32.totalorder %v242, %v315
    %vm444 = vcmp.eq.s32.totalorder %v242, %v316
    %vm445 = vcmp.eq.s32.totalorder %v242, %v317
    %vm446 = vcmp.eq.s32.totalorder %v242, %v318
    %vm447 = vcmp.eq.s32.totalorder %v243, %v287
    %vm448 = vcmp.eq.s32.totalorder %v243, %v288
    %vm449 = vcmp.eq.s32.totalorder %v243, %v289
    %vm450 = vcmp.eq.s32.totalorder %v243, %v290
    %vm451 = vcmp.eq.s32.totalorder %v243, %v291
    %vm452 = vcmp.eq.s32.totalorder %v243, %v292
    %vm453 = vcmp.eq.s32.totalorder %v243, %v293
    %vm454 = vcmp.eq.s32.totalorder %v243, %v294
    %vm455 = vcmp.eq.s32.totalorder %v243, %v295
    %vm456 = vcmp.eq.s32.totalorder %v243, %v296
    %vm457 = vcmp.eq.s32.totalorder %v243, %v297
    %vm458 = vcmp.eq.s32.totalorder %v243, %v298
    %vm459 = vcmp.eq.s32.totalorder %v243, %v299
    %vm460 = vcmp.eq.s32.totalorder %v243, %v300
    %vm461 = vcmp.eq.s32.totalorder %v243, %v301
    %vm462 = vcmp.eq.s32.totalorder %v243, %v302
    %vm463 = vcmp.eq.s32.totalorder %v243, %v303
    %vm464 = vcmp.eq.s32.totalorder %v243, %v304
    %vm465 = vcmp.eq.s32.totalorder %v243, %v305
    %vm466 = vcmp.eq.s32.totalorder %v243, %v306
    %vm467 = vcmp.eq.s32.totalorder %v243, %v307
    %vm468 = vcmp.eq.s32.totalorder %v243, %v308
    %vm469 = vcmp.eq.s32.totalorder %v243, %v309
    %vm470 = vcmp.eq.s32.totalorder %v243, %v310
    %vm471 = vcmp.eq.s32.totalorder %v243, %v311
    %vm472 = vcmp.eq.s32.totalorder %v243, %v312
    %vm473 = vcmp.eq.s32.totalorder %v243, %v313
    %vm474 = vcmp.eq.s32.totalorder %v243, %v314
    %vm475 = vcmp.eq.s32.totalorder %v243, %v315
    %vm476 = vcmp.eq.s32.totalorder %v243, %v316
    %vm477 = vcmp.eq.s32.totalorder %v243, %v317
    %vm478 = vcmp.eq.s32.totalorder %v243, %v318
    %vm479 = vcmp.eq.s32.totalorder %v244, %v287
    %vm480 = vcmp.eq.s32.totalorder %v244, %v288
    %vm481 = vcmp.eq.s32.totalorder %v244, %v289
    %vm482 = vcmp.eq.s32.totalorder %v244, %v290
    %vm483 = vcmp.eq.s32.totalorder %v244, %v291
    %vm484 = vcmp.eq.s32.totalorder %v244, %v292
    %vm485 = vcmp.eq.s32.totalorder %v244, %v293
    %vm486 = vcmp.eq.s32.totalorder %v244, %v294
    %vm487 = vcmp.eq.s32.totalorder %v244, %v295
    %vm488 = vcmp.eq.s32.totalorder %v244, %v296
    %vm489 = vcmp.eq.s32.totalorder %v244, %v297
    %vm490 = vcmp.eq.s32.totalorder %v244, %v298
    %vm491 = vcmp.eq.s32.totalorder %v244, %v299
    %vm492 = vcmp.eq.s32.totalorder %v244, %v300
    %vm493 = vcmp.eq.s32.totalorder %v244, %v301
    %vm494 = vcmp.eq.s32.totalorder %v244, %v302
    %vm495 = vcmp.eq.s32.totalorder %v244, %v303
    %vm496 = vcmp.eq.s32.totalorder %v244, %v304
    %vm497 = vcmp.eq.s32.totalorder %v244, %v305
    %vm498 = vcmp.eq.s32.totalorder %v244, %v306
    %vm499 = vcmp.eq.s32.totalorder %v244, %v307
    %vm500 = vcmp.eq.s32.totalorder %v244, %v308
    %vm501 = vcmp.eq.s32.totalorder %v244, %v309
    %vm502 = vcmp.eq.s32.totalorder %v244, %v310
    %vm503 = vcmp.eq.s32.totalorder %v244, %v311
    %vm504 = vcmp.eq.s32.totalorder %v244, %v312
    %vm505 = vcmp.eq.s32.totalorder %v244, %v313
    %vm506 = vcmp.eq.s32.totalorder %v244, %v314
    %vm507 = vcmp.eq.s32.totalorder %v244, %v315
    %vm508 = vcmp.eq.s32.totalorder %v244, %v316
    %vm509 = vcmp.eq.s32.totalorder %v244, %v317
    %vm510 = vcmp.eq.s32.totalorder %v244, %v318
    %vm511 = vcmp.eq.s32.totalorder %v245, %v287
    %vm512 = vcmp.eq.s32.totalorder %v245, %v288
    %vm513 = vcmp.eq.s32.totalorder %v245, %v289
    %vm514 = vcmp.eq.s32.totalorder %v245, %v290
    %vm515 = vcmp.eq.s32.totalorder %v245, %v291
    %vm516 = vcmp.eq.s32.totalorder %v245, %v292
    %vm517 = vcmp.eq.s32.totalorder %v245, %v293
    %vm518 = vcmp.eq.s32.totalorder %v245, %v294
    %vm519 = vcmp.eq.s32.totalorder %v245, %v295
    %vm520 = vcmp.eq.s32.totalorder %v245, %v296
    %vm521 = vcmp.eq.s32.totalorder %v245, %v297
    %vm522 = vcmp.eq.s32.totalorder %v245, %v298
    %vm523 = vcmp.eq.s32.totalorder %v245, %v299
    %vm524 = vcmp.eq.s32.totalorder %v245, %v300
    %vm525 = vcmp.eq.s32.totalorder %v245, %v301
    %vm526 = vcmp.eq.s32.totalorder %v245, %v302
    %vm527 = vcmp.eq.s32.totalorder %v245, %v303
    %vm528 = vcmp.eq.s32.totalorder %v245, %v304
    %vm529 = vcmp.eq.s32.totalorder %v245, %v305
    %vm530 = vcmp.eq.s32.totalorder %v245, %v306
    %vm531 = vcmp.eq.s32.totalorder %v245, %v307
    %vm532 = vcmp.eq.s32.totalorder %v245, %v308
    %vm533 = vcmp.eq.s32.totalorder %v245, %v309
    %vm534 = vcmp.eq.s32.totalorder %v245, %v310
    %vm535 = vcmp.eq.s32.totalorder %v245, %v311
    %vm536 = vcmp.eq.s32.totalorder %v245, %v312
    %vm537 = vcmp.eq.s32.totalorder %v245, %v313
    %vm538 = vcmp.eq.s32.totalorder %v245, %v314
    %vm539 = vcmp.eq.s32.totalorder %v245, %v315
    %vm540 = vcmp.eq.s32.totalorder %v245, %v316
    %vm541 = vcmp.eq.s32.totalorder %v245, %v317
    %vm542 = vcmp.eq.s32.totalorder %v245, %v318
    %vm543 = vcmp.eq.s32.totalorder %v246, %v287
    %vm544 = vcmp.eq.s32.totalorder %v246, %v288
    %vm545 = vcmp.eq.s32.totalorder %v246, %v289
    %vm546 = vcmp.eq.s32.totalorder %v246, %v290
    %vm547 = vcmp.eq.s32.totalorder %v246, %v291
    %vm548 = vcmp.eq.s32.totalorder %v246, %v292
    %vm549 = vcmp.eq.s32.totalorder %v246, %v293
    %vm550 = vcmp.eq.s32.totalorder %v246, %v294
    %vm551 = vcmp.eq.s32.totalorder %v246, %v295
    %vm552 = vcmp.eq.s32.totalorder %v246, %v296
    %vm553 = vcmp.eq.s32.totalorder %v246, %v297
    %vm554 = vcmp.eq.s32.totalorder %v246, %v298
    %vm555 = vcmp.eq.s32.totalorder %v246, %v299
    %vm556 = vcmp.eq.s32.totalorder %v246, %v300
    %vm557 = vcmp.eq.s32.totalorder %v246, %v301
    %vm558 = vcmp.eq.s32.totalorder %v246, %v302
    %vm559 = vcmp.eq.s32.totalorder %v246, %v303
    %vm560 = vcmp.eq.s32.totalorder %v246, %v304
    %vm561 = vcmp.eq.s32.totalorder %v246, %v305
    %vm562 = vcmp.eq.s32.totalorder %v246, %v306
    %vm563 = vcmp.eq.s32.totalorder %v246, %v307
    %vm564 = vcmp.eq.s32.totalorder %v246, %v308
    %vm565 = vcmp.eq.s32.totalorder %v246, %v309
    %vm566 = vcmp.eq.s32.totalorder %v246, %v310
    %vm567 = vcmp.eq.s32.totalorder %v246, %v311
    %vm568 = vcmp.eq.s32.totalorder %v246, %v312
    %vm569 = vcmp.eq.s32.totalorder %v246, %v313
    %vm570 = vcmp.eq.s32.totalorder %v246, %v314
    %vm571 = vcmp.eq.s32.totalorder %v246, %v315
    %vm572 = vcmp.eq.s32.totalorder %v246, %v316
    %vm573 = vcmp.eq.s32.totalorder %v246, %v317
    %vm574 = vcmp.eq.s32.totalorder %v246, %v318
    %vm575 = vcmp.eq.s32.totalorder %v247, %v287
    %vm576 = vcmp.eq.s32.totalorder %v247, %v288
    %vm577 = vcmp.eq.s32.totalorder %v247, %v289
    %vm578 = vcmp.eq.s32.totalorder %v247, %v290
    %vm579 = vcmp.eq.s32.totalorder %v247, %v291
    %vm580 = vcmp.eq.s32.totalorder %v247, %v292
    %vm581 = vcmp.eq.s32.totalorder %v247, %v293
    %vm582 = vcmp.eq.s32.totalorder %v247, %v294
    %vm583 = vcmp.eq.s32.totalorder %v247, %v295
    %vm584 = vcmp.eq.s32.totalorder %v247, %v296
    %vm585 = vcmp.eq.s32.totalorder %v247, %v297
    %vm586 = vcmp.eq.s32.totalorder %v247, %v298
    %vm587 = vcmp.eq.s32.totalorder %v247, %v299
    %vm588 = vcmp.eq.s32.totalorder %v247, %v300
    %vm589 = vcmp.eq.s32.totalorder %v247, %v301
    %vm590 = vcmp.eq.s32.totalorder %v247, %v302
    %vm591 = vcmp.eq.s32.totalorder %v247, %v303
    %vm592 = vcmp.eq.s32.totalorder %v247, %v304
    %vm593 = vcmp.eq.s32.totalorder %v247, %v305
    %vm594 = vcmp.eq.s32.totalorder %v247, %v306
    %vm595 = vcmp.eq.s32.totalorder %v247, %v307
    %vm596 = vcmp.eq.s32.totalorder %v247, %v308
    %vm597 = vcmp.eq.s32.totalorder %v247, %v309
    %vm598 = vcmp.eq.s32.totalorder %v247, %v310
    %vm599 = vcmp.eq.s32.totalorder %v247, %v311
    %vm600 = vcmp.eq.s32.totalorder %v247, %v312
    %vm601 = vcmp.eq.s32.totalorder %v247, %v313
    %vm602 = vcmp.eq.s32.totalorder %v247, %v314
    %vm603 = vcmp.eq.s32.totalorder %v247, %v315
    %vm604 = vcmp.eq.s32.totalorder %v247, %v316
    %vm605 = vcmp.eq.s32.totalorder %v247, %v317
    %vm606 = vcmp.eq.s32.totalorder %v247, %v318
    %vm607 = vcmp.eq.s32.totalorder %v248, %v287
    %vm608 = vcmp.eq.s32.totalorder %v248, %v288
    %vm609 = vcmp.eq.s32.totalorder %v248, %v289
    %vm610 = vcmp.eq.s32.totalorder %v248, %v290
    %vm611 = vcmp.eq.s32.totalorder %v248, %v291
    %vm612 = vcmp.eq.s32.totalorder %v248, %v292
    %vm613 = vcmp.eq.s32.totalorder %v248, %v293
    %vm614 = vcmp.eq.s32.totalorder %v248, %v294
    %vm615 = vcmp.eq.s32.totalorder %v248, %v295
    %vm616 = vcmp.eq.s32.totalorder %v248, %v296
    %vm617 = vcmp.eq.s32.totalorder %v248, %v297
    %vm618 = vcmp.eq.s32.totalorder %v248, %v298
    %vm619 = vcmp.eq.s32.totalorder %v248, %v299
    %vm620 = vcmp.eq.s32.totalorder %v248, %v300
    %vm621 = vcmp.eq.s32.totalorder %v248, %v301
    %vm622 = vcmp.eq.s32.totalorder %v248, %v302
    %vm623 = vcmp.eq.s32.totalorder %v248, %v303
    %vm624 = vcmp.eq.s32.totalorder %v248, %v304
    %vm625 = vcmp.eq.s32.totalorder %v248, %v305
    %vm626 = vcmp.eq.s32.totalorder %v248, %v306
    %vm627 = vcmp.eq.s32.totalorder %v248, %v307
    %vm628 = vcmp.eq.s32.totalorder %v248, %v308
    %vm629 = vcmp.eq.s32.totalorder %v248, %v309
    %vm630 = vcmp.eq.s32.totalorder %v248, %v310
    %vm631 = vcmp.eq.s32.totalorder %v248, %v311
    %vm632 = vcmp.eq.s32.totalorder %v248, %v312
    %vm633 = vcmp.eq.s32.totalorder %v248, %v313
    %vm634 = vcmp.eq.s32.totalorder %v248, %v314
    %vm635 = vcmp.eq.s32.totalorder %v248, %v315
    %vm636 = vcmp.eq.s32.totalorder %v248, %v316
    %vm637 = vcmp.eq.s32.totalorder %v248, %v317
    %vm638 = vcmp.eq.s32.totalorder %v248, %v318
    %vm639 = vcmp.eq.s32.totalorder %v249, %v287
    %vm640 = vcmp.eq.s32.totalorder %v249, %v288
    %vm641 = vcmp.eq.s32.totalorder %v249, %v289
    %vm642 = vcmp.eq.s32.totalorder %v249, %v290
    %vm643 = vcmp.eq.s32.totalorder %v249, %v291
    %vm644 = vcmp.eq.s32.totalorder %v249, %v292
    %vm645 = vcmp.eq.s32.totalorder %v249, %v293
    %vm646 = vcmp.eq.s32.totalorder %v249, %v294
    %vm647 = vcmp.eq.s32.totalorder %v249, %v295
    %vm648 = vcmp.eq.s32.totalorder %v249, %v296
    %vm649 = vcmp.eq.s32.totalorder %v249, %v297
    %vm650 = vcmp.eq.s32.totalorder %v249, %v298
    %vm651 = vcmp.eq.s32.totalorder %v249, %v299
    %vm652 = vcmp.eq.s32.totalorder %v249, %v300
    %vm653 = vcmp.eq.s32.totalorder %v249, %v301
    %vm654 = vcmp.eq.s32.totalorder %v249, %v302
    %vm655 = vcmp.eq.s32.totalorder %v249, %v303
    %vm656 = vcmp.eq.s32.totalorder %v249, %v304
    %vm657 = vcmp.eq.s32.totalorder %v249, %v305
    %vm658 = vcmp.eq.s32.totalorder %v249, %v306
    %vm659 = vcmp.eq.s32.totalorder %v249, %v307
    %vm660 = vcmp.eq.s32.totalorder %v249, %v308
    %vm661 = vcmp.eq.s32.totalorder %v249, %v309
    %vm662 = vcmp.eq.s32.totalorder %v249, %v310
    %vm663 = vcmp.eq.s32.totalorder %v249, %v311
    %vm664 = vcmp.eq.s32.totalorder %v249, %v312
    %vm665 = vcmp.eq.s32.totalorder %v249, %v313
    %vm666 = vcmp.eq.s32.totalorder %v249, %v314
    %vm667 = vcmp.eq.s32.totalorder %v249, %v315
    %vm668 = vcmp.eq.s32.totalorder %v249, %v316
    %vm669 = vcmp.eq.s32.totalorder %v249, %v317
    %vm670 = vcmp.eq.s32.totalorder %v249, %v318
    %vm671 = vcmp.eq.s32.totalorder %v250, %v287
    %vm672 = vcmp.eq.s32.totalorder %v250, %v288
    %vm673 = vcmp.eq.s32.totalorder %v250, %v289
    %vm674 = vcmp.eq.s32.totalorder %v250, %v290
    %vm675 = vcmp.eq.s32.totalorder %v250, %v291
    %vm676 = vcmp.eq.s32.totalorder %v250, %v292
    %vm677 = vcmp.eq.s32.totalorder %v250, %v293
    %vm678 = vcmp.eq.s32.totalorder %v250, %v294
    %vm679 = vcmp.eq.s32.totalorder %v250, %v295
    %vm680 = vcmp.eq.s32.totalorder %v250, %v296
    %vm681 = vcmp.eq.s32.totalorder %v250, %v297
    %vm682 = vcmp.eq.s32.totalorder %v250, %v298
    %vm683 = vcmp.eq.s32.totalorder %v250, %v299
    %vm684 = vcmp.eq.s32.totalorder %v250, %v300
    %vm685 = vcmp.eq.s32.totalorder %v250, %v301
    %vm686 = vcmp.eq.s32.totalorder %v250, %v302
    %vm687 = vcmp.eq.s32.totalorder %v250, %v303
    %vm688 = vcmp.eq.s32.totalorder %v250, %v304
    %vm689 = vcmp.eq.s32.totalorder %v250, %v305
    %vm690 = vcmp.eq.s32.totalorder %v250, %v306
    %vm691 = vcmp.eq.s32.totalorder %v250, %v307
    %vm692 = vcmp.eq.s32.totalorder %v250, %v308
    %vm693 = vcmp.eq.s32.totalorder %v250, %v309
    %vm694 = vcmp.eq.s32.totalorder %v250, %v310
    %vm695 = vcmp.eq.s32.totalorder %v250, %v311
    %vm696 = vcmp.eq.s32.totalorder %v250, %v312
    %vm697 = vcmp.eq.s32.totalorder %v250, %v313
    %vm698 = vcmp.eq.s32.totalorder %v250, %v314
    %vm699 = vcmp.eq.s32.totalorder %v250, %v315
    %vm700 = vcmp.eq.s32.totalorder %v250, %v316
    %vm701 = vcmp.eq.s32.totalorder %v250, %v317
    %vm702 = vcmp.eq.s32.totalorder %v250, %v318
    %vm703 = vcmp.eq.s32.totalorder %v251, %v287
    %vm704 = vcmp.eq.s32.totalorder %v251, %v288
    %vm705 = vcmp.eq.s32.totalorder %v251, %v289
    %vm706 = vcmp.eq.s32.totalorder %v251, %v290
    %vm707 = vcmp.eq.s32.totalorder %v251, %v291
    %vm708 = vcmp.eq.s32.totalorder %v251, %v292
    %vm709 = vcmp.eq.s32.totalorder %v251, %v293
    %vm710 = vcmp.eq.s32.totalorder %v251, %v294
    %vm711 = vcmp.eq.s32.totalorder %v251, %v295
    %vm712 = vcmp.eq.s32.totalorder %v251, %v296
    %vm713 = vcmp.eq.s32.totalorder %v251, %v297
    %vm714 = vcmp.eq.s32.totalorder %v251, %v298
    %vm715 = vcmp.eq.s32.totalorder %v251, %v299
    %vm716 = vcmp.eq.s32.totalorder %v251, %v300
    %vm717 = vcmp.eq.s32.totalorder %v251, %v301
    %vm718 = vcmp.eq.s32.totalorder %v251, %v302
    %vm719 = vcmp.eq.s32.totalorder %v251, %v303
    %vm720 = vcmp.eq.s32.totalorder %v251, %v304
    %vm721 = vcmp.eq.s32.totalorder %v251, %v305
    %vm722 = vcmp.eq.s32.totalorder %v251, %v306
    %vm723 = vcmp.eq.s32.totalorder %v251, %v307
    %vm724 = vcmp.eq.s32.totalorder %v251, %v308
    %vm725 = vcmp.eq.s32.totalorder %v251, %v309
    %vm726 = vcmp.eq.s32.totalorder %v251, %v310
    %vm727 = vcmp.eq.s32.totalorder %v251, %v311
    %vm728 = vcmp.eq.s32.totalorder %v251, %v312
    %vm729 = vcmp.eq.s32.totalorder %v251, %v313
    %vm730 = vcmp.eq.s32.totalorder %v251, %v314
    %vm731 = vcmp.eq.s32.totalorder %v251, %v315
    %vm732 = vcmp.eq.s32.totalorder %v251, %v316
    %vm733 = vcmp.eq.s32.totalorder %v251, %v317
    %vm734 = vcmp.eq.s32.totalorder %v251, %v318
    %vm735 = vcmp.eq.s32.totalorder %v252, %v287
    %vm736 = vcmp.eq.s32.totalorder %v252, %v288
    %vm737 = vcmp.eq.s32.totalorder %v252, %v289
    %vm738 = vcmp.eq.s32.totalorder %v252, %v290
    %vm739 = vcmp.eq.s32.totalorder %v252, %v291
    %vm740 = vcmp.eq.s32.totalorder %v252, %v292
    %vm741 = vcmp.eq.s32.totalorder %v252, %v293
    %vm742 = vcmp.eq.s32.totalorder %v252, %v294
    %vm743 = vcmp.eq.s32.totalorder %v252, %v295
    %vm744 = vcmp.eq.s32.totalorder %v252, %v296
    %vm745 = vcmp.eq.s32.totalorder %v252, %v297
    %vm746 = vcmp.eq.s32.totalorder %v252, %v298
    %vm747 = vcmp.eq.s32.totalorder %v252, %v299
    %vm748 = vcmp.eq.s32.totalorder %v252, %v300
    %vm749 = vcmp.eq.s32.totalorder %v252, %v301
    %vm750 = vcmp.eq.s32.totalorder %v252, %v302
    %vm751 = vcmp.eq.s32.totalorder %v252, %v303
    %vm752 = vcmp.eq.s32.totalorder %v252, %v304
    %vm753 = vcmp.eq.s32.totalorder %v252, %v305
    %vm754 = vcmp.eq.s32.totalorder %v252, %v306
    %vm755 = vcmp.eq.s32.totalorder %v252, %v307
    %vm756 = vcmp.eq.s32.totalorder %v252, %v308
    %vm757 = vcmp.eq.s32.totalorder %v252, %v309
    %vm758 = vcmp.eq.s32.totalorder %v252, %v310
    %vm759 = vcmp.eq.s32.totalorder %v252, %v311
    %vm760 = vcmp.eq.s32.totalorder %v252, %v312
    %vm761 = vcmp.eq.s32.totalorder %v252, %v313
    %vm762 = vcmp.eq.s32.totalorder %v252, %v314
    %vm763 = vcmp.eq.s32.totalorder %v252, %v315
    %vm764 = vcmp.eq.s32.totalorder %v252, %v316
    %vm765 = vcmp.eq.s32.totalorder %v252, %v317
    %vm766 = vcmp.eq.s32.totalorder %v252, %v318
    %vm767 = vcmp.eq.s32.totalorder %v253, %v287
    %vm768 = vcmp.eq.s32.totalorder %v253, %v288
    %vm769 = vcmp.eq.s32.totalorder %v253, %v289
    %vm770 = vcmp.eq.s32.totalorder %v253, %v290
    %vm771 = vcmp.eq.s32.totalorder %v253, %v291
    %vm772 = vcmp.eq.s32.totalorder %v253, %v292
    %vm773 = vcmp.eq.s32.totalorder %v253, %v293
    %vm774 = vcmp.eq.s32.totalorder %v253, %v294
    %vm775 = vcmp.eq.s32.totalorder %v253, %v295
    %vm776 = vcmp.eq.s32.totalorder %v253, %v296
    %vm777 = vcmp.eq.s32.totalorder %v253, %v297
    %vm778 = vcmp.eq.s32.totalorder %v253, %v298
    %vm779 = vcmp.eq.s32.totalorder %v253, %v299
    %vm780 = vcmp.eq.s32.totalorder %v253, %v300
    %vm781 = vcmp.eq.s32.totalorder %v253, %v301
    %vm782 = vcmp.eq.s32.totalorder %v253, %v302
    %vm783 = vcmp.eq.s32.totalorder %v253, %v303
    %vm784 = vcmp.eq.s32.totalorder %v253, %v304
    %vm785 = vcmp.eq.s32.totalorder %v253, %v305
    %vm786 = vcmp.eq.s32.totalorder %v253, %v306
    %vm787 = vcmp.eq.s32.totalorder %v253, %v307
    %vm788 = vcmp.eq.s32.totalorder %v253, %v308
    %vm789 = vcmp.eq.s32.totalorder %v253, %v309
    %vm790 = vcmp.eq.s32.totalorder %v253, %v310
    %vm791 = vcmp.eq.s32.totalorder %v253, %v311
    %vm792 = vcmp.eq.s32.totalorder %v253, %v312
    %vm793 = vcmp.eq.s32.totalorder %v253, %v313
    %vm794 = vcmp.eq.s32.totalorder %v253, %v314
    %vm795 = vcmp.eq.s32.totalorder %v253, %v315
    %vm796 = vcmp.eq.s32.totalorder %v253, %v316
    %vm797 = vcmp.eq.s32.totalorder %v253, %v317
    %vm798 = vcmp.eq.s32.totalorder %v253, %v318
    %vm799 = vcmp.eq.s32.totalorder %v254, %v287
    %vm800 = vcmp.eq.s32.totalorder %v254, %v288
    %vm801 = vcmp.eq.s32.totalorder %v254, %v289
    %vm802 = vcmp.eq.s32.totalorder %v254, %v290
    %vm803 = vcmp.eq.s32.totalorder %v254, %v291
    %vm804 = vcmp.eq.s32.totalorder %v254, %v292
    %vm805 = vcmp.eq.s32.totalorder %v254, %v293
    %vm806 = vcmp.eq.s32.totalorder %v254, %v294
    %vm807 = vcmp.eq.s32.totalorder %v254, %v295
    %vm808 = vcmp.eq.s32.totalorder %v254, %v296
    %vm809 = vcmp.eq.s32.totalorder %v254, %v297
    %vm810 = vcmp.eq.s32.totalorder %v254, %v298
    %vm811 = vcmp.eq.s32.totalorder %v254, %v299
    %vm812 = vcmp.eq.s32.totalorder %v254, %v300
    %vm813 = vcmp.eq.s32.totalorder %v254, %v301
    %vm814 = vcmp.eq.s32.totalorder %v254, %v302
    %vm815 = vcmp.eq.s32.totalorder %v254, %v303
    %vm816 = vcmp.eq.s32.totalorder %v254, %v304
    %vm817 = vcmp.eq.s32.totalorder %v254, %v305
    %vm818 = vcmp.eq.s32.totalorder %v254, %v306
    %vm819 = vcmp.eq.s32.totalorder %v254, %v307
    %vm820 = vcmp.eq.s32.totalorder %v254, %v308
    %vm821 = vcmp.eq.s32.totalorder %v254, %v309
    %vm822 = vcmp.eq.s32.totalorder %v254, %v310
    %vm823 = vcmp.eq.s32.totalorder %v254, %v311
    %vm824 = vcmp.eq.s32.totalorder %v254, %v312
    %vm825 = vcmp.eq.s32.totalorder %v254, %v313
    %vm826 = vcmp.eq.s32.totalorder %v254, %v314
    %vm827 = vcmp.eq.s32.totalorder %v254, %v315
    %vm828 = vcmp.eq.s32.totalorder %v254, %v316
    %vm829 = vcmp.eq.s32.totalorder %v254, %v317
    %vm830 = vcmp.eq.s32.totalorder %v254, %v318
    %v831 = vperm.slane %v222, 0
    %v832 = vperm.slane %v222, 4
    %v833 = vperm.slane %v223, 0
    %v834 = vperm.slane %v223, 4
    %v835 = vperm.slane %v224, 0
    %v836 = vperm.slane %v224, 4
    %v837 = vperm.slane %v225, 0
    %v838 = vperm.slane %v225, 4
    %v839 = vperm.slane %v226, 0
    %v840 = vperm.slane %v226, 4
    %v841 = vperm.slane %v227, 0
    %v842 = vperm.slane %v227, 4
    %v843 = vperm.slane %v228, 0
    %v844 = vperm.slane %v228, 4
    %v845 = vperm.slane %v229, 0
    %v846 = vperm.slane %v229, 4
    %v847 = vperm.slane %v230, 0
    %v848 = vperm.slane %v230, 4
    %v849 = vperm.slane %v231, 0
    %v850 = vperm.slane %v231, 4
    %v851 = vperm.slane %v232, 0
    %v852 = vperm.slane %v232, 4
    %v853 = vperm.slane %v233, 0
    %v854 = vperm.slane %v233, 4
    %v855 = vperm.slane %v234, 0
    %v856 = vperm.slane %v234, 4
    %v857 = vperm.slane %v235, 0
    %v858 = vperm.slane %v235, 4
    %v859 = vperm.slane %v236, 0
    %v860 = vperm.slane %v236, 4
    %v861 = vperm.slane %v237, 0
    %v862 = vperm.slane %v237, 4
    %v863 = vperm.slane %v831, 0
    %v864 = vperm.slane %v832, 0
    %v865 = vperm.slane %v833, 0
    %v866 = vperm.slane %v834, 0
    %v867 = vperm.slane %v835, 0
    %v868 = vperm.slane %v836, 0
    %v869 = vperm.slane %v837, 0
    %v870 = vperm.slane %v838, 0
    %v871 = vperm.slane %v839, 0
    %v872 = vperm.slane %v840, 0
    %v873 = vperm.slane %v841, 0
    %v874 = vperm.slane %v842, 0
    %v875 = vperm.slane %v843, 0
    %v876 = vperm.slane %v844, 0
    %v877 = vperm.slane %v845, 0
    %v878 = vperm.slane %v846, 0
    %v879 = vperm.slane %v847, 0
    %v880 = vperm.slane %v848, 0
    %v881 = vperm.slane %v849, 0
    %v882 = vperm.slane %v850, 0
    %v883 = vperm.slane %v851, 0
    %v884 = vperm.slane %v852, 0
    %v885 = vperm.slane %v853, 0
    %v886 = vperm.slane %v854, 0
    %v887 = vperm.slane %v855, 0
    %v888 = vperm.slane %v856, 0
    %v889 = vperm.slane %v857, 0
    %v890 = vperm.slane %v858, 0
    %v891 = vperm.slane %v859, 0
    %v892 = vperm.slane %v860, 0
    %v893 = vperm.slane %v861, 0
    %v894 = vperm.slane %v862, 0
    %vm895 = vcmp.eq.s32.totalorder %v239, %v863
    %vm896 = vcmp.eq.s32.totalorder %v239, %v864
    %vm897 = vcmp.eq.s32.totalorder %v239, %v865
    %vm898 = vcmp.eq.s32.totalorder %v239, %v866
    %vm899 = vcmp.eq.s32.totalorder %v239, %v867
    %vm900 = vcmp.eq.s32.totalorder %v239, %v868
    %vm901 = vcmp.eq.s32.totalorder %v239, %v869
    %vm902 = vcmp.eq.s32.totalorder %v239, %v870
    %vm903 = vcmp.eq.s32.totalorder %v239, %v871
    %vm904 = vcmp.eq.s32.totalorder %v239, %v872
    %vm905 = vcmp.eq.s32.totalorder %v239, %v873
    %vm906 = vcmp.eq.s32.totalorder %v239, %v874
    %vm907 = vcmp.eq.s32.totalorder %v239, %v875
    %vm908 = vcmp.eq.s32.totalorder %v239, %v876
    %vm909 = vcmp.eq.s32.totalorder %v239, %v877
    %vm910 = vcmp.eq.s32.totalorder %v239, %v878
    %vm911 = vcmp.eq.s32.totalorder %v239, %v879
    %vm912 = vcmp.eq.s32.totalorder %v239, %v880
    %vm913 = vcmp.eq.s32.totalorder %v239, %v881
    %vm914 = vcmp.eq.s32.totalorder %v239, %v882
    %vm915 = vcmp.eq.s32.totalorder %v239, %v883
    %vm916 = vcmp.eq.s32.totalorder %v239, %v884
    %vm917 = vcmp.eq.s32.totalorder %v239, %v885
    %vm918 = vcmp.eq.s32.totalorder %v239, %v886
    %vm919 = vcmp.eq.s32.totalorder %v239, %v887
    %vm920 = vcmp.eq.s32.totalorder %v239, %v888
    %vm921 = vcmp.eq.s32.totalorder %v239, %v889
    %vm922 = vcmp.eq.s32.totalorder %v239, %v890
    %vm923 = vcmp.eq.s32.totalorder %v239, %v891
    %vm924 = vcmp.eq.s32.totalorder %v239, %v892
    %vm925 = vcmp.eq.s32.totalorder %v239, %v893
    %vm926 = vcmp.eq.s32.totalorder %v239, %v894
    %vm927 = vcmp.eq.s32.totalorder %v240, %v863
    %vm928 = vcmp.eq.s32.totalorder %v240, %v864
    %vm929 = vcmp.eq.s32.totalorder %v240, %v865
    %vm930 = vcmp.eq.s32.totalorder %v240, %v866
    %vm931 = vcmp.eq.s32.totalorder %v240, %v867
    %vm932 = vcmp.eq.s32.totalorder %v240, %v868
    %vm933 = vcmp.eq.s32.totalorder %v240, %v869
    %vm934 = vcmp.eq.s32.totalorder %v240, %v870
    %vm935 = vcmp.eq.s32.totalorder %v240, %v871
    %vm936 = vcmp.eq.s32.totalorder %v240, %v872
    %vm937 = vcmp.eq.s32.totalorder %v240, %v873
    %vm938 = vcmp.eq.s32.totalorder %v240, %v874
    %vm939 = vcmp.eq.s32.totalorder %v240, %v875
    %vm940 = vcmp.eq.s32.totalorder %v240, %v876
    %vm941 = vcmp.eq.s32.totalorder %v240, %v877
    %vm942 = vcmp.eq.s32.totalorder %v240, %v878
    %vm943 = vcmp.eq.s32.totalorder %v240, %v879
    %vm944 = vcmp.eq.s32.totalorder %v240, %v880
    %vm945 = vcmp.eq.s32.totalorder %v240, %v881
    %vm946 = vcmp.eq.s32.totalorder %v240, %v882
    %vm947 = vcmp.eq.s32.totalorder %v240, %v883
    %vm948 = vcmp.eq.s32.totalorder %v240, %v884
    %vm949 = vcmp.eq.s32.totalorder %v240, %v885
    %vm950 = vcmp.eq.s32.totalorder %v240, %v886
    %vm951 = vcmp.eq.s32.totalorder %v240, %v887
    %vm952 = vcmp.eq.s32.totalorder %v240, %v888
    %vm953 = vcmp.eq.s32.totalorder %v240, %v889
    %vm954 = vcmp.eq.s32.totalorder %v240, %v890
    %vm955 = vcmp.eq.s32.totalorder %v240, %v891
    %vm956 = vcmp.eq.s32.totalorder %v240, %v892
    %vm957 = vcmp.eq.s32.totalorder %v240, %v893
    %vm958 = vcmp.eq.s32.totalorder %v240, %v894
    %vm959 = vcmp.eq.s32.totalorder %v241, %v863
    %vm960 = vcmp.eq.s32.totalorder %v241, %v864
    %vm961 = vcmp.eq.s32.totalorder %v241, %v865
    %vm962 = vcmp.eq.s32.totalorder %v241, %v866
    %vm963 = vcmp.eq.s32.totalorder %v241, %v867
    %vm964 = vcmp.eq.s32.totalorder %v241, %v868
    %vm965 = vcmp.eq.s32.totalorder %v241, %v869
    %vm966 = vcmp.eq.s32.totalorder %v241, %v870
    %vm967 = vcmp.eq.s32.totalorder %v241, %v871
    %vm968 = vcmp.eq.s32.totalorder %v241, %v872
    %vm969 = vcmp.eq.s32.totalorder %v241, %v873
    %vm970 = vcmp.eq.s32.totalorder %v241, %v874
    %vm971 = vcmp.eq.s32.totalorder %v241, %v875
    %vm972 = vcmp.eq.s32.totalorder %v241, %v876
    %vm973 = vcmp.eq.s32.totalorder %v241, %v877
    %vm974 = vcmp.eq.s32.totalorder %v241, %v878
    %vm975 = vcmp.eq.s32.totalorder %v241, %v879
    %vm976 = vcmp.eq.s32.totalorder %v241, %v880
    %vm977 = vcmp.eq.s32.totalorder %v241, %v881
    %vm978 = vcmp.eq.s32.totalorder %v241, %v882
    %vm979 = vcmp.eq.s32.totalorder %v241, %v883
    %vm980 = vcmp.eq.s32.totalorder %v241, %v884
    %vm981 = vcmp.eq.s32.totalorder %v241, %v885
    %vm982 = vcmp.eq.s32.totalorder %v241, %v886
    %vm983 = vcmp.eq.s32.totalorder %v241, %v887
    %vm984 = vcmp.eq.s32.totalorder %v241, %v888
    %vm985 = vcmp.eq.s32.totalorder %v241, %v889
    %vm986 = vcmp.eq.s32.totalorder %v241, %v890
    %vm987 = vcmp.eq.s32.totalorder %v241, %v891
    %vm988 = vcmp.eq.s32.totalorder %v241, %v892
    %vm989 = vcmp.eq.s32.totalorder %v241, %v893
    %vm990 = vcmp.eq.s32.totalorder %v241, %v894
    %vm991 = vcmp.eq.s32.totalorder %v242, %v863
    %vm992 = vcmp.eq.s32.totalorder %v242, %v864
    %vm993 = vcmp.eq.s32.totalorder %v242, %v865
    %vm994 = vcmp.eq.s32.totalorder %v242, %v866
    %vm995 = vcmp.eq.s32.totalorder %v242, %v867
    %vm996 = vcmp.eq.s32.totalorder %v242, %v868
    %vm997 = vcmp.eq.s32.totalorder %v242, %v869
    %vm998 = vcmp.eq.s32.totalorder %v242, %v870
    %vm999 = vcmp.eq.s32.totalorder %v242, %v871
    %vm1000 = vcmp.eq.s32.totalorder %v242, %v872
    %vm1001 = vcmp.eq.s32.totalorder %v242, %v873
    %vm1002 = vcmp.eq.s32.totalorder %v242, %v874
    %vm1003 = vcmp.eq.s32.totalorder %v242, %v875
    %vm1004 = vcmp.eq.s32.totalorder %v242, %v876
    %vm1005 = vcmp.eq.s32.totalorder %v242, %v877
    %vm1006 = vcmp.eq.s32.totalorder %v242, %v878
    %vm1007 = vcmp.eq.s32.totalorder %v242, %v879
    %vm1008 = vcmp.eq.s32.totalorder %v242, %v880
    %vm1009 = vcmp.eq.s32.totalorder %v242, %v881
    %vm1010 = vcmp.eq.s32.totalorder %v242, %v882
    %vm1011 = vcmp.eq.s32.totalorder %v242, %v883
    %vm1012 = vcmp.eq.s32.totalorder %v242, %v884
    %vm1013 = vcmp.eq.s32.totalorder %v242, %v885
    %vm1014 = vcmp.eq.s32.totalorder %v242, %v886
    %vm1015 = vcmp.eq.s32.totalorder %v242, %v887
    %vm1016 = vcmp.eq.s32.totalorder %v242, %v888
    %vm1017 = vcmp.eq.s32.totalorder %v242, %v889
    %vm1018 = vcmp.eq.s32.totalorder %v242, %v890
    %vm1019 = vcmp.eq.s32.totalorder %v242, %v891
    %vm1020 = vcmp.eq.s32.totalorder %v242, %v892
    %vm1021 = vcmp.eq.s32.totalorder %v242, %v893
    %vm1022 = vcmp.eq.s32.totalorder %v242, %v894
    %vm1023 = vcmp.eq.s32.totalorder %v243, %v863
    %vm1024 = vcmp.eq.s32.totalorder %v243, %v864
    %vm1025 = vcmp.eq.s32.totalorder %v243, %v865
    %vm1026 = vcmp.eq.s32.totalorder %v243, %v866
    %vm1027 = vcmp.eq.s32.totalorder %v243, %v867
    %vm1028 = vcmp.eq.s32.totalorder %v243, %v868
    %vm1029 = vcmp.eq.s32.totalorder %v243, %v869
    %vm1030 = vcmp.eq.s32.totalorder %v243, %v870
    %vm1031 = vcmp.eq.s32.totalorder %v243, %v871
    %vm1032 = vcmp.eq.s32.totalorder %v243, %v872
    %vm1033 = vcmp.eq.s32.totalorder %v243, %v873
    %vm1034 = vcmp.eq.s32.totalorder %v243, %v874
    %vm1035 = vcmp.eq.s32.totalorder %v243, %v875
    %vm1036 = vcmp.eq.s32.totalorder %v243, %v876
    %vm1037 = vcmp.eq.s32.totalorder %v243, %v877
    %vm1038 = vcmp.eq.s32.totalorder %v243, %v878
    %vm1039 = vcmp.eq.s32.totalorder %v243, %v879
    %vm1040 = vcmp.eq.s32.totalorder %v243, %v880
    %vm1041 = vcmp.eq.s32.totalorder %v243, %v881
    %vm1042 = vcmp.eq.s32.totalorder %v243, %v882
    %vm1043 = vcmp.eq.s32.totalorder %v243, %v883
    %vm1044 = vcmp.eq.s32.totalorder %v243, %v884
    %vm1045 = vcmp.eq.s32.totalorder %v243, %v885
    %vm1046 = vcmp.eq.s32.totalorder %v243, %v886
    %vm1047 = vcmp.eq.s32.totalorder %v243, %v887
    %vm1048 = vcmp.eq.s32.totalorder %v243, %v888
    %vm1049 = vcmp.eq.s32.totalorder %v243, %v889
    %vm1050 = vcmp.eq.s32.totalorder %v243, %v890
    %vm1051 = vcmp.eq.s32.totalorder %v243, %v891
    %vm1052 = vcmp.eq.s32.totalorder %v243, %v892
    %vm1053 = vcmp.eq.s32.totalorder %v243, %v893
    %vm1054 = vcmp.eq.s32.totalorder %v243, %v894
    %vm1055 = vcmp.eq.s32.totalorder %v244, %v863
    %vm1056 = vcmp.eq.s32.totalorder %v244, %v864
    %vm1057 = vcmp.eq.s32.totalorder %v244, %v865
    %vm1058 = vcmp.eq.s32.totalorder %v244, %v866
    %vm1059 = vcmp.eq.s32.totalorder %v244, %v867
    %vm1060 = vcmp.eq.s32.totalorder %v244, %v868
    %vm1061 = vcmp.eq.s32.totalorder %v244, %v869
    %vm1062 = vcmp.eq.s32.totalorder %v244, %v870
    %vm1063 = vcmp.eq.s32.totalorder %v244, %v871
    %vm1064 = vcmp.eq.s32.totalorder %v244, %v872
    %vm1065 = vcmp.eq.s32.totalorder %v244, %v873
    %vm1066 = vcmp.eq.s32.totalorder %v244, %v874
    %vm1067 = vcmp.eq.s32.totalorder %v244, %v875
    %vm1068 = vcmp.eq.s32.totalorder %v244, %v876
    %vm1069 = vcmp.eq.s32.totalorder %v244, %v877
    %vm1070 = vcmp.eq.s32.totalorder %v244, %v878
    %vm1071 = vcmp.eq.s32.totalorder %v244, %v879
    %vm1072 = vcmp.eq.s32.totalorder %v244, %v880
    %vm1073 = vcmp.eq.s32.totalorder %v244, %v881
    %vm1074 = vcmp.eq.s32.totalorder %v244, %v882
    %vm1075 = vcmp.eq.s32.totalorder %v244, %v883
    %vm1076 = vcmp.eq.s32.totalorder %v244, %v884
    %vm1077 = vcmp.eq.s32.totalorder %v244, %v885
    %vm1078 = vcmp.eq.s32.totalorder %v244, %v886
    %vm1079 = vcmp.eq.s32.totalorder %v244, %v887
    %vm1080 = vcmp.eq.s32.totalorder %v244, %v888
    %vm1081 = vcmp.eq.s32.totalorder %v244, %v889
    %vm1082 = vcmp.eq.s32.totalorder %v244, %v890
    %vm1083 = vcmp.eq.s32.totalorder %v244, %v891
    %vm1084 = vcmp.eq.s32.totalorder %v244, %v892
    %vm1085 = vcmp.eq.s32.totalorder %v244, %v893
    %vm1086 = vcmp.eq.s32.totalorder %v244, %v894
    %vm1087 = vcmp.eq.s32.totalorder %v245, %v863
    %vm1088 = vcmp.eq.s32.totalorder %v245, %v864
    %vm1089 = vcmp.eq.s32.totalorder %v245, %v865
    %vm1090 = vcmp.eq.s32.totalorder %v245, %v866
    %vm1091 = vcmp.eq.s32.totalorder %v245, %v867
    %vm1092 = vcmp.eq.s32.totalorder %v245, %v868
    %vm1093 = vcmp.eq.s32.totalorder %v245, %v869
    %vm1094 = vcmp.eq.s32.totalorder %v245, %v870
    %vm1095 = vcmp.eq.s32.totalorder %v245, %v871
    %vm1096 = vcmp.eq.s32.totalorder %v245, %v872
    %vm1097 = vcmp.eq.s32.totalorder %v245, %v873
    %vm1098 = vcmp.eq.s32.totalorder %v245, %v874
    %vm1099 = vcmp.eq.s32.totalorder %v245, %v875
    %vm1100 = vcmp.eq.s32.totalorder %v245, %v876
    %vm1101 = vcmp.eq.s32.totalorder %v245, %v877
    %vm1102 = vcmp.eq.s32.totalorder %v245, %v878
    %vm1103 = vcmp.eq.s32.totalorder %v245, %v879
    %vm1104 = vcmp.eq.s32.totalorder %v245, %v880
    %vm1105 = vcmp.eq.s32.totalorder %v245, %v881
    %vm1106 = vcmp.eq.s32.totalorder %v245, %v882
    %vm1107 = vcmp.eq.s32.totalorder %v245, %v883
    %vm1108 = vcmp.eq.s32.totalorder %v245, %v884
    %vm1109 = vcmp.eq.s32.totalorder %v245, %v885
    %vm1110 = vcmp.eq.s32.totalorder %v245, %v886
    %vm1111 = vcmp.eq.s32.totalorder %v245, %v887
    %vm1112 = vcmp.eq.s32.totalorder %v245, %v888
    %vm1113 = vcmp.eq.s32.totalorder %v245, %v889
    %vm1114 = vcmp.eq.s32.totalorder %v245, %v890
    %vm1115 = vcmp.eq.s32.totalorder %v245, %v891
    %vm1116 = vcmp.eq.s32.totalorder %v245, %v892
    %vm1117 = vcmp.eq.s32.totalorder %v245, %v893
    %vm1118 = vcmp.eq.s32.totalorder %v245, %v894
    %vm1119 = vcmp.eq.s32.totalorder %v246, %v863
    %vm1120 = vcmp.eq.s32.totalorder %v246, %v864
    %vm1121 = vcmp.eq.s32.totalorder %v246, %v865
    %vm1122 = vcmp.eq.s32.totalorder %v246, %v866
    %vm1123 = vcmp.eq.s32.totalorder %v246, %v867
    %vm1124 = vcmp.eq.s32.totalorder %v246, %v868
    %vm1125 = vcmp.eq.s32.totalorder %v246, %v869
    %vm1126 = vcmp.eq.s32.totalorder %v246, %v870
    %vm1127 = vcmp.eq.s32.totalorder %v246, %v871
    %vm1128 = vcmp.eq.s32.totalorder %v246, %v872
    %vm1129 = vcmp.eq.s32.totalorder %v246, %v873
    %vm1130 = vcmp.eq.s32.totalorder %v246, %v874
    %vm1131 = vcmp.eq.s32.totalorder %v246, %v875
    %vm1132 = vcmp.eq.s32.totalorder %v246, %v876
    %vm1133 = vcmp.eq.s32.totalorder %v246, %v877
    %vm1134 = vcmp.eq.s32.totalorder %v246, %v878
    %vm1135 = vcmp.eq.s32.totalorder %v246, %v879
    %vm1136 = vcmp.eq.s32.totalorder %v246, %v880
    %vm1137 = vcmp.eq.s32.totalorder %v246, %v881
    %vm1138 = vcmp.eq.s32.totalorder %v246, %v882
    %vm1139 = vcmp.eq.s32.totalorder %v246, %v883
    %vm1140 = vcmp.eq.s32.totalorder %v246, %v884
    %vm1141 = vcmp.eq.s32.totalorder %v246, %v885
    %vm1142 = vcmp.eq.s32.totalorder %v246, %v886
    %vm1143 = vcmp.eq.s32.totalorder %v246, %v887
    %vm1144 = vcmp.eq.s32.totalorder %v246, %v888
    %vm1145 = vcmp.eq.s32.totalorder %v246, %v889
    %vm1146 = vcmp.eq.s32.totalorder %v246, %v890
    %vm1147 = vcmp.eq.s32.totalorder %v246, %v891
    %vm1148 = vcmp.eq.s32.totalorder %v246, %v892
    %vm1149 = vcmp.eq.s32.totalorder %v246, %v893
    %vm1150 = vcmp.eq.s32.totalorder %v246, %v894
    %vm1151 = vcmp.eq.s32.totalorder %v247, %v863
    %vm1152 = vcmp.eq.s32.totalorder %v247, %v864
    %vm1153 = vcmp.eq.s32.totalorder %v247, %v865
    %vm1154 = vcmp.eq.s32.totalorder %v247, %v866
    %vm1155 = vcmp.eq.s32.totalorder %v247, %v867
    %vm1156 = vcmp.eq.s32.totalorder %v247, %v868
    %vm1157 = vcmp.eq.s32.totalorder %v247, %v869
    %vm1158 = vcmp.eq.s32.totalorder %v247, %v870
    %vm1159 = vcmp.eq.s32.totalorder %v247, %v871
    %vm1160 = vcmp.eq.s32.totalorder %v247, %v872
    %vm1161 = vcmp.eq.s32.totalorder %v247, %v873
    %vm1162 = vcmp.eq.s32.totalorder %v247, %v874
    %vm1163 = vcmp.eq.s32.totalorder %v247, %v875
    %vm1164 = vcmp.eq.s32.totalorder %v247, %v876
    %vm1165 = vcmp.eq.s32.totalorder %v247, %v877
    %vm1166 = vcmp.eq.s32.totalorder %v247, %v878
    %vm1167 = vcmp.eq.s32.totalorder %v247, %v879
    %vm1168 = vcmp.eq.s32.totalorder %v247, %v880
    %vm1169 = vcmp.eq.s32.totalorder %v247, %v881
    %vm1170 = vcmp.eq.s32.totalorder %v247, %v882
    %vm1171 = vcmp.eq.s32.totalorder %v247, %v883
    %vm1172 = vcmp.eq.s32.totalorder %v247, %v884
    %vm1173 = vcmp.eq.s32.totalorder %v247, %v885
    %vm1174 = vcmp.eq.s32.totalorder %v247, %v886
    %vm1175 = vcmp.eq.s32.totalorder %v247, %v887
    %vm1176 = vcmp.eq.s32.totalorder %v247, %v888
    %vm1177 = vcmp.eq.s32.totalorder %v247, %v889
    %vm1178 = vcmp.eq.s32.totalorder %v247, %v890
    %vm1179 = vcmp.eq.s32.totalorder %v247, %v891
    %vm1180 = vcmp.eq.s32.totalorder %v247, %v892
    %vm1181 = vcmp.eq.s32.totalorder %v247, %v893
    %vm1182 = vcmp.eq.s32.totalorder %v247, %v894
    %vm1183 = vcmp.eq.s32.totalorder %v248, %v863
    %vm1184 = vcmp.eq.s32.totalorder %v248, %v864
    %vm1185 = vcmp.eq.s32.totalorder %v248, %v865
    %vm1186 = vcmp.eq.s32.totalorder %v248, %v866
    %vm1187 = vcmp.eq.s32.totalorder %v248, %v867
    %vm1188 = vcmp.eq.s32.totalorder %v248, %v868
    %vm1189 = vcmp.eq.s32.totalorder %v248, %v869
    %vm1190 = vcmp.eq.s32.totalorder %v248, %v870
    %vm1191 = vcmp.eq.s32.totalorder %v248, %v871
    %vm1192 = vcmp.eq.s32.totalorder %v248, %v872
    %vm1193 = vcmp.eq.s32.totalorder %v248, %v873
    %vm1194 = vcmp.eq.s32.totalorder %v248, %v874
    %vm1195 = vcmp.eq.s32.totalorder %v248, %v875
    %vm1196 = vcmp.eq.s32.totalorder %v248, %v876
    %vm1197 = vcmp.eq.s32.totalorder %v248, %v877
    %vm1198 = vcmp.eq.s32.totalorder %v248, %v878
    %vm1199 = vcmp.eq.s32.totalorder %v248, %v879
    %vm1200 = vcmp.eq.s32.totalorder %v248, %v880
    %vm1201 = vcmp.eq.s32.totalorder %v248, %v881
    %vm1202 = vcmp.eq.s32.totalorder %v248, %v882
    %vm1203 = vcmp.eq.s32.totalorder %v248, %v883
    %vm1204 = vcmp.eq.s32.totalorder %v248, %v884
    %vm1205 = vcmp.eq.s32.totalorder %v248, %v885
    %vm1206 = vcmp.eq.s32.totalorder %v248, %v886
    %vm1207 = vcmp.eq.s32.totalorder %v248, %v887
    %vm1208 = vcmp.eq.s32.totalorder %v248, %v888
    %vm1209 = vcmp.eq.s32.totalorder %v248, %v889
    %vm1210 = vcmp.eq.s32.totalorder %v248, %v890
    %vm1211 = vcmp.eq.s32.totalorder %v248, %v891
    %vm1212 = vcmp.eq.s32.totalorder %v248, %v892
    %vm1213 = vcmp.eq.s32.totalorder %v248, %v893
    %vm1214 = vcmp.eq.s32.totalorder %v248, %v894
    %vm1215 = vcmp.eq.s32.totalorder %v249, %v863
    %vm1216 = vcmp.eq.s32.totalorder %v249, %v864
    %vm1217 = vcmp.eq.s32.totalorder %v249, %v865
    %vm1218 = vcmp.eq.s32.totalorder %v249, %v866
    %vm1219 = vcmp.eq.s32.totalorder %v249, %v867
    %vm1220 = vcmp.eq.s32.totalorder %v249, %v868
    %vm1221 = vcmp.eq.s32.totalorder %v249, %v869
    %vm1222 = vcmp.eq.s32.totalorder %v249, %v870
    %vm1223 = vcmp.eq.s32.totalorder %v249, %v871
    %vm1224 = vcmp.eq.s32.totalorder %v249, %v872
    %vm1225 = vcmp.eq.s32.totalorder %v249, %v873
    %vm1226 = vcmp.eq.s32.totalorder %v249, %v874
    %vm1227 = vcmp.eq.s32.totalorder %v249, %v875
    %vm1228 = vcmp.eq.s32.totalorder %v249, %v876
    %vm1229 = vcmp.eq.s32.totalorder %v249, %v877
    %vm1230 = vcmp.eq.s32.totalorder %v249, %v878
    %vm1231 = vcmp.eq.s32.totalorder %v249, %v879
    %vm1232 = vcmp.eq.s32.totalorder %v249, %v880
    %vm1233 = vcmp.eq.s32.totalorder %v249, %v881
    %vm1234 = vcmp.eq.s32.totalorder %v249, %v882
    %vm1235 = vcmp.eq.s32.totalorder %v249, %v883
    %vm1236 = vcmp.eq.s32.totalorder %v249, %v884
    %vm1237 = vcmp.eq.s32.totalorder %v249, %v885
    %vm1238 = vcmp.eq.s32.totalorder %v249, %v886
    %vm1239 = vcmp.eq.s32.totalorder %v249, %v887
    %vm1240 = vcmp.eq.s32.totalorder %v249, %v888
    %vm1241 = vcmp.eq.s32.totalorder %v249, %v889
    %vm1242 = vcmp.eq.s32.totalorder %v249, %v890
    %vm1243 = vcmp.eq.s32.totalorder %v249, %v891
    %vm1244 = vcmp.eq.s32.totalorder %v249, %v892
    %vm1245 = vcmp.eq.s32.totalorder %v249, %v893
    %vm1246 = vcmp.eq.s32.totalorder %v249, %v894
    %vm1247 = vcmp.eq.s32.totalorder %v250, %v863
    %vm1248 = vcmp.eq.s32.totalorder %v250, %v864
    %vm1249 = vcmp.eq.s32.totalorder %v250, %v865
    %vm1250 = vcmp.eq.s32.totalorder %v250, %v866
    %vm1251 = vcmp.eq.s32.totalorder %v250, %v867
    %vm1252 = vcmp.eq.s32.totalorder %v250, %v868
    %vm1253 = vcmp.eq.s32.totalorder %v250, %v869
    %vm1254 = vcmp.eq.s32.totalorder %v250, %v870
    %vm1255 = vcmp.eq.s32.totalorder %v250, %v871
    %vm1256 = vcmp.eq.s32.totalorder %v250, %v872
    %vm1257 = vcmp.eq.s32.totalorder %v250, %v873
    %vm1258 = vcmp.eq.s32.totalorder %v250, %v874
    %vm1259 = vcmp.eq.s32.totalorder %v250, %v875
    %vm1260 = vcmp.eq.s32.totalorder %v250, %v876
    %vm1261 = vcmp.eq.s32.totalorder %v250, %v877
    %vm1262 = vcmp.eq.s32.totalorder %v250, %v878
    %vm1263 = vcmp.eq.s32.totalorder %v250, %v879
    %vm1264 = vcmp.eq.s32.totalorder %v250, %v880
    %vm1265 = vcmp.eq.s32.totalorder %v250, %v881
    %vm1266 = vcmp.eq.s32.totalorder %v250, %v882
    %vm1267 = vcmp.eq.s32.totalorder %v250, %v883
    %vm1268 = vcmp.eq.s32.totalorder %v250, %v884
    %vm1269 = vcmp.eq.s32.totalorder %v250, %v885
    %vm1270 = vcmp.eq.s32.totalorder %v250, %v886
    %vm1271 = vcmp.eq.s32.totalorder %v250, %v887
    %vm1272 = vcmp.eq.s32.totalorder %v250, %v888
    %vm1273 = vcmp.eq.s32.totalorder %v250, %v889
    %vm1274 = vcmp.eq.s32.totalorder %v250, %v890
    %vm1275 = vcmp.eq.s32.totalorder %v250, %v891
    %vm1276 = vcmp.eq.s32.totalorder %v250, %v892
    %vm1277 = vcmp.eq.s32.totalorder %v250, %v893
    %vm1278 = vcmp.eq.s32.totalorder %v250, %v894
    %vm1279 = vcmp.eq.s32.totalorder %v251, %v863
    %vm1280 = vcmp.eq.s32.totalorder %v251, %v864
    %vm1281 = vcmp.eq.s32.totalorder %v251, %v865
    %vm1282 = vcmp.eq.s32.totalorder %v251, %v866
    %vm1283 = vcmp.eq.s32.totalorder %v251, %v867
    %vm1284 = vcmp.eq.s32.totalorder %v251, %v868
    %vm1285 = vcmp.eq.s32.totalorder %v251, %v869
    %vm1286 = vcmp.eq.s32.totalorder %v251, %v870
    %vm1287 = vcmp.eq.s32.totalorder %v251, %v871
    %vm1288 = vcmp.eq.s32.totalorder %v251, %v872
    %vm1289 = vcmp.eq.s32.totalorder %v251, %v873
    %vm1290 = vcmp.eq.s32.totalorder %v251, %v874
    %vm1291 = vcmp.eq.s32.totalorder %v251, %v875
    %vm1292 = vcmp.eq.s32.totalorder %v251, %v876
    %vm1293 = vcmp.eq.s32.totalorder %v251, %v877
    %vm1294 = vcmp.eq.s32.totalorder %v251, %v878
    %vm1295 = vcmp.eq.s32.totalorder %v251, %v879
    %vm1296 = vcmp.eq.s32.totalorder %v251, %v880
    %vm1297 = vcmp.eq.s32.totalorder %v251, %v881
    %vm1298 = vcmp.eq.s32.totalorder %v251, %v882
    %vm1299 = vcmp.eq.s32.totalorder %v251, %v883
    %vm1300 = vcmp.eq.s32.totalorder %v251, %v884
    %vm1301 = vcmp.eq.s32.totalorder %v251, %v885
    %vm1302 = vcmp.eq.s32.totalorder %v251, %v886
    %vm1303 = vcmp.eq.s32.totalorder %v251, %v887
    %vm1304 = vcmp.eq.s32.totalorder %v251, %v888
    %vm1305 = vcmp.eq.s32.totalorder %v251, %v889
    %vm1306 = vcmp.eq.s32.totalorder %v251, %v890
    %vm1307 = vcmp.eq.s32.totalorder %v251, %v891
    %vm1308 = vcmp.eq.s32.totalorder %v251, %v892
    %vm1309 = vcmp.eq.s32.totalorder %v251, %v893
    %vm1310 = vcmp.eq.s32.totalorder %v251, %v894
    %vm1311 = vcmp.eq.s32.totalorder %v252, %v863
    %vm1312 = vcmp.eq.s32.totalorder %v252, %v864
    %vm1313 = vcmp.eq.s32.totalorder %v252, %v865
    %vm1314 = vcmp.eq.s32.totalorder %v252, %v866
    %vm1315 = vcmp.eq.s32.totalorder %v252, %v867
    %vm1316 = vcmp.eq.s32.totalorder %v252, %v868
    %vm1317 = vcmp.eq.s32.totalorder %v252, %v869
    %vm1318 = vcmp.eq.s32.totalorder %v252, %v870
    %vm1319 = vcmp.eq.s32.totalorder %v252, %v871
    %vm1320 = vcmp.eq.s32.totalorder %v252, %v872
    %vm1321 = vcmp.eq.s32.totalorder %v252, %v873
    %vm1322 = vcmp.eq.s32.totalorder %v252, %v874
    %vm1323 = vcmp.eq.s32.totalorder %v252, %v875
    %vm1324 = vcmp.eq.s32.totalorder %v252, %v876
    %vm1325 = vcmp.eq.s32.totalorder %v252, %v877
    %vm1326 = vcmp.eq.s32.totalorder %v252, %v878
    %vm1327 = vcmp.eq.s32.totalorder %v252, %v879
    %vm1328 = vcmp.eq.s32.totalorder %v252, %v880
    %vm1329 = vcmp.eq.s32.totalorder %v252, %v881
    %vm1330 = vcmp.eq.s32.totalorder %v252, %v882
    %vm1331 = vcmp.eq.s32.totalorder %v252, %v883
    %vm1332 = vcmp.eq.s32.totalorder %v252, %v884
    %vm1333 = vcmp.eq.s32.totalorder %v252, %v885
    %vm1334 = vcmp.eq.s32.totalorder %v252, %v886
    %vm1335 = vcmp.eq.s32.totalorder %v252, %v887
    %vm1336 = vcmp.eq.s32.totalorder %v252, %v888
    %vm1337 = vcmp.eq.s32.totalorder %v252, %v889
    %vm1338 = vcmp.eq.s32.totalorder %v252, %v890
    %vm1339 = vcmp.eq.s32.totalorder %v252, %v891
    %vm1340 = vcmp.eq.s32.totalorder %v252, %v892
    %vm1341 = vcmp.eq.s32.totalorder %v252, %v893
    %vm1342 = vcmp.eq.s32.totalorder %v252, %v894
    %vm1343 = vcmp.eq.s32.totalorder %v253, %v863
    %vm1344 = vcmp.eq.s32.totalorder %v253, %v864
    %vm1345 = vcmp.eq.s32.totalorder %v253, %v865
    %vm1346 = vcmp.eq.s32.totalorder %v253, %v866
    %vm1347 = vcmp.eq.s32.totalorder %v253, %v867
    %vm1348 = vcmp.eq.s32.totalorder %v253, %v868
    %vm1349 = vcmp.eq.s32.totalorder %v253, %v869
    %vm1350 = vcmp.eq.s32.totalorder %v253, %v870
    %vm1351 = vcmp.eq.s32.totalorder %v253, %v871
    %vm1352 = vcmp.eq.s32.totalorder %v253, %v872
    %vm1353 = vcmp.eq.s32.totalorder %v253, %v873
    %vm1354 = vcmp.eq.s32.totalorder %v253, %v874
    %vm1355 = vcmp.eq.s32.totalorder %v253, %v875
    %vm1356 = vcmp.eq.s32.totalorder %v253, %v876
    %vm1357 = vcmp.eq.s32.totalorder %v253, %v877
    %vm1358 = vcmp.eq.s32.totalorder %v253, %v878
    %vm1359 = vcmp.eq.s32.totalorder %v253, %v879
    %vm1360 = vcmp.eq.s32.totalorder %v253, %v880
    %vm1361 = vcmp.eq.s32.totalorder %v253, %v881
    %vm1362 = vcmp.eq.s32.totalorder %v253, %v882
    %vm1363 = vcmp.eq.s32.totalorder %v253, %v883
    %vm1364 = vcmp.eq.s32.totalorder %v253, %v884
    %vm1365 = vcmp.eq.s32.totalorder %v253, %v885
    %vm1366 = vcmp.eq.s32.totalorder %v253, %v886
    %vm1367 = vcmp.eq.s32.totalorder %v253, %v887
    %vm1368 = vcmp.eq.s32.totalorder %v253, %v888
    %vm1369 = vcmp.eq.s32.totalorder %v253, %v889
    %vm1370 = vcmp.eq.s32.totalorder %v253, %v890
    %vm1371 = vcmp.eq.s32.totalorder %v253, %v891
    %vm1372 = vcmp.eq.s32.totalorder %v253, %v892
    %vm1373 = vcmp.eq.s32.totalorder %v253, %v893
    %vm1374 = vcmp.eq.s32.totalorder %v253, %v894
    %vm1375 = vcmp.eq.s32.totalorder %v254, %v863
    %vm1376 = vcmp.eq.s32.totalorder %v254, %v864
    %vm1377 = vcmp.eq.s32.totalorder %v254, %v865
    %vm1378 = vcmp.eq.s32.totalorder %v254, %v866
    %vm1379 = vcmp.eq.s32.totalorder %v254, %v867
    %vm1380 = vcmp.eq.s32.totalorder %v254, %v868
    %vm1381 = vcmp.eq.s32.totalorder %v254, %v869
    %vm1382 = vcmp.eq.s32.totalorder %v254, %v870
    %vm1383 = vcmp.eq.s32.totalorder %v254, %v871
    %vm1384 = vcmp.eq.s32.totalorder %v254, %v872
    %vm1385 = vcmp.eq.s32.totalorder %v254, %v873
    %vm1386 = vcmp.eq.s32.totalorder %v254, %v874
    %vm1387 = vcmp.eq.s32.totalorder %v254, %v875
    %vm1388 = vcmp.eq.s32.totalorder %v254, %v876
    %vm1389 = vcmp.eq.s32.totalorder %v254, %v877
    %vm1390 = vcmp.eq.s32.totalorder %v254, %v878
    %vm1391 = vcmp.eq.s32.totalorder %v254, %v879
    %vm1392 = vcmp.eq.s32.totalorder %v254, %v880
    %vm1393 = vcmp.eq.s32.totalorder %v254, %v881
    %vm1394 = vcmp.eq.s32.totalorder %v254, %v882
    %vm1395 = vcmp.eq.s32.totalorder %v254, %v883
    %vm1396 = vcmp.eq.s32.totalorder %v254, %v884
    %vm1397 = vcmp.eq.s32.totalorder %v254, %v885
    %vm1398 = vcmp.eq.s32.totalorder %v254, %v886
    %vm1399 = vcmp.eq.s32.totalorder %v254, %v887
    %vm1400 = vcmp.eq.s32.totalorder %v254, %v888
    %vm1401 = vcmp.eq.s32.totalorder %v254, %v889
    %vm1402 = vcmp.eq.s32.totalorder %v254, %v890
    %vm1403 = vcmp.eq.s32.totalorder %v254, %v891
    %vm1404 = vcmp.eq.s32.totalorder %v254, %v892
    %vm1405 = vcmp.eq.s32.totalorder %v254, %v893
    %vm1406 = vcmp.eq.s32.totalorder %v254, %v894
    %vm1407 = vmor %vm319, %vm895
    %vm1408 = vmor %vm320, %vm896
    %vm1409 = vmor %vm321, %vm897
    %vm1410 = vmor %vm322, %vm898
    %vm1411 = vmor %vm323, %vm899
    %vm1412 = vmor %vm324, %vm900
    %vm1413 = vmor %vm325, %vm901
    %vm1414 = vmor %vm326, %vm902
    %vm1415 = vmor %vm327, %vm903
    %vm1416 = vmor %vm328, %vm904
    %vm1417 = vmor %vm329, %vm905
    %vm1418 = vmor %vm330, %vm906
    %vm1419 = vmor %vm331, %vm907
    %vm1420 = vmor %vm332, %vm908
    %vm1421 = vmor %vm333, %vm909
    %vm1422 = vmor %vm334, %vm910
    %vm1423 = vmor %vm335, %vm911
    %vm1424 = vmor %vm336, %vm912
    %vm1425 = vmor %vm337, %vm913
    %vm1426 = vmor %vm338, %vm914
    %vm1427 = vmor %vm339, %vm915
    %vm1428 = vmor %vm340, %vm916
    %vm1429 = vmor %vm341, %vm917
    %vm1430 = vmor %vm342, %vm918
    %vm1431 = vmor %vm343, %vm919
    %vm1432 = vmor %vm344, %vm920
    %vm1433 = vmor %vm345, %vm921
    %vm1434 = vmor %vm346, %vm922
    %vm1435 = vmor %vm347, %vm923
    %vm1436 = vmor %vm348, %vm924
    %vm1437 = vmor %vm349, %vm925
    %vm1438 = vmor %vm350, %vm926
    %vm1439 = vmor %vm351, %vm927
    %vm1440 = vmor %vm352, %vm928
    %vm1441 = vmor %vm353, %vm929
    %vm1442 = vmor %vm354, %vm930
    %vm1443 = vmor %vm355, %vm931
    %vm1444 = vmor %vm356, %vm932
    %vm1445 = vmor %vm357, %vm933
    %vm1446 = vmor %vm358, %vm934
    %vm1447 = vmor %vm359, %vm935
    %vm1448 = vmor %vm360, %vm936
    %vm1449 = vmor %vm361, %vm937
    %vm1450 = vmor %vm362, %vm938
    %vm1451 = vmor %vm363, %vm939
    %vm1452 = vmor %vm364, %vm940
    %vm1453 = vmor %vm365, %vm941
    %vm1454 = vmor %vm366, %vm942
    %vm1455 = vmor %vm367, %vm943
    %vm1456 = vmor %vm368, %vm944
    %vm1457 = vmor %vm369, %vm945
    %vm1458 = vmor %vm370, %vm946
    %vm1459 = vmor %vm371, %vm947
    %vm1460 = vmor %vm372, %vm948
    %vm1461 = vmor %vm373, %vm949
    %vm1462 = vmor %vm374, %vm950
    %vm1463 = vmor %vm375, %vm951
    %vm1464 = vmor %vm376, %vm952
    %vm1465 = vmor %vm377, %vm953
    %vm1466 = vmor %vm378, %vm954
    %vm1467 = vmor %vm379, %vm955
    %vm1468 = vmor %vm380, %vm956
    %vm1469 = vmor %vm381, %vm957
    %vm1470 = vmor %vm382, %vm958
    %vm1471 = vmor %vm383, %vm959
    %vm1472 = vmor %vm384, %vm960
    %vm1473 = vmor %vm385, %vm961
    %vm1474 = vmor %vm386, %vm962
    %vm1475 = vmor %vm387, %vm963
    %vm1476 = vmor %vm388, %vm964
    %vm1477 = vmor %vm389, %vm965
    %vm1478 = vmor %vm390, %vm966
    %vm1479 = vmor %vm391, %vm967
    %vm1480 = vmor %vm392, %vm968
    %vm1481 = vmor %vm393, %vm969
    %vm1482 = vmor %vm394, %vm970
    %vm1483 = vmor %vm395, %vm971
    %vm1484 = vmor %vm396, %vm972
    %vm1485 = vmor %vm397, %vm973
    %vm1486 = vmor %vm398, %vm974
    %vm1487 = vmor %vm399, %vm975
    %vm1488 = vmor %vm400, %vm976
    %vm1489 = vmor %vm401, %vm977
    %vm1490 = vmor %vm402, %vm978
    %vm1491 = vmor %vm403, %vm979
    %vm1492 = vmor %vm404, %vm980
    %vm1493 = vmor %vm405, %vm981
    %vm1494 = vmor %vm406, %vm982
    %vm1495 = vmor %vm407, %vm983
    %vm1496 = vmor %vm408, %vm984
    %vm1497 = vmor %vm409, %vm985
    %vm1498 = vmor %vm410, %vm986
    %vm1499 = vmor %vm411, %vm987
    %vm1500 = vmor %vm412, %vm988
    %vm1501 = vmor %vm413, %vm989
    %vm1502 = vmor %vm414, %vm990
    %vm1503 = vmor %vm415, %vm991
    %vm1504 = vmor %vm416, %vm992
    %vm1505 = vmor %vm417, %vm993
    %vm1506 = vmor %vm418, %vm994
    %vm1507 = vmor %vm419, %vm995
    %vm1508 = vmor %vm420, %vm996
    %vm1509 = vmor %vm421, %vm997
    %vm1510 = vmor %vm422, %vm998
    %vm1511 = vmor %vm423, %vm999
    %vm1512 = vmor %vm424, %vm1000
    %vm1513 = vmor %vm425, %vm1001
    %vm1514 = vmor %vm426, %vm1002
    %vm1515 = vmor %vm427, %vm1003
    %vm1516 = vmor %vm428, %vm1004
    %vm1517 = vmor %vm429, %vm1005
    %vm1518 = vmor %vm430, %vm1006
    %vm1519 = vmor %vm431, %vm1007
    %vm1520 = vmor %vm432, %vm1008
    %vm1521 = vmor %vm433, %vm1009
    %vm1522 = vmor %vm434, %vm1010
    %vm1523 = vmor %vm435, %vm1011
    %vm1524 = vmor %vm436, %vm1012
    %vm1525 = vmor %vm437, %vm1013
    %vm1526 = vmor %vm438, %vm1014
    %vm1527 = vmor %vm439, %vm1015
    %vm1528 = vmor %vm440, %vm1016
    %vm1529 = vmor %vm441, %vm1017
    %vm1530 = vmor %vm442, %vm1018
    %vm1531 = vmor %vm443, %vm1019
    %vm1532 = vmor %vm444, %vm1020
    %vm1533 = vmor %vm445, %vm1021
    %vm1534 = vmor %vm446, %vm1022
    %vm1535 = vmor %vm447, %vm1023
    %vm1536 = vmor %vm448, %vm1024
    %vm1537 = vmor %vm449, %vm1025
    %vm1538 = vmor %vm450, %vm1026
    %vm1539 = vmor %vm451, %vm1027
    %vm1540 = vmor %vm452, %vm1028
    %vm1541 = vmor %vm453, %vm1029
    %vm1542 = vmor %vm454, %vm1030
    %vm1543 = vmor %vm455, %vm1031
    %vm1544 = vmor %vm456, %vm1032
    %vm1545 = vmor %vm457, %vm1033
    %vm1546 = vmor %vm458, %vm1034
    %vm1547 = vmor %vm459, %vm1035
    %vm1548 = vmor %vm460, %vm1036
    %vm1549 = vmor %vm461, %vm1037
    %vm1550 = vmor %vm462, %vm1038
    %vm1551 = vmor %vm463, %vm1039
    %vm1552 = vmor %vm464, %vm1040
    %vm1553 = vmor %vm465, %vm1041
    %vm1554 = vmor %vm466, %vm1042
    %vm1555 = vmor %vm467, %vm1043
    %vm1556 = vmor %vm468, %vm1044
    %vm1557 = vmor %vm469, %vm1045
    %vm1558 = vmor %vm470, %vm1046
    %vm1559 = vmor %vm471, %vm1047
    %vm1560 = vmor %vm472, %vm1048
    %vm1561 = vmor %vm473, %vm1049
    %vm1562 = vmor %vm474, %vm1050
    %vm1563 = vmor %vm475, %vm1051
    %vm1564 = vmor %vm476, %vm1052
    %vm1565 = vmor %vm477, %vm1053
    %vm1566 = vmor %vm478, %vm1054
    %vm1567 = vmor %vm479, %vm1055
    %vm1568 = vmor %vm480, %vm1056
    %vm1569 = vmor %vm481, %vm1057
    %vm1570 = vmor %vm482, %vm1058
    %vm1571 = vmor %vm483, %vm1059
    %vm1572 = vmor %vm484, %vm1060
    %vm1573 = vmor %vm485, %vm1061
    %vm1574 = vmor %vm486, %vm1062
    %vm1575 = vmor %vm487, %vm1063
    %vm1576 = vmor %vm488, %vm1064
    %vm1577 = vmor %vm489, %vm1065
    %vm1578 = vmor %vm490, %vm1066
    %vm1579 = vmor %vm491, %vm1067
    %vm1580 = vmor %vm492, %vm1068
    %vm1581 = vmor %vm493, %vm1069
    %vm1582 = vmor %vm494, %vm1070
    %vm1583 = vmor %vm495, %vm1071
    %vm1584 = vmor %vm496, %vm1072
    %vm1585 = vmor %vm497, %vm1073
    %vm1586 = vmor %vm498, %vm1074
    %vm1587 = vmor %vm499, %vm1075
    %vm1588 = vmor %vm500, %vm1076
    %vm1589 = vmor %vm501, %vm1077
    %vm1590 = vmor %vm502, %vm1078
    %vm1591 = vmor %vm503, %vm1079
    %vm1592 = vmor %vm504, %vm1080
    %vm1593 = vmor %vm505, %vm1081
    %vm1594 = vmor %vm506, %vm1082
    %vm1595 = vmor %vm507, %vm1083
    %vm1596 = vmor %vm508, %vm1084
    %vm1597 = vmor %vm509, %vm1085
    %vm1598 = vmor %vm510, %vm1086
    %vm1599 = vmor %vm511, %vm1087
    %vm1600 = vmor %vm512, %vm1088
    %vm1601 = vmor %vm513, %vm1089
    %vm1602 = vmor %vm514, %vm1090
    %vm1603 = vmor %vm515, %vm1091
    %vm1604 = vmor %vm516, %vm1092
    %vm1605 = vmor %vm517, %vm1093
    %vm1606 = vmor %vm518, %vm1094
    %vm1607 = vmor %vm519, %vm1095
    %vm1608 = vmor %vm520, %vm1096
    %vm1609 = vmor %vm521, %vm1097
    %vm1610 = vmor %vm522, %vm1098
    %vm1611 = vmor %vm523, %vm1099
    %vm1612 = vmor %vm524, %vm1100
    %vm1613 = vmor %vm525, %vm1101
    %vm1614 = vmor %vm526, %vm1102
    %vm1615 = vmor %vm527, %vm1103
    %vm1616 = vmor %vm528, %vm1104
    %vm1617 = vmor %vm529, %vm1105
    %vm1618 = vmor %vm530, %vm1106
    %vm1619 = vmor %vm531, %vm1107
    %vm1620 = vmor %vm532, %vm1108
    %vm1621 = vmor %vm533, %vm1109
    %vm1622 = vmor %vm534, %vm1110
    %vm1623 = vmor %vm535, %vm1111
    %vm1624 = vmor %vm536, %vm1112
    %vm1625 = vmor %vm537, %vm1113
    %vm1626 = vmor %vm538, %vm1114
    %vm1627 = vmor %vm539, %vm1115
    %vm1628 = vmor %vm540, %vm1116
    %vm1629 = vmor %vm541, %vm1117
    %vm1630 = vmor %vm542, %vm1118
    %vm1631 = vmor %vm543, %vm1119
    %vm1632 = vmor %vm544, %vm1120
    %vm1633 = vmor %vm545, %vm1121
    %vm1634 = vmor %vm546, %vm1122
    %vm1635 = vmor %vm547, %vm1123
    %vm1636 = vmor %vm548, %vm1124
    %vm1637 = vmor %vm549, %vm1125
    %vm1638 = vmor %vm550, %vm1126
    %vm1639 = vmor %vm551, %vm1127
    %vm1640 = vmor %vm552, %vm1128
    %vm1641 = vmor %vm553, %vm1129
    %vm1642 = vmor %vm554, %vm1130
    %vm1643 = vmor %vm555, %vm1131
    %vm1644 = vmor %vm556, %vm1132
    %vm1645 = vmor %vm557, %vm1133
    %vm1646 = vmor %vm558, %vm1134
    %vm1647 = vmor %vm559, %vm1135
    %vm1648 = vmor %vm560, %vm1136
    %vm1649 = vmor %vm561, %vm1137
    %vm1650 = vmor %vm562, %vm1138
    %vm1651 = vmor %vm563, %vm1139
    %vm1652 = vmor %vm564, %vm1140
    %vm1653 = vmor %vm565, %vm1141
    %vm1654 = vmor %vm566, %vm1142
    %vm1655 = vmor %vm567, %vm1143
    %vm1656 = vmor %vm568, %vm1144
    %vm1657 = vmor %vm569, %vm1145
    %vm1658 = vmor %vm570, %vm1146
    %vm1659 = vmor %vm571, %vm1147
    %vm1660 = vmor %vm572, %vm1148
    %vm1661 = vmor %vm573, %vm1149
    %vm1662 = vmor %vm574, %vm1150
    %vm1663 = vmor %vm575, %vm1151
    %vm1664 = vmor %vm576, %vm1152
    %vm1665 = vmor %vm577, %vm1153
    %vm1666 = vmor %vm578, %vm1154
    %vm1667 = vmor %vm579, %vm1155
    %vm1668 = vmor %vm580, %vm1156
    %vm1669 = vmor %vm581, %vm1157
    %vm1670 = vmor %vm582, %vm1158
    %vm1671 = vmor %vm583, %vm1159
    %vm1672 = vmor %vm584, %vm1160
    %vm1673 = vmor %vm585, %vm1161
    %vm1674 = vmor %vm586, %vm1162
    %vm1675 = vmor %vm587, %vm1163
    %vm1676 = vmor %vm588, %vm1164
    %vm1677 = vmor %vm589, %vm1165
    %vm1678 = vmor %vm590, %vm1166
    %vm1679 = vmor %vm591, %vm1167
    %vm1680 = vmor %vm592, %vm1168
    %vm1681 = vmor %vm593, %vm1169
    %vm1682 = vmor %vm594, %vm1170
    %vm1683 = vmor %vm595, %vm1171
    %vm1684 = vmor %vm596, %vm1172
    %vm1685 = vmor %vm597, %vm1173
    %vm1686 = vmor %vm598, %vm1174
    %vm1687 = vmor %vm599, %vm1175
    %vm1688 = vmor %vm600, %vm1176
    %vm1689 = vmor %vm601, %vm1177
    %vm1690 = vmor %vm602, %vm1178
    %vm1691 = vmor %vm603, %vm1179
    %vm1692 = vmor %vm604, %vm1180
    %vm1693 = vmor %vm605, %vm1181
    %vm1694 = vmor %vm606, %vm1182
    %vm1695 = vmor %vm607, %vm1183
    %vm1696 = vmor %vm608, %vm1184
    %vm1697 = vmor %vm609, %vm1185
    %vm1698 = vmor %vm610, %vm1186
    %vm1699 = vmor %vm611, %vm1187
    %vm1700 = vmor %vm612, %vm1188
    %vm1701 = vmor %vm613, %vm1189
    %vm1702 = vmor %vm614, %vm1190
    %vm1703 = vmor %vm615, %vm1191
    %vm1704 = vmor %vm616, %vm1192
    %vm1705 = vmor %vm617, %vm1193
    %vm1706 = vmor %vm618, %vm1194
    %vm1707 = vmor %vm619, %vm1195
    %vm1708 = vmor %vm620, %vm1196
    %vm1709 = vmor %vm621, %vm1197
    %vm1710 = vmor %vm622, %vm1198
    %vm1711 = vmor %vm623, %vm1199
    %vm1712 = vmor %vm624, %vm1200
    %vm1713 = vmor %vm625, %vm1201
    %vm1714 = vmor %vm626, %vm1202
    %vm1715 = vmor %vm627, %vm1203
    %vm1716 = vmor %vm628, %vm1204
    %vm1717 = vmor %vm629, %vm1205
    %vm1718 = vmor %vm630, %vm1206
    %vm1719 = vmor %vm631, %vm1207
    %vm1720 = vmor %vm632, %vm1208
    %vm1721 = vmor %vm633, %vm1209
    %vm1722 = vmor %vm634, %vm1210
    %vm1723 = vmor %vm635, %vm1211
    %vm1724 = vmor %vm636, %vm1212
    %vm1725 = vmor %vm637, %vm1213
    %vm1726 = vmor %vm638, %vm1214
    %vm1727 = vmor %vm639, %vm1215
    %vm1728 = vmor %vm640, %vm1216
    %vm1729 = vmor %vm641, %vm1217
    %vm1730 = vmor %vm642, %vm1218
    %vm1731 = vmor %vm643, %vm1219
    %vm1732 = vmor %vm644, %vm1220
    %vm1733 = vmor %vm645, %vm1221
    %vm1734 = vmor %vm646, %vm1222
    %vm1735 = vmor %vm647, %vm1223
    %vm1736 = vmor %vm648, %vm1224
    %vm1737 = vmor %vm649, %vm1225
    %vm1738 = vmor %vm650, %vm1226
    %vm1739 = vmor %vm651, %vm1227
    %vm1740 = vmor %vm652, %vm1228
    %vm1741 = vmor %vm653, %vm1229
    %vm1742 = vmor %vm654, %vm1230
    %vm1743 = vmor %vm655, %vm1231
    %vm1744 = vmor %vm656, %vm1232
    %vm1745 = vmor %vm657, %vm1233
    %vm1746 = vmor %vm658, %vm1234
    %vm1747 = vmor %vm659, %vm1235
    %vm1748 = vmor %vm660, %vm1236
    %vm1749 = vmor %vm661, %vm1237
    %vm1750 = vmor %vm662, %vm1238
    %vm1751 = vmor %vm663, %vm1239
    %vm1752 = vmor %vm664, %vm1240
    %vm1753 = vmor %vm665, %vm1241
    %vm1754 = vmor %vm666, %vm1242
    %vm1755 = vmor %vm667, %vm1243
    %vm1756 = vmor %vm668, %vm1244
    %vm1757 = vmor %vm669, %vm1245
    %vm1758 = vmor %vm670, %vm1246
    %vm1759 = vmor %vm671, %vm1247
    %vm1760 = vmor %vm672, %vm1248
    %vm1761 = vmor %vm673, %vm1249
    %vm1762 = vmor %vm674, %vm1250
    %vm1763 = vmor %vm675, %vm1251
    %vm1764 = vmor %vm676, %vm1252
    %vm1765 = vmor %vm677, %vm1253
    %vm1766 = vmor %vm678, %vm1254
    %vm1767 = vmor %vm679, %vm1255
    %vm1768 = vmor %vm680, %vm1256
    %vm1769 = vmor %vm681, %vm1257
    %vm1770 = vmor %vm682, %vm1258
    %vm1771 = vmor %vm683, %vm1259
    %vm1772 = vmor %vm684, %vm1260
    %vm1773 = vmor %vm685, %vm1261
    %vm1774 = vmor %vm686, %vm1262
    %vm1775 = vmor %vm687, %vm1263
    %vm1776 = vmor %vm688, %vm1264
    %vm1777 = vmor %vm689, %vm1265
    %vm1778 = vmor %vm690, %vm1266
    %vm1779 = vmor %vm691, %vm1267
    %vm1780 = vmor %vm692, %vm1268
    %vm1781 = vmor %vm693, %vm1269
    %vm1782 = vmor %vm694, %vm1270
    %vm1783 = vmor %vm695, %vm1271
    %vm1784 = vmor %vm696, %vm1272
    %vm1785 = vmor %vm697, %vm1273
    %vm1786 = vmor %vm698, %vm1274
    %vm1787 = vmor %vm699, %vm1275
    %vm1788 = vmor %vm700, %vm1276
    %vm1789 = vmor %vm701, %vm1277
    %vm1790 = vmor %vm702, %vm1278
    %vm1791 = vmor %vm703, %vm1279
    %vm1792 = vmor %vm704, %vm1280
    %vm1793 = vmor %vm705, %vm1281
    %vm1794 = vmor %vm706, %vm1282
    %vm1795 = vmor %vm707, %vm1283
    %vm1796 = vmor %vm708, %vm1284
    %vm1797 = vmor %vm709, %vm1285
    %vm1798 = vmor %vm710, %vm1286
    %vm1799 = vmor %vm711, %vm1287
    %vm1800 = vmor %vm712, %vm1288
    %vm1801 = vmor %vm713, %vm1289
    %vm1802 = vmor %vm714, %vm1290
    %vm1803 = vmor %vm715, %vm1291
    %vm1804 = vmor %vm716, %vm1292
    %vm1805 = vmor %vm717, %vm1293
    %vm1806 = vmor %vm718, %vm1294
    %vm1807 = vmor %vm719, %vm1295
    %vm1808 = vmor %vm720, %vm1296
    %vm1809 = vmor %vm721, %vm1297
    %vm1810 = vmor %vm722, %vm1298
    %vm1811 = vmor %vm723, %vm1299
    %vm1812 = vmor %vm724, %vm1300
    %vm1813 = vmor %vm725, %vm1301
    %vm1814 = vmor %vm726, %vm1302
    %vm1815 = vmor %vm727, %vm1303
    %vm1816 = vmor %vm728, %vm1304
    %vm1817 = vmor %vm729, %vm1305
    %vm1818 = vmor %vm730, %vm1306
    %vm1819 = vmor %vm731, %vm1307
    %vm1820 = vmor %vm732, %vm1308
    %vm1821 = vmor %vm733, %vm1309
    %vm1822 = vmor %vm734, %vm1310
    %vm1823 = vmor %vm735, %vm1311
    %vm1824 = vmor %vm736, %vm1312
    %vm1825 = vmor %vm737, %vm1313
    %vm1826 = vmor %vm738, %vm1314
    %vm1827 = vmor %vm739, %vm1315
    %vm1828 = vmor %vm740, %vm1316
    %vm1829 = vmor %vm741, %vm1317
    %vm1830 = vmor %vm742, %vm1318
    %vm1831 = vmor %vm743, %vm1319
    %vm1832 = vmor %vm744, %vm1320
    %vm1833 = vmor %vm745, %vm1321
    %vm1834 = vmor %vm746, %vm1322
    %vm1835 = vmor %vm747, %vm1323
    %vm1836 = vmor %vm748, %vm1324
    %vm1837 = vmor %vm749, %vm1325
    %vm1838 = vmor %vm750, %vm1326
    %vm1839 = vmor %vm751, %vm1327
    %vm1840 = vmor %vm752, %vm1328
    %vm1841 = vmor %vm753, %vm1329
    %vm1842 = vmor %vm754, %vm1330
    %vm1843 = vmor %vm755, %vm1331
    %vm1844 = vmor %vm756, %vm1332
    %vm1845 = vmor %vm757, %vm1333
    %vm1846 = vmor %vm758, %vm1334
    %vm1847 = vmor %vm759, %vm1335
    %vm1848 = vmor %vm760, %vm1336
    %vm1849 = vmor %vm761, %vm1337
    %vm1850 = vmor %vm762, %vm1338
    %vm1851 = vmor %vm763, %vm1339
    %vm1852 = vmor %vm764, %vm1340
    %vm1853 = vmor %vm765, %vm1341
    %vm1854 = vmor %vm766, %vm1342
    %vm1855 = vmor %vm767, %vm1343
    %vm1856 = vmor %vm768, %vm1344
    %vm1857 = vmor %vm769, %vm1345
    %vm1858 = vmor %vm770, %vm1346
    %vm1859 = vmor %vm771, %vm1347
    %vm1860 = vmor %vm772, %vm1348
    %vm1861 = vmor %vm773, %vm1349
    %vm1862 = vmor %vm774, %vm1350
    %vm1863 = vmor %vm775, %vm1351
    %vm1864 = vmor %vm776, %vm1352
    %vm1865 = vmor %vm777, %vm1353
    %vm1866 = vmor %vm778, %vm1354
    %vm1867 = vmor %vm779, %vm1355
    %vm1868 = vmor %vm780, %vm1356
    %vm1869 = vmor %vm781, %vm1357
    %vm1870 = vmor %vm782, %vm1358
    %vm1871 = vmor %vm783, %vm1359
    %vm1872 = vmor %vm784, %vm1360
    %vm1873 = vmor %vm785, %vm1361
    %vm1874 = vmor %vm786, %vm1362
    %vm1875 = vmor %vm787, %vm1363
    %vm1876 = vmor %vm788, %vm1364
    %vm1877 = vmor %vm789, %vm1365
    %vm1878 = vmor %vm790, %vm1366
    %vm1879 = vmor %vm791, %vm1367
    %vm1880 = vmor %vm792, %vm1368
    %vm1881 = vmor %vm793, %vm1369
    %vm1882 = vmor %vm794, %vm1370
    %vm1883 = vmor %vm795, %vm1371
    %vm1884 = vmor %vm796, %vm1372
    %vm1885 = vmor %vm797, %vm1373
    %vm1886 = vmor %vm798, %vm1374
    %vm1887 = vmor %vm799, %vm1375
    %vm1888 = vmor %vm800, %vm1376
    %vm1889 = vmor %vm801, %vm1377
    %vm1890 = vmor %vm802, %vm1378
    %vm1891 = vmor %vm803, %vm1379
    %vm1892 = vmor %vm804, %vm1380
    %vm1893 = vmor %vm805, %vm1381
    %vm1894 = vmor %vm806, %vm1382
    %vm1895 = vmor %vm807, %vm1383
    %vm1896 = vmor %vm808, %vm1384
    %vm1897 = vmor %vm809, %vm1385
    %vm1898 = vmor %vm810, %vm1386
    %vm1899 = vmor %vm811, %vm1387
    %vm1900 = vmor %vm812, %vm1388
    %vm1901 = vmor %vm813, %vm1389
    %vm1902 = vmor %vm814, %vm1390
    %vm1903 = vmor %vm815, %vm1391
    %vm1904 = vmor %vm816, %vm1392
    %vm1905 = vmor %vm817, %vm1393
    %vm1906 = vmor %vm818, %vm1394
    %vm1907 = vmor %vm819, %vm1395
    %vm1908 = vmor %vm820, %vm1396
    %vm1909 = vmor %vm821, %vm1397
    %vm1910 = vmor %vm822, %vm1398
    %vm1911 = vmor %vm823, %vm1399
    %vm1912 = vmor %vm824, %vm1400
    %vm1913 = vmor %vm825, %vm1401
    %vm1914 = vmor %vm826, %vm1402
    %vm1915 = vmor %vm827, %vm1403
    %vm1916 = vmor %vm828, %vm1404
    %vm1917 = vmor %vm829, %vm1405
    %vm1918 = vmor %vm830, %vm1406
    %v1919 = vsel %vm1407, 1.0, 0.0
    %v1920 = vsel %vm1408, 1.0, 0.0
    %v1921 = vsel %vm1409, 1.0, 0.0
    %v1922 = vsel %vm1410, 1.0, 0.0
    %v1923 = vsel %vm1411, 1.0, 0.0
    %v1924 = vsel %vm1412, 1.0, 0.0
    %v1925 = vsel %vm1413, 1.0, 0.0
    %v1926 = vsel %vm1414, 1.0, 0.0
    %v1927 = vsel %vm1415, 1.0, 0.0
    %v1928 = vsel %vm1416, 1.0, 0.0
    %v1929 = vsel %vm1417, 1.0, 0.0
    %v1930 = vsel %vm1418, 1.0, 0.0
    %v1931 = vsel %vm1419, 1.0, 0.0
    %v1932 = vsel %vm1420, 1.0, 0.0
    %v1933 = vsel %vm1421, 1.0, 0.0
    %v1934 = vsel %vm1422, 1.0, 0.0
    %v1935 = vsel %vm1423, 1.0, 0.0
    %v1936 = vsel %vm1424, 1.0, 0.0
    %v1937 = vsel %vm1425, 1.0, 0.0
    %v1938 = vsel %vm1426, 1.0, 0.0
    %v1939 = vsel %vm1427, 1.0, 0.0
    %v1940 = vsel %vm1428, 1.0, 0.0
    %v1941 = vsel %vm1429, 1.0, 0.0
    %v1942 = vsel %vm1430, 1.0, 0.0
    %v1943 = vsel %vm1431, 1.0, 0.0
    %v1944 = vsel %vm1432, 1.0, 0.0
    %v1945 = vsel %vm1433, 1.0, 0.0
    %v1946 = vsel %vm1434, 1.0, 0.0
    %v1947 = vsel %vm1435, 1.0, 0.0
    %v1948 = vsel %vm1436, 1.0, 0.0
    %v1949 = vsel %vm1437, 1.0, 0.0
    %v1950 = vsel %vm1438, 1.0, 0.0
    %v1951 = vsel %vm1439, 1.0, 0.0
    %v1952 = vsel %vm1440, 1.0, 0.0
    %v1953 = vsel %vm1441, 1.0, 0.0
    %v1954 = vsel %vm1442, 1.0, 0.0
    %v1955 = vsel %vm1443, 1.0, 0.0
    %v1956 = vsel %vm1444, 1.0, 0.0
    %v1957 = vsel %vm1445, 1.0, 0.0
    %v1958 = vsel %vm1446, 1.0, 0.0
    %v1959 = vsel %vm1447, 1.0, 0.0
    %v1960 = vsel %vm1448, 1.0, 0.0
    %v1961 = vsel %vm1449, 1.0, 0.0
    %v1962 = vsel %vm1450, 1.0, 0.0
    %v1963 = vsel %vm1451, 1.0, 0.0
    %v1964 = vsel %vm1452, 1.0, 0.0
    %v1965 = vsel %vm1453, 1.0, 0.0
    %v1966 = vsel %vm1454, 1.0, 0.0
    %v1967 = vsel %vm1455, 1.0, 0.0
    %v1968 = vsel %vm1456, 1.0, 0.0
    %v1969 = vsel %vm1457, 1.0, 0.0
    %v1970 = vsel %vm1458, 1.0, 0.0
    %v1971 = vsel %vm1459, 1.0, 0.0
    %v1972 = vsel %vm1460, 1.0, 0.0
    %v1973 = vsel %vm1461, 1.0, 0.0
    %v1974 = vsel %vm1462, 1.0, 0.0
    %v1975 = vsel %vm1463, 1.0, 0.0
    %v1976 = vsel %vm1464, 1.0, 0.0
    %v1977 = vsel %vm1465, 1.0, 0.0
    %v1978 = vsel %vm1466, 1.0, 0.0
    %v1979 = vsel %vm1467, 1.0, 0.0
    %v1980 = vsel %vm1468, 1.0, 0.0
    %v1981 = vsel %vm1469, 1.0, 0.0
    %v1982 = vsel %vm1470, 1.0, 0.0
    %v1983 = vsel %vm1471, 1.0, 0.0
    %v1984 = vsel %vm1472, 1.0, 0.0
    %v1985 = vsel %vm1473, 1.0, 0.0
    %v1986 = vsel %vm1474, 1.0, 0.0
    %v1987 = vsel %vm1475, 1.0, 0.0
    %v1988 = vsel %vm1476, 1.0, 0.0
    %v1989 = vsel %vm1477, 1.0, 0.0
    %v1990 = vsel %vm1478, 1.0, 0.0
    %v1991 = vsel %vm1479, 1.0, 0.0
    %v1992 = vsel %vm1480, 1.0, 0.0
    %v1993 = vsel %vm1481, 1.0, 0.0
    %v1994 = vsel %vm1482, 1.0, 0.0
    %v1995 = vsel %vm1483, 1.0, 0.0
    %v1996 = vsel %vm1484, 1.0, 0.0
    %v1997 = vsel %vm1485, 1.0, 0.0
    %v1998 = vsel %vm1486, 1.0, 0.0
    %v1999 = vsel %vm1487, 1.0, 0.0
    %v2000 = vsel %vm1488, 1.0, 0.0
    %v2001 = vsel %vm1489, 1.0, 0.0
    %v2002 = vsel %vm1490, 1.0, 0.0
    %v2003 = vsel %vm1491, 1.0, 0.0
    %v2004 = vsel %vm1492, 1.0, 0.0
    %v2005 = vsel %vm1493, 1.0, 0.0
    %v2006 = vsel %vm1494, 1.0, 0.0
    %v2007 = vsel %vm1495, 1.0, 0.0
    %v2008 = vsel %vm1496, 1.0, 0.0
    %v2009 = vsel %vm1497, 1.0, 0.0
    %v2010 = vsel %vm1498, 1.0, 0.0
    %v2011 = vsel %vm1499, 1.0, 0.0
    %v2012 = vsel %vm1500, 1.0, 0.0
    %v2013 = vsel %vm1501, 1.0, 0.0
    %v2014 = vsel %vm1502, 1.0, 0.0
    %v2015 = vsel %vm1503, 1.0, 0.0
    %v2016 = vsel %vm1504, 1.0, 0.0
    %v2017 = vsel %vm1505, 1.0, 0.0
    %v2018 = vsel %vm1506, 1.0, 0.0
    %v2019 = vsel %vm1507, 1.0, 0.0
    %v2020 = vsel %vm1508, 1.0, 0.0
    %v2021 = vsel %vm1509, 1.0, 0.0
    %v2022 = vsel %vm1510, 1.0, 0.0
    %v2023 = vsel %vm1511, 1.0, 0.0
    %v2024 = vsel %vm1512, 1.0, 0.0
    %v2025 = vsel %vm1513, 1.0, 0.0
    %v2026 = vsel %vm1514, 1.0, 0.0
    %v2027 = vsel %vm1515, 1.0, 0.0
    %v2028 = vsel %vm1516, 1.0, 0.0
    %v2029 = vsel %vm1517, 1.0, 0.0
    %v2030 = vsel %vm1518, 1.0, 0.0
    %v2031 = vsel %vm1519, 1.0, 0.0
    %v2032 = vsel %vm1520, 1.0, 0.0
    %v2033 = vsel %vm1521, 1.0, 0.0
    %v2034 = vsel %vm1522, 1.0, 0.0
    %v2035 = vsel %vm1523, 1.0, 0.0
    %v2036 = vsel %vm1524, 1.0, 0.0
    %v2037 = vsel %vm1525, 1.0, 0.0
    %v2038 = vsel %vm1526, 1.0, 0.0
    %v2039 = vsel %vm1527, 1.0, 0.0
    %v2040 = vsel %vm1528, 1.0, 0.0
    %v2041 = vsel %vm1529, 1.0, 0.0
    %v2042 = vsel %vm1530, 1.0, 0.0
    %v2043 = vsel %vm1531, 1.0, 0.0
    %v2044 = vsel %vm1532, 1.0, 0.0
    %v2045 = vsel %vm1533, 1.0, 0.0
    %v2046 = vsel %vm1534, 1.0, 0.0
    %v2047 = vsel %vm1535, 1.0, 0.0
    %v2048 = vsel %vm1536, 1.0, 0.0
    %v2049 = vsel %vm1537, 1.0, 0.0
    %v2050 = vsel %vm1538, 1.0, 0.0
    %v2051 = vsel %vm1539, 1.0, 0.0
    %v2052 = vsel %vm1540, 1.0, 0.0
    %v2053 = vsel %vm1541, 1.0, 0.0
    %v2054 = vsel %vm1542, 1.0, 0.0
    %v2055 = vsel %vm1543, 1.0, 0.0
    %v2056 = vsel %vm1544, 1.0, 0.0
    %v2057 = vsel %vm1545, 1.0, 0.0
    %v2058 = vsel %vm1546, 1.0, 0.0
    %v2059 = vsel %vm1547, 1.0, 0.0
    %v2060 = vsel %vm1548, 1.0, 0.0
    %v2061 = vsel %vm1549, 1.0, 0.0
    %v2062 = vsel %vm1550, 1.0, 0.0
    %v2063 = vsel %vm1551, 1.0, 0.0
    %v2064 = vsel %vm1552, 1.0, 0.0
    %v2065 = vsel %vm1553, 1.0, 0.0
    %v2066 = vsel %vm1554, 1.0, 0.0
    %v2067 = vsel %vm1555, 1.0, 0.0
    %v2068 = vsel %vm1556, 1.0, 0.0
    %v2069 = vsel %vm1557, 1.0, 0.0
    %v2070 = vsel %vm1558, 1.0, 0.0
    %v2071 = vsel %vm1559, 1.0, 0.0
    %v2072 = vsel %vm1560, 1.0, 0.0
    %v2073 = vsel %vm1561, 1.0, 0.0
    %v2074 = vsel %vm1562, 1.0, 0.0
    %v2075 = vsel %vm1563, 1.0, 0.0
    %v2076 = vsel %vm1564, 1.0, 0.0
    %v2077 = vsel %vm1565, 1.0, 0.0
    %v2078 = vsel %vm1566, 1.0, 0.0
    %v2079 = vsel %vm1567, 1.0, 0.0
    %v2080 = vsel %vm1568, 1.0, 0.0
    %v2081 = vsel %vm1569, 1.0, 0.0
    %v2082 = vsel %vm1570, 1.0, 0.0
    %v2083 = vsel %vm1571, 1.0, 0.0
    %v2084 = vsel %vm1572, 1.0, 0.0
    %v2085 = vsel %vm1573, 1.0, 0.0
    %v2086 = vsel %vm1574, 1.0, 0.0
    %v2087 = vsel %vm1575, 1.0, 0.0
    %v2088 = vsel %vm1576, 1.0, 0.0
    %v2089 = vsel %vm1577, 1.0, 0.0
    %v2090 = vsel %vm1578, 1.0, 0.0
    %v2091 = vsel %vm1579, 1.0, 0.0
    %v2092 = vsel %vm1580, 1.0, 0.0
    %v2093 = vsel %vm1581, 1.0, 0.0
    %v2094 = vsel %vm1582, 1.0, 0.0
    %v2095 = vsel %vm1583, 1.0, 0.0
    %v2096 = vsel %vm1584, 1.0, 0.0
    %v2097 = vsel %vm1585, 1.0, 0.0
    %v2098 = vsel %vm1586, 1.0, 0.0
    %v2099 = vsel %vm1587, 1.0, 0.0
    %v2100 = vsel %vm1588, 1.0, 0.0
    %v2101 = vsel %vm1589, 1.0, 0.0
    %v2102 = vsel %vm1590, 1.0, 0.0
    %v2103 = vsel %vm1591, 1.0, 0.0
    %v2104 = vsel %vm1592, 1.0, 0.0
    %v2105 = vsel %vm1593, 1.0, 0.0
    %v2106 = vsel %vm1594, 1.0, 0.0
    %v2107 = vsel %vm1595, 1.0, 0.0
    %v2108 = vsel %vm1596, 1.0, 0.0
    %v2109 = vsel %vm1597, 1.0, 0.0
    %v2110 = vsel %vm1598, 1.0, 0.0
    %v2111 = vsel %vm1599, 1.0, 0.0
    %v2112 = vsel %vm1600, 1.0, 0.0
    %v2113 = vsel %vm1601, 1.0, 0.0
    %v2114 = vsel %vm1602, 1.0, 0.0
    %v2115 = vsel %vm1603, 1.0, 0.0
    %v2116 = vsel %vm1604, 1.0, 0.0
    %v2117 = vsel %vm1605, 1.0, 0.0
    %v2118 = vsel %vm1606, 1.0, 0.0
    %v2119 = vsel %vm1607, 1.0, 0.0
    %v2120 = vsel %vm1608, 1.0, 0.0
    %v2121 = vsel %vm1609, 1.0, 0.0
    %v2122 = vsel %vm1610, 1.0, 0.0
    %v2123 = vsel %vm1611, 1.0, 0.0
    %v2124 = vsel %vm1612, 1.0, 0.0
    %v2125 = vsel %vm1613, 1.0, 0.0
    %v2126 = vsel %vm1614, 1.0, 0.0
    %v2127 = vsel %vm1615, 1.0, 0.0
    %v2128 = vsel %vm1616, 1.0, 0.0
    %v2129 = vsel %vm1617, 1.0, 0.0
    %v2130 = vsel %vm1618, 1.0, 0.0
    %v2131 = vsel %vm1619, 1.0, 0.0
    %v2132 = vsel %vm1620, 1.0, 0.0
    %v2133 = vsel %vm1621, 1.0, 0.0
    %v2134 = vsel %vm1622, 1.0, 0.0
    %v2135 = vsel %vm1623, 1.0, 0.0
    %v2136 = vsel %vm1624, 1.0, 0.0
    %v2137 = vsel %vm1625, 1.0, 0.0
    %v2138 = vsel %vm1626, 1.0, 0.0
    %v2139 = vsel %vm1627, 1.0, 0.0
    %v2140 = vsel %vm1628, 1.0, 0.0
    %v2141 = vsel %vm1629, 1.0, 0.0
    %v2142 = vsel %vm1630, 1.0, 0.0
    %v2143 = vsel %vm1631, 1.0, 0.0
    %v2144 = vsel %vm1632, 1.0, 0.0
    %v2145 = vsel %vm1633, 1.0, 0.0
    %v2146 = vsel %vm1634, 1.0, 0.0
    %v2147 = vsel %vm1635, 1.0, 0.0
    %v2148 = vsel %vm1636, 1.0, 0.0
    %v2149 = vsel %vm1637, 1.0, 0.0
    %v2150 = vsel %vm1638, 1.0, 0.0
    %v2151 = vsel %vm1639, 1.0, 0.0
    %v2152 = vsel %vm1640, 1.0, 0.0
    %v2153 = vsel %vm1641, 1.0, 0.0
    %v2154 = vsel %vm1642, 1.0, 0.0
    %v2155 = vsel %vm1643, 1.0, 0.0
    %v2156 = vsel %vm1644, 1.0, 0.0
    %v2157 = vsel %vm1645, 1.0, 0.0
    %v2158 = vsel %vm1646, 1.0, 0.0
    %v2159 = vsel %vm1647, 1.0, 0.0
    %v2160 = vsel %vm1648, 1.0, 0.0
    %v2161 = vsel %vm1649, 1.0, 0.0
    %v2162 = vsel %vm1650, 1.0, 0.0
    %v2163 = vsel %vm1651, 1.0, 0.0
    %v2164 = vsel %vm1652, 1.0, 0.0
    %v2165 = vsel %vm1653, 1.0, 0.0
    %v2166 = vsel %vm1654, 1.0, 0.0
    %v2167 = vsel %vm1655, 1.0, 0.0
    %v2168 = vsel %vm1656, 1.0, 0.0
    %v2169 = vsel %vm1657, 1.0, 0.0
    %v2170 = vsel %vm1658, 1.0, 0.0
    %v2171 = vsel %vm1659, 1.0, 0.0
    %v2172 = vsel %vm1660, 1.0, 0.0
    %v2173 = vsel %vm1661, 1.0, 0.0
    %v2174 = vsel %vm1662, 1.0, 0.0
    %v2175 = vsel %vm1663, 1.0, 0.0
    %v2176 = vsel %vm1664, 1.0, 0.0
    %v2177 = vsel %vm1665, 1.0, 0.0
    %v2178 = vsel %vm1666, 1.0, 0.0
    %v2179 = vsel %vm1667, 1.0, 0.0
    %v2180 = vsel %vm1668, 1.0, 0.0
    %v2181 = vsel %vm1669, 1.0, 0.0
    %v2182 = vsel %vm1670, 1.0, 0.0
    %v2183 = vsel %vm1671, 1.0, 0.0
    %v2184 = vsel %vm1672, 1.0, 0.0
    %v2185 = vsel %vm1673, 1.0, 0.0
    %v2186 = vsel %vm1674, 1.0, 0.0
    %v2187 = vsel %vm1675, 1.0, 0.0
    %v2188 = vsel %vm1676, 1.0, 0.0
    %v2189 = vsel %vm1677, 1.0, 0.0
    %v2190 = vsel %vm1678, 1.0, 0.0
    %v2191 = vsel %vm1679, 1.0, 0.0
    %v2192 = vsel %vm1680, 1.0, 0.0
    %v2193 = vsel %vm1681, 1.0, 0.0
    %v2194 = vsel %vm1682, 1.0, 0.0
    %v2195 = vsel %vm1683, 1.0, 0.0
    %v2196 = vsel %vm1684, 1.0, 0.0
    %v2197 = vsel %vm1685, 1.0, 0.0
    %v2198 = vsel %vm1686, 1.0, 0.0
    %v2199 = vsel %vm1687, 1.0, 0.0
    %v2200 = vsel %vm1688, 1.0, 0.0
    %v2201 = vsel %vm1689, 1.0, 0.0
    %v2202 = vsel %vm1690, 1.0, 0.0
    %v2203 = vsel %vm1691, 1.0, 0.0
    %v2204 = vsel %vm1692, 1.0, 0.0
    %v2205 = vsel %vm1693, 1.0, 0.0
    %v2206 = vsel %vm1694, 1.0, 0.0
    %v2207 = vsel %vm1695, 1.0, 0.0
    %v2208 = vsel %vm1696, 1.0, 0.0
    %v2209 = vsel %vm1697, 1.0, 0.0
    %v2210 = vsel %vm1698, 1.0, 0.0
    %v2211 = vsel %vm1699, 1.0, 0.0
    %v2212 = vsel %vm1700, 1.0, 0.0
    %v2213 = vsel %vm1701, 1.0, 0.0
    %v2214 = vsel %vm1702, 1.0, 0.0
    %v2215 = vsel %vm1703, 1.0, 0.0
    %v2216 = vsel %vm1704, 1.0, 0.0
    %v2217 = vsel %vm1705, 1.0, 0.0
    %v2218 = vsel %vm1706, 1.0, 0.0
    %v2219 = vsel %vm1707, 1.0, 0.0
    %v2220 = vsel %vm1708, 1.0, 0.0
    %v2221 = vsel %vm1709, 1.0, 0.0
    %v2222 = vsel %vm1710, 1.0, 0.0
    %v2223 = vsel %vm1711, 1.0, 0.0
    %v2224 = vsel %vm1712, 1.0, 0.0
    %v2225 = vsel %vm1713, 1.0, 0.0
    %v2226 = vsel %vm1714, 1.0, 0.0
    %v2227 = vsel %vm1715, 1.0, 0.0
    %v2228 = vsel %vm1716, 1.0, 0.0
    %v2229 = vsel %vm1717, 1.0, 0.0
    %v2230 = vsel %vm1718, 1.0, 0.0
    %v2231 = vsel %vm1719, 1.0, 0.0
    %v2232 = vsel %vm1720, 1.0, 0.0
    %v2233 = vsel %vm1721, 1.0, 0.0
    %v2234 = vsel %vm1722, 1.0, 0.0
    %v2235 = vsel %vm1723, 1.0, 0.0
    %v2236 = vsel %vm1724, 1.0, 0.0
    %v2237 = vsel %vm1725, 1.0, 0.0
    %v2238 = vsel %vm1726, 1.0, 0.0
    %v2239 = vsel %vm1727, 1.0, 0.0
    %v2240 = vsel %vm1728, 1.0, 0.0
    %v2241 = vsel %vm1729, 1.0, 0.0
    %v2242 = vsel %vm1730, 1.0, 0.0
    %v2243 = vsel %vm1731, 1.0, 0.0
    %v2244 = vsel %vm1732, 1.0, 0.0
    %v2245 = vsel %vm1733, 1.0, 0.0
    %v2246 = vsel %vm1734, 1.0, 0.0
    %v2247 = vsel %vm1735, 1.0, 0.0
    %v2248 = vsel %vm1736, 1.0, 0.0
    %v2249 = vsel %vm1737, 1.0, 0.0
    %v2250 = vsel %vm1738, 1.0, 0.0
    %v2251 = vsel %vm1739, 1.0, 0.0
    %v2252 = vsel %vm1740, 1.0, 0.0
    %v2253 = vsel %vm1741, 1.0, 0.0
    %v2254 = vsel %vm1742, 1.0, 0.0
    %v2255 = vsel %vm1743, 1.0, 0.0
    %v2256 = vsel %vm1744, 1.0, 0.0
    %v2257 = vsel %vm1745, 1.0, 0.0
    %v2258 = vsel %vm1746, 1.0, 0.0
    %v2259 = vsel %vm1747, 1.0, 0.0
    %v2260 = vsel %vm1748, 1.0, 0.0
    %v2261 = vsel %vm1749, 1.0, 0.0
    %v2262 = vsel %vm1750, 1.0, 0.0
    %v2263 = vsel %vm1751, 1.0, 0.0
    %v2264 = vsel %vm1752, 1.0, 0.0
    %v2265 = vsel %vm1753, 1.0, 0.0
    %v2266 = vsel %vm1754, 1.0, 0.0
    %v2267 = vsel %vm1755, 1.0, 0.0
    %v2268 = vsel %vm1756, 1.0, 0.0
    %v2269 = vsel %vm1757, 1.0, 0.0
    %v2270 = vsel %vm1758, 1.0, 0.0
    %v2271 = vsel %vm1759, 1.0, 0.0
    %v2272 = vsel %vm1760, 1.0, 0.0
    %v2273 = vsel %vm1761, 1.0, 0.0
    %v2274 = vsel %vm1762, 1.0, 0.0
    %v2275 = vsel %vm1763, 1.0, 0.0
    %v2276 = vsel %vm1764, 1.0, 0.0
    %v2277 = vsel %vm1765, 1.0, 0.0
    %v2278 = vsel %vm1766, 1.0, 0.0
    %v2279 = vsel %vm1767, 1.0, 0.0
    %v2280 = vsel %vm1768, 1.0, 0.0
    %v2281 = vsel %vm1769, 1.0, 0.0
    %v2282 = vsel %vm1770, 1.0, 0.0
    %v2283 = vsel %vm1771, 1.0, 0.0
    %v2284 = vsel %vm1772, 1.0, 0.0
    %v2285 = vsel %vm1773, 1.0, 0.0
    %v2286 = vsel %vm1774, 1.0, 0.0
    %v2287 = vsel %vm1775, 1.0, 0.0
    %v2288 = vsel %vm1776, 1.0, 0.0
    %v2289 = vsel %vm1777, 1.0, 0.0
    %v2290 = vsel %vm1778, 1.0, 0.0
    %v2291 = vsel %vm1779, 1.0, 0.0
    %v2292 = vsel %vm1780, 1.0, 0.0
    %v2293 = vsel %vm1781, 1.0, 0.0
    %v2294 = vsel %vm1782, 1.0, 0.0
    %v2295 = vsel %vm1783, 1.0, 0.0
    %v2296 = vsel %vm1784, 1.0, 0.0
    %v2297 = vsel %vm1785, 1.0, 0.0
    %v2298 = vsel %vm1786, 1.0, 0.0
    %v2299 = vsel %vm1787, 1.0, 0.0
    %v2300 = vsel %vm1788, 1.0, 0.0
    %v2301 = vsel %vm1789, 1.0, 0.0
    %v2302 = vsel %vm1790, 1.0, 0.0
    %v2303 = vsel %vm1791, 1.0, 0.0
    %v2304 = vsel %vm1792, 1.0, 0.0
    %v2305 = vsel %vm1793, 1.0, 0.0
    %v2306 = vsel %vm1794, 1.0, 0.0
    %v2307 = vsel %vm1795, 1.0, 0.0
    %v2308 = vsel %vm1796, 1.0, 0.0
    %v2309 = vsel %vm1797, 1.0, 0.0
    %v2310 = vsel %vm1798, 1.0, 0.0
    %v2311 = vsel %vm1799, 1.0, 0.0
    %v2312 = vsel %vm1800, 1.0, 0.0
    %v2313 = vsel %vm1801, 1.0, 0.0
    %v2314 = vsel %vm1802, 1.0, 0.0
    %v2315 = vsel %vm1803, 1.0, 0.0
    %v2316 = vsel %vm1804, 1.0, 0.0
    %v2317 = vsel %vm1805, 1.0, 0.0
    %v2318 = vsel %vm1806, 1.0, 0.0
    %v2319 = vsel %vm1807, 1.0, 0.0
    %v2320 = vsel %vm1808, 1.0, 0.0
    %v2321 = vsel %vm1809, 1.0, 0.0
    %v2322 = vsel %vm1810, 1.0, 0.0
    %v2323 = vsel %vm1811, 1.0, 0.0
    %v2324 = vsel %vm1812, 1.0, 0.0
    %v2325 = vsel %vm1813, 1.0, 0.0
    %v2326 = vsel %vm1814, 1.0, 0.0
    %v2327 = vsel %vm1815, 1.0, 0.0
    %v2328 = vsel %vm1816, 1.0, 0.0
    %v2329 = vsel %vm1817, 1.0, 0.0
    %v2330 = vsel %vm1818, 1.0, 0.0
    %v2331 = vsel %vm1819, 1.0, 0.0
    %v2332 = vsel %vm1820, 1.0, 0.0
    %v2333 = vsel %vm1821, 1.0, 0.0
    %v2334 = vsel %vm1822, 1.0, 0.0
    %v2335 = vsel %vm1823, 1.0, 0.0
    %v2336 = vsel %vm1824, 1.0, 0.0
    %v2337 = vsel %vm1825, 1.0, 0.0
    %v2338 = vsel %vm1826, 1.0, 0.0
    %v2339 = vsel %vm1827, 1.0, 0.0
    %v2340 = vsel %vm1828, 1.0, 0.0
    %v2341 = vsel %vm1829, 1.0, 0.0
    %v2342 = vsel %vm1830, 1.0, 0.0
    %v2343 = vsel %vm1831, 1.0, 0.0
    %v2344 = vsel %vm1832, 1.0, 0.0
    %v2345 = vsel %vm1833, 1.0, 0.0
    %v2346 = vsel %vm1834, 1.0, 0.0
    %v2347 = vsel %vm1835, 1.0, 0.0
    %v2348 = vsel %vm1836, 1.0, 0.0
    %v2349 = vsel %vm1837, 1.0, 0.0
    %v2350 = vsel %vm1838, 1.0, 0.0
    %v2351 = vsel %vm1839, 1.0, 0.0
    %v2352 = vsel %vm1840, 1.0, 0.0
    %v2353 = vsel %vm1841, 1.0, 0.0
    %v2354 = vsel %vm1842, 1.0, 0.0
    %v2355 = vsel %vm1843, 1.0, 0.0
    %v2356 = vsel %vm1844, 1.0, 0.0
    %v2357 = vsel %vm1845, 1.0, 0.0
    %v2358 = vsel %vm1846, 1.0, 0.0
    %v2359 = vsel %vm1847, 1.0, 0.0
    %v2360 = vsel %vm1848, 1.0, 0.0
    %v2361 = vsel %vm1849, 1.0, 0.0
    %v2362 = vsel %vm1850, 1.0, 0.0
    %v2363 = vsel %vm1851, 1.0, 0.0
    %v2364 = vsel %vm1852, 1.0, 0.0
    %v2365 = vsel %vm1853, 1.0, 0.0
    %v2366 = vsel %vm1854, 1.0, 0.0
    %v2367 = vsel %vm1855, 1.0, 0.0
    %v2368 = vsel %vm1856, 1.0, 0.0
    %v2369 = vsel %vm1857, 1.0, 0.0
    %v2370 = vsel %vm1858, 1.0, 0.0
    %v2371 = vsel %vm1859, 1.0, 0.0
    %v2372 = vsel %vm1860, 1.0, 0.0
    %v2373 = vsel %vm1861, 1.0, 0.0
    %v2374 = vsel %vm1862, 1.0, 0.0
    %v2375 = vsel %vm1863, 1.0, 0.0
    %v2376 = vsel %vm1864, 1.0, 0.0
    %v2377 = vsel %vm1865, 1.0, 0.0
    %v2378 = vsel %vm1866, 1.0, 0.0
    %v2379 = vsel %vm1867, 1.0, 0.0
    %v2380 = vsel %vm1868, 1.0, 0.0
    %v2381 = vsel %vm1869, 1.0, 0.0
    %v2382 = vsel %vm1870, 1.0, 0.0
    %v2383 = vsel %vm1871, 1.0, 0.0
    %v2384 = vsel %vm1872, 1.0, 0.0
    %v2385 = vsel %vm1873, 1.0, 0.0
    %v2386 = vsel %vm1874, 1.0, 0.0
    %v2387 = vsel %vm1875, 1.0, 0.0
    %v2388 = vsel %vm1876, 1.0, 0.0
    %v2389 = vsel %vm1877, 1.0, 0.0
    %v2390 = vsel %vm1878, 1.0, 0.0
    %v2391 = vsel %vm1879, 1.0, 0.0
    %v2392 = vsel %vm1880, 1.0, 0.0
    %v2393 = vsel %vm1881, 1.0, 0.0
    %v2394 = vsel %vm1882, 1.0, 0.0
    %v2395 = vsel %vm1883, 1.0, 0.0
    %v2396 = vsel %vm1884, 1.0, 0.0
    %v2397 = vsel %vm1885, 1.0, 0.0
    %v2398 = vsel %vm1886, 1.0, 0.0
    %v2399 = vsel %vm1887, 1.0, 0.0
    %v2400 = vsel %vm1888, 1.0, 0.0
    %v2401 = vsel %vm1889, 1.0, 0.0
    %v2402 = vsel %vm1890, 1.0, 0.0
    %v2403 = vsel %vm1891, 1.0, 0.0
    %v2404 = vsel %vm1892, 1.0, 0.0
    %v2405 = vsel %vm1893, 1.0, 0.0
    %v2406 = vsel %vm1894, 1.0, 0.0
    %v2407 = vsel %vm1895, 1.0, 0.0
    %v2408 = vsel %vm1896, 1.0, 0.0
    %v2409 = vsel %vm1897, 1.0, 0.0
    %v2410 = vsel %vm1898, 1.0, 0.0
    %v2411 = vsel %vm1899, 1.0, 0.0
    %v2412 = vsel %vm1900, 1.0, 0.0
    %v2413 = vsel %vm1901, 1.0, 0.0
    %v2414 = vsel %vm1902, 1.0, 0.0
    %v2415 = vsel %vm1903, 1.0, 0.0
    %v2416 = vsel %vm1904, 1.0, 0.0
    %v2417 = vsel %vm1905, 1.0, 0.0
    %v2418 = vsel %vm1906, 1.0, 0.0
    %v2419 = vsel %vm1907, 1.0, 0.0
    %v2420 = vsel %vm1908, 1.0, 0.0
    %v2421 = vsel %vm1909, 1.0, 0.0
    %v2422 = vsel %vm1910, 1.0, 0.0
    %v2423 = vsel %vm1911, 1.0, 0.0
    %v2424 = vsel %vm1912, 1.0, 0.0
    %v2425 = vsel %vm1913, 1.0, 0.0
    %v2426 = vsel %vm1914, 1.0, 0.0
    %v2427 = vsel %vm1915, 1.0, 0.0
    %v2428 = vsel %vm1916, 1.0, 0.0
    %v2429 = vsel %vm1917, 1.0, 0.0
    %v2430 = vsel %vm1918, 1.0, 0.0
    %v2431 = vld [vmem:[#allocation6] sm:$0xff]
    %v2432 = vld [vmem:[#allocation6 + $0x8] sm:$0xff]
    %v2433 = vld [vmem:[#allocation6 + $0x10] sm:$0xff]
    %2434 = vmatpush.msra.mxu0 %v2399
    %2435 = vmatpush.msra.mxu0 %v2367
    %2436 = vmatpush.msra.mxu0 %v2335
    %2437 = vmatpush.msra.mxu0 %v2303
    %2438 = vmatpush.msra.mxu0 %v2271
    %2439 = vmatpush.msra.mxu0 %v2239
    %2440 = vmatpush.msra.mxu0 %v2207
    %2441 = vmatpush.msra.mxu0 %v2175
    %2442 = vmatpush.msra.mxu0 %v2143
    %2443 = vmatpush.msra.mxu0 %v2111
    %2444 = vmatpush.msra.mxu0 %v2079
    %2445 = vmatpush.msra.mxu0 %v2047
    %2446 = vmatpush.msra.mxu0 %v2015
    %2447 = vmatpush.msra.mxu0 %v1983
    %2448 = vmatpush.msra.mxu0 %v1951
    %2449 = vmatpush.msra.mxu0 %v1919
    %2450 = vmatmul.f32.gmra.mxu0 %v2431
    %v2451 = vpop.f32.mrf.mxu0
    %v2452 = vadd.f32 0.0, %v2451
    %2453 = vmatmul.f32.gmra.mxu0 %v2432
    %v2454 = vpop.f32.mrf.mxu0
    %v2455 = vadd.f32 0.0, %v2454
    %2456 = vmatmul.f32.gmra.mxu0 %v2433
    %v2457 = vpop.f32.mrf.mxu0
    %v2458 = vadd.f32 0.0, %v2457
    %2459 = vdwg.mxu0
    %2460 = vmatpush.msra.mxu0 %v2400
    %2461 = vmatpush.msra.mxu0 %v2368
    %2462 = vmatpush.msra.mxu0 %v2336
    %2463 = vmatpush.msra.mxu0 %v2304
    %2464 = vmatpush.msra.mxu0 %v2272
    %2465 = vmatpush.msra.mxu0 %v2240
    %2466 = vmatpush.msra.mxu0 %v2208
    %2467 = vmatpush.msra.mxu0 %v2176
    %2468 = vmatpush.msra.mxu0 %v2144
    %2469 = vmatpush.msra.mxu0 %v2112
    %2470 = vmatpush.msra.mxu0 %v2080
    %2471 = vmatpush.msra.mxu0 %v2048
    %2472 = vmatpush.msra.mxu0 %v2016
    %2473 = vmatpush.msra.mxu0 %v1984
    %2474 = vmatpush.msra.mxu0 %v1952
    %2475 = vmatpush.msra.mxu0 %v1920
    %2476 = vmatmul.f32.gmra.mxu0 %v2431
    %v2477 = vpop.f32.mrf.mxu0
    %v2478 = vadd.f32 0.0, %v2477
    %2479 = vmatmul.f32.gmra.mxu0 %v2432
    %v2480 = vpop.f32.mrf.mxu0
    %v2481 = vadd.f32 0.0, %v2480
    %2482 = vmatmul.f32.gmra.mxu0 %v2433
    %v2483 = vpop.f32.mrf.mxu0
    %v2484 = vadd.f32 0.0, %v2483
    %2485 = vdwg.mxu0
    %2486 = vmatpush.msra.mxu0 %v2401
    %2487 = vmatpush.msra.mxu0 %v2369
    %2488 = vmatpush.msra.mxu0 %v2337
    %2489 = vmatpush.msra.mxu0 %v2305
    %2490 = vmatpush.msra.mxu0 %v2273
    %2491 = vmatpush.msra.mxu0 %v2241
    %2492 = vmatpush.msra.mxu0 %v2209
    %2493 = vmatpush.msra.mxu0 %v2177
    %2494 = vmatpush.msra.mxu0 %v2145
    %2495 = vmatpush.msra.mxu0 %v2113
    %2496 = vmatpush.msra.mxu0 %v2081
    %2497 = vmatpush.msra.mxu0 %v2049
    %2498 = vmatpush.msra.mxu0 %v2017
    %2499 = vmatpush.msra.mxu0 %v1985
    %2500 = vmatpush.msra.mxu0 %v1953
    %2501 = vmatpush.msra.mxu0 %v1921
    %2502 = vmatmul.f32.gmra.mxu0 %v2431
    %v2503 = vpop.f32.mrf.mxu0
    %v2504 = vadd.f32 0.0, %v2503
    %2505 = vmatmul.f32.gmra.mxu0 %v2432
    %v2506 = vpop.f32.mrf.mxu0
    %v2507 = vadd.f32 0.0, %v2506
    %2508 = vmatmul.f32.gmra.mxu0 %v2433
    %v2509 = vpop.f32.mrf.mxu0
    %v2510 = vadd.f32 0.0, %v2509
    %2511 = vdwg.mxu0
    %2512 = vmatpush.msra.mxu0 %v2402
    %2513 = vmatpush.msra.mxu0 %v2370
    %2514 = vmatpush.msra.mxu0 %v2338
    %2515 = vmatpush.msra.mxu0 %v2306
    %2516 = vmatpush.msra.mxu0 %v2274
    %2517 = vmatpush.msra.mxu0 %v2242
    %2518 = vmatpush.msra.mxu0 %v2210
    %2519 = vmatpush.msra.mxu0 %v2178
    %2520 = vmatpush.msra.mxu0 %v2146
    %2521 = vmatpush.msra.mxu0 %v2114
    %2522 = vmatpush.msra.mxu0 %v2082
    %2523 = vmatpush.msra.mxu0 %v2050
    %2524 = vmatpush.msra.mxu0 %v2018
    %2525 = vmatpush.msra.mxu0 %v1986
    %2526 = vmatpush.msra.mxu0 %v1954
    %2527 = vmatpush.msra.mxu0 %v1922
    %2528 = vmatmul.f32.gmra.mxu0 %v2431
    %v2529 = vpop.f32.mrf.mxu0
    %v2530 = vadd.f32 0.0, %v2529
    %2531 = vmatmul.f32.gmra.mxu0 %v2432
    %v2532 = vpop.f32.mrf.mxu0
    %v2533 = vadd.f32 0.0, %v2532
    %2534 = vmatmul.f32.gmra.mxu0 %v2433
    %v2535 = vpop.f32.mrf.mxu0
    %v2536 = vadd.f32 0.0, %v2535
    %2537 = vdwg.mxu0
    %2538 = vmatpush.msra.mxu0 %v2403
    %2539 = vmatpush.msra.mxu0 %v2371
    %2540 = vmatpush.msra.mxu0 %v2339
    %2541 = vmatpush.msra.mxu0 %v2307
    %2542 = vmatpush.msra.mxu0 %v2275
    %2543 = vmatpush.msra.mxu0 %v2243
    %2544 = vmatpush.msra.mxu0 %v2211
    %2545 = vmatpush.msra.mxu0 %v2179
    %2546 = vmatpush.msra.mxu0 %v2147
    %2547 = vmatpush.msra.mxu0 %v2115
    %2548 = vmatpush.msra.mxu0 %v2083
    %2549 = vmatpush.msra.mxu0 %v2051
    %2550 = vmatpush.msra.mxu0 %v2019
    %2551 = vmatpush.msra.mxu0 %v1987
    %2552 = vmatpush.msra.mxu0 %v1955
    %2553 = vmatpush.msra.mxu0 %v1923
    %2554 = vmatmul.f32.gmra.mxu0 %v2431
    %v2555 = vpop.f32.mrf.mxu0
    %v2556 = vadd.f32 0.0, %v2555
    %2557 = vmatmul.f32.gmra.mxu0 %v2432
    %v2558 = vpop.f32.mrf.mxu0
    %v2559 = vadd.f32 0.0, %v2558
    %2560 = vmatmul.f32.gmra.mxu0 %v2433
    %v2561 = vpop.f32.mrf.mxu0
    %v2562 = vadd.f32 0.0, %v2561
    %2563 = vdwg.mxu0
    %2564 = vmatpush.msra.mxu0 %v2404
    %2565 = vmatpush.msra.mxu0 %v2372
    %2566 = vmatpush.msra.mxu0 %v2340
    %2567 = vmatpush.msra.mxu0 %v2308
    %2568 = vmatpush.msra.mxu0 %v2276
    %2569 = vmatpush.msra.mxu0 %v2244
    %2570 = vmatpush.msra.mxu0 %v2212
    %2571 = vmatpush.msra.mxu0 %v2180
    %2572 = vmatpush.msra.mxu0 %v2148
    %2573 = vmatpush.msra.mxu0 %v2116
    %2574 = vmatpush.msra.mxu0 %v2084
    %2575 = vmatpush.msra.mxu0 %v2052
    %2576 = vmatpush.msra.mxu0 %v2020
    %2577 = vmatpush.msra.mxu0 %v1988
    %2578 = vmatpush.msra.mxu0 %v1956
    %2579 = vmatpush.msra.mxu0 %v1924
    %2580 = vmatmul.f32.gmra.mxu0 %v2431
    %v2581 = vpop.f32.mrf.mxu0
    %v2582 = vadd.f32 0.0, %v2581
    %2583 = vmatmul.f32.gmra.mxu0 %v2432
    %v2584 = vpop.f32.mrf.mxu0
    %v2585 = vadd.f32 0.0, %v2584
    %2586 = vmatmul.f32.gmra.mxu0 %v2433
    %v2587 = vpop.f32.mrf.mxu0
    %v2588 = vadd.f32 0.0, %v2587
    %2589 = vdwg.mxu0
    %2590 = vmatpush.msra.mxu0 %v2405
    %2591 = vmatpush.msra.mxu0 %v2373
    %2592 = vmatpush.msra.mxu0 %v2341
    %2593 = vmatpush.msra.mxu0 %v2309
    %2594 = vmatpush.msra.mxu0 %v2277
    %2595 = vmatpush.msra.mxu0 %v2245
    %2596 = vmatpush.msra.mxu0 %v2213
    %2597 = vmatpush.msra.mxu0 %v2181
    %2598 = vmatpush.msra.mxu0 %v2149
    %2599 = vmatpush.msra.mxu0 %v2117
    %2600 = vmatpush.msra.mxu0 %v2085
    %2601 = vmatpush.msra.mxu0 %v2053
    %2602 = vmatpush.msra.mxu0 %v2021
    %2603 = vmatpush.msra.mxu0 %v1989
    %2604 = vmatpush.msra.mxu0 %v1957
    %2605 = vmatpush.msra.mxu0 %v1925
    %2606 = vmatmul.f32.gmra.mxu0 %v2431
    %v2607 = vpop.f32.mrf.mxu0
    %v2608 = vadd.f32 0.0, %v2607
    %2609 = vmatmul.f32.gmra.mxu0 %v2432
    %v2610 = vpop.f32.mrf.mxu0
    %v2611 = vadd.f32 0.0, %v2610
    %2612 = vmatmul.f32.gmra.mxu0 %v2433
    %v2613 = vpop.f32.mrf.mxu0
    %v2614 = vadd.f32 0.0, %v2613
    %2615 = vdwg.mxu0
    %2616 = vmatpush.msra.mxu0 %v2406
    %2617 = vmatpush.msra.mxu0 %v2374
    %2618 = vmatpush.msra.mxu0 %v2342
    %2619 = vmatpush.msra.mxu0 %v2310
    %2620 = vmatpush.msra.mxu0 %v2278
    %2621 = vmatpush.msra.mxu0 %v2246
    %2622 = vmatpush.msra.mxu0 %v2214
    %2623 = vmatpush.msra.mxu0 %v2182
    %2624 = vmatpush.msra.mxu0 %v2150
    %2625 = vmatpush.msra.mxu0 %v2118
    %2626 = vmatpush.msra.mxu0 %v2086
    %2627 = vmatpush.msra.mxu0 %v2054
    %2628 = vmatpush.msra.mxu0 %v2022
    %2629 = vmatpush.msra.mxu0 %v1990
    %2630 = vmatpush.msra.mxu0 %v1958
    %2631 = vmatpush.msra.mxu0 %v1926
    %2632 = vmatmul.f32.gmra.mxu0 %v2431
    %v2633 = vpop.f32.mrf.mxu0
    %v2634 = vadd.f32 0.0, %v2633
    %2635 = vmatmul.f32.gmra.mxu0 %v2432
    %v2636 = vpop.f32.mrf.mxu0
    %v2637 = vadd.f32 0.0, %v2636
    %2638 = vmatmul.f32.gmra.mxu0 %v2433
    %v2639 = vpop.f32.mrf.mxu0
    %v2640 = vadd.f32 0.0, %v2639
    %2641 = vdwg.mxu0
    %2642 = vmatpush.msra.mxu0 %v2407
    %2643 = vmatpush.msra.mxu0 %v2375
    %2644 = vmatpush.msra.mxu0 %v2343
    %2645 = vmatpush.msra.mxu0 %v2311
    %2646 = vmatpush.msra.mxu0 %v2279
    %2647 = vmatpush.msra.mxu0 %v2247
    %2648 = vmatpush.msra.mxu0 %v2215
    %2649 = vmatpush.msra.mxu0 %v2183
    %2650 = vmatpush.msra.mxu0 %v2151
    %2651 = vmatpush.msra.mxu0 %v2119
    %2652 = vmatpush.msra.mxu0 %v2087
    %2653 = vmatpush.msra.mxu0 %v2055
    %2654 = vmatpush.msra.mxu0 %v2023
    %2655 = vmatpush.msra.mxu0 %v1991
    %2656 = vmatpush.msra.mxu0 %v1959
    %2657 = vmatpush.msra.mxu0 %v1927
    %2658 = vmatmul.f32.gmra.mxu0 %v2431
    %v2659 = vpop.f32.mrf.mxu0
    %v2660 = vadd.f32 0.0, %v2659
    %2661 = vmatmul.f32.gmra.mxu0 %v2432
    %v2662 = vpop.f32.mrf.mxu0
    %v2663 = vadd.f32 0.0, %v2662
    %2664 = vmatmul.f32.gmra.mxu0 %v2433
    %v2665 = vpop.f32.mrf.mxu0
    %v2666 = vadd.f32 0.0, %v2665
    %2667 = vdwg.mxu0
    %2668 = vmatpush.msra.mxu0 %v2408
    %2669 = vmatpush.msra.mxu0 %v2376
    %2670 = vmatpush.msra.mxu0 %v2344
    %2671 = vmatpush.msra.mxu0 %v2312
    %2672 = vmatpush.msra.mxu0 %v2280
    %2673 = vmatpush.msra.mxu0 %v2248
    %2674 = vmatpush.msra.mxu0 %v2216
    %2675 = vmatpush.msra.mxu0 %v2184
    %2676 = vmatpush.msra.mxu0 %v2152
    %2677 = vmatpush.msra.mxu0 %v2120
    %2678 = vmatpush.msra.mxu0 %v2088
    %2679 = vmatpush.msra.mxu0 %v2056
    %2680 = vmatpush.msra.mxu0 %v2024
    %2681 = vmatpush.msra.mxu0 %v1992
    %2682 = vmatpush.msra.mxu0 %v1960
    %2683 = vmatpush.msra.mxu0 %v1928
    %2684 = vmatmul.f32.gmra.mxu0 %v2431
    %v2685 = vpop.f32.mrf.mxu0
    %v2686 = vadd.f32 0.0, %v2685
    %2687 = vmatmul.f32.gmra.mxu0 %v2432
    %v2688 = vpop.f32.mrf.mxu0
    %v2689 = vadd.f32 0.0, %v2688
    %2690 = vmatmul.f32.gmra.mxu0 %v2433
    %v2691 = vpop.f32.mrf.mxu0
    %v2692 = vadd.f32 0.0, %v2691
    %2693 = vdwg.mxu0
    %2694 = vmatpush.msra.mxu0 %v2409
    %2695 = vmatpush.msra.mxu0 %v2377
    %2696 = vmatpush.msra.mxu0 %v2345
    %2697 = vmatpush.msra.mxu0 %v2313
    %2698 = vmatpush.msra.mxu0 %v2281
    %2699 = vmatpush.msra.mxu0 %v2249
    %2700 = vmatpush.msra.mxu0 %v2217
    %2701 = vmatpush.msra.mxu0 %v2185
    %2702 = vmatpush.msra.mxu0 %v2153
    %2703 = vmatpush.msra.mxu0 %v2121
    %2704 = vmatpush.msra.mxu0 %v2089
    %2705 = vmatpush.msra.mxu0 %v2057
    %2706 = vmatpush.msra.mxu0 %v2025
    %2707 = vmatpush.msra.mxu0 %v1993
    %2708 = vmatpush.msra.mxu0 %v1961
    %2709 = vmatpush.msra.mxu0 %v1929
    %2710 = vmatmul.f32.gmra.mxu0 %v2431
    %v2711 = vpop.f32.mrf.mxu0
    %v2712 = vadd.f32 0.0, %v2711
    %2713 = vmatmul.f32.gmra.mxu0 %v2432
    %v2714 = vpop.f32.mrf.mxu0
    %v2715 = vadd.f32 0.0, %v2714
    %2716 = vmatmul.f32.gmra.mxu0 %v2433
    %v2717 = vpop.f32.mrf.mxu0
    %v2718 = vadd.f32 0.0, %v2717
    %2719 = vdwg.mxu0
    %2720 = vmatpush.msra.mxu0 %v2410
    %2721 = vmatpush.msra.mxu0 %v2378
    %2722 = vmatpush.msra.mxu0 %v2346
    %2723 = vmatpush.msra.mxu0 %v2314
    %2724 = vmatpush.msra.mxu0 %v2282
    %2725 = vmatpush.msra.mxu0 %v2250
    %2726 = vmatpush.msra.mxu0 %v2218
    %2727 = vmatpush.msra.mxu0 %v2186
    %2728 = vmatpush.msra.mxu0 %v2154
    %2729 = vmatpush.msra.mxu0 %v2122
    %2730 = vmatpush.msra.mxu0 %v2090
    %2731 = vmatpush.msra.mxu0 %v2058
    %2732 = vmatpush.msra.mxu0 %v2026
    %2733 = vmatpush.msra.mxu0 %v1994
    %2734 = vmatpush.msra.mxu0 %v1962
    %2735 = vmatpush.msra.mxu0 %v1930
    %2736 = vmatmul.f32.gmra.mxu0 %v2431
    %v2737 = vpop.f32.mrf.mxu0
    %v2738 = vadd.f32 0.0, %v2737
    %2739 = vmatmul.f32.gmra.mxu0 %v2432
    %v2740 = vpop.f32.mrf.mxu0
    %v2741 = vadd.f32 0.0, %v2740
    %2742 = vmatmul.f32.gmra.mxu0 %v2433
    %v2743 = vpop.f32.mrf.mxu0
    %v2744 = vadd.f32 0.0, %v2743
    %2745 = vdwg.mxu0
    %2746 = vmatpush.msra.mxu0 %v2411
    %2747 = vmatpush.msra.mxu0 %v2379
    %2748 = vmatpush.msra.mxu0 %v2347
    %2749 = vmatpush.msra.mxu0 %v2315
    %2750 = vmatpush.msra.mxu0 %v2283
    %2751 = vmatpush.msra.mxu0 %v2251
    %2752 = vmatpush.msra.mxu0 %v2219
    %2753 = vmatpush.msra.mxu0 %v2187
    %2754 = vmatpush.msra.mxu0 %v2155
    %2755 = vmatpush.msra.mxu0 %v2123
    %2756 = vmatpush.msra.mxu0 %v2091
    %2757 = vmatpush.msra.mxu0 %v2059
    %2758 = vmatpush.msra.mxu0 %v2027
    %2759 = vmatpush.msra.mxu0 %v1995
    %2760 = vmatpush.msra.mxu0 %v1963
    %2761 = vmatpush.msra.mxu0 %v1931
    %2762 = vmatmul.f32.gmra.mxu0 %v2431
    %v2763 = vpop.f32.mrf.mxu0
    %v2764 = vadd.f32 0.0, %v2763
    %2765 = vmatmul.f32.gmra.mxu0 %v2432
    %v2766 = vpop.f32.mrf.mxu0
    %v2767 = vadd.f32 0.0, %v2766
    %2768 = vmatmul.f32.gmra.mxu0 %v2433
    %v2769 = vpop.f32.mrf.mxu0
    %v2770 = vadd.f32 0.0, %v2769
    %2771 = vdwg.mxu0
    %2772 = vmatpush.msra.mxu0 %v2412
    %2773 = vmatpush.msra.mxu0 %v2380
    %2774 = vmatpush.msra.mxu0 %v2348
    %2775 = vmatpush.msra.mxu0 %v2316
    %2776 = vmatpush.msra.mxu0 %v2284
    %2777 = vmatpush.msra.mxu0 %v2252
    %2778 = vmatpush.msra.mxu0 %v2220
    %2779 = vmatpush.msra.mxu0 %v2188
    %2780 = vmatpush.msra.mxu0 %v2156
    %2781 = vmatpush.msra.mxu0 %v2124
    %2782 = vmatpush.msra.mxu0 %v2092
    %2783 = vmatpush.msra.mxu0 %v2060
    %2784 = vmatpush.msra.mxu0 %v2028
    %2785 = vmatpush.msra.mxu0 %v1996
    %2786 = vmatpush.msra.mxu0 %v1964
    %2787 = vmatpush.msra.mxu0 %v1932
    %2788 = vmatmul.f32.gmra.mxu0 %v2431
    %v2789 = vpop.f32.mrf.mxu0
    %v2790 = vadd.f32 0.0, %v2789
    %2791 = vmatmul.f32.gmra.mxu0 %v2432
    %v2792 = vpop.f32.mrf.mxu0
    %v2793 = vadd.f32 0.0, %v2792
    %2794 = vmatmul.f32.gmra.mxu0 %v2433
    %v2795 = vpop.f32.mrf.mxu0
    %v2796 = vadd.f32 0.0, %v2795
    %2797 = vdwg.mxu0
    %2798 = vmatpush.msra.mxu0 %v2413
    %2799 = vmatpush.msra.mxu0 %v2381
    %2800 = vmatpush.msra.mxu0 %v2349
    %2801 = vmatpush.msra.mxu0 %v2317
    %2802 = vmatpush.msra.mxu0 %v2285
    %2803 = vmatpush.msra.mxu0 %v2253
    %2804 = vmatpush.msra.mxu0 %v2221
    %2805 = vmatpush.msra.mxu0 %v2189
    %2806 = vmatpush.msra.mxu0 %v2157
    %2807 = vmatpush.msra.mxu0 %v2125
    %2808 = vmatpush.msra.mxu0 %v2093
    %2809 = vmatpush.msra.mxu0 %v2061
    %2810 = vmatpush.msra.mxu0 %v2029
    %2811 = vmatpush.msra.mxu0 %v1997
    %2812 = vmatpush.msra.mxu0 %v1965
    %2813 = vmatpush.msra.mxu0 %v1933
    %2814 = vmatmul.f32.gmra.mxu0 %v2431
    %v2815 = vpop.f32.mrf.mxu0
    %v2816 = vadd.f32 0.0, %v2815
    %2817 = vmatmul.f32.gmra.mxu0 %v2432
    %v2818 = vpop.f32.mrf.mxu0
    %v2819 = vadd.f32 0.0, %v2818
    %2820 = vmatmul.f32.gmra.mxu0 %v2433
    %v2821 = vpop.f32.mrf.mxu0
    %v2822 = vadd.f32 0.0, %v2821
    %2823 = vdwg.mxu0
    %2824 = vmatpush.msra.mxu0 %v2414
    %2825 = vmatpush.msra.mxu0 %v2382
    %2826 = vmatpush.msra.mxu0 %v2350
    %2827 = vmatpush.msra.mxu0 %v2318
    %2828 = vmatpush.msra.mxu0 %v2286
    %2829 = vmatpush.msra.mxu0 %v2254
    %2830 = vmatpush.msra.mxu0 %v2222
    %2831 = vmatpush.msra.mxu0 %v2190
    %2832 = vmatpush.msra.mxu0 %v2158
    %2833 = vmatpush.msra.mxu0 %v2126
    %2834 = vmatpush.msra.mxu0 %v2094
    %2835 = vmatpush.msra.mxu0 %v2062
    %2836 = vmatpush.msra.mxu0 %v2030
    %2837 = vmatpush.msra.mxu0 %v1998
    %2838 = vmatpush.msra.mxu0 %v1966
    %2839 = vmatpush.msra.mxu0 %v1934
    %2840 = vmatmul.f32.gmra.mxu0 %v2431
    %v2841 = vpop.f32.mrf.mxu0
    %v2842 = vadd.f32 0.0, %v2841
    %2843 = vmatmul.f32.gmra.mxu0 %v2432
    %v2844 = vpop.f32.mrf.mxu0
    %v2845 = vadd.f32 0.0, %v2844
    %2846 = vmatmul.f32.gmra.mxu0 %v2433
    %v2847 = vpop.f32.mrf.mxu0
    %v2848 = vadd.f32 0.0, %v2847
    %2849 = vdwg.mxu0
    %2850 = vmatpush.msra.mxu0 %v2415
    %2851 = vmatpush.msra.mxu0 %v2383
    %2852 = vmatpush.msra.mxu0 %v2351
    %2853 = vmatpush.msra.mxu0 %v2319
    %2854 = vmatpush.msra.mxu0 %v2287
    %2855 = vmatpush.msra.mxu0 %v2255
    %2856 = vmatpush.msra.mxu0 %v2223
    %2857 = vmatpush.msra.mxu0 %v2191
    %2858 = vmatpush.msra.mxu0 %v2159
    %2859 = vmatpush.msra.mxu0 %v2127
    %2860 = vmatpush.msra.mxu0 %v2095
    %2861 = vmatpush.msra.mxu0 %v2063
    %2862 = vmatpush.msra.mxu0 %v2031
    %2863 = vmatpush.msra.mxu0 %v1999
    %2864 = vmatpush.msra.mxu0 %v1967
    %2865 = vmatpush.msra.mxu0 %v1935
    %2866 = vmatmul.f32.gmra.mxu0 %v2431
    %v2867 = vpop.f32.mrf.mxu0
    %v2868 = vadd.f32 0.0, %v2867
    %2869 = vmatmul.f32.gmra.mxu0 %v2432
    %v2870 = vpop.f32.mrf.mxu0
    %v2871 = vadd.f32 0.0, %v2870
    %2872 = vmatmul.f32.gmra.mxu0 %v2433
    %v2873 = vpop.f32.mrf.mxu0
    %v2874 = vadd.f32 0.0, %v2873
    %2875 = vdwg.mxu0
    %2876 = vmatpush.msra.mxu0 %v2416
    %2877 = vmatpush.msra.mxu0 %v2384
    %2878 = vmatpush.msra.mxu0 %v2352
    %2879 = vmatpush.msra.mxu0 %v2320
    %2880 = vmatpush.msra.mxu0 %v2288
    %2881 = vmatpush.msra.mxu0 %v2256
    %2882 = vmatpush.msra.mxu0 %v2224
    %2883 = vmatpush.msra.mxu0 %v2192
    %2884 = vmatpush.msra.mxu0 %v2160
    %2885 = vmatpush.msra.mxu0 %v2128
    %2886 = vmatpush.msra.mxu0 %v2096
    %2887 = vmatpush.msra.mxu0 %v2064
    %2888 = vmatpush.msra.mxu0 %v2032
    %2889 = vmatpush.msra.mxu0 %v2000
    %2890 = vmatpush.msra.mxu0 %v1968
    %2891 = vmatpush.msra.mxu0 %v1936
    %2892 = vmatmul.f32.gmra.mxu0 %v2431
    %v2893 = vpop.f32.mrf.mxu0
    %v2894 = vadd.f32 0.0, %v2893
    %2895 = vmatmul.f32.gmra.mxu0 %v2432
    %v2896 = vpop.f32.mrf.mxu0
    %v2897 = vadd.f32 0.0, %v2896
    %2898 = vmatmul.f32.gmra.mxu0 %v2433
    %v2899 = vpop.f32.mrf.mxu0
    %v2900 = vadd.f32 0.0, %v2899
    %2901 = vdwg.mxu0
    %2902 = vmatpush.msra.mxu0 %v2417
    %2903 = vmatpush.msra.mxu0 %v2385
    %2904 = vmatpush.msra.mxu0 %v2353
    %2905 = vmatpush.msra.mxu0 %v2321
    %2906 = vmatpush.msra.mxu0 %v2289
    %2907 = vmatpush.msra.mxu0 %v2257
    %2908 = vmatpush.msra.mxu0 %v2225
    %2909 = vmatpush.msra.mxu0 %v2193
    %2910 = vmatpush.msra.mxu0 %v2161
    %2911 = vmatpush.msra.mxu0 %v2129
    %2912 = vmatpush.msra.mxu0 %v2097
    %2913 = vmatpush.msra.mxu0 %v2065
    %2914 = vmatpush.msra.mxu0 %v2033
    %2915 = vmatpush.msra.mxu0 %v2001
    %2916 = vmatpush.msra.mxu0 %v1969
    %2917 = vmatpush.msra.mxu0 %v1937
    %2918 = vmatmul.f32.gmra.mxu0 %v2431
    %v2919 = vpop.f32.mrf.mxu0
    %v2920 = vadd.f32 0.0, %v2919
    %2921 = vmatmul.f32.gmra.mxu0 %v2432
    %v2922 = vpop.f32.mrf.mxu0
    %v2923 = vadd.f32 0.0, %v2922
    %2924 = vmatmul.f32.gmra.mxu0 %v2433
    %v2925 = vpop.f32.mrf.mxu0
    %v2926 = vadd.f32 0.0, %v2925
    %2927 = vdwg.mxu0
    %2928 = vmatpush.msra.mxu0 %v2418
    %2929 = vmatpush.msra.mxu0 %v2386
    %2930 = vmatpush.msra.mxu0 %v2354
    %2931 = vmatpush.msra.mxu0 %v2322
    %2932 = vmatpush.msra.mxu0 %v2290
    %2933 = vmatpush.msra.mxu0 %v2258
    %2934 = vmatpush.msra.mxu0 %v2226
    %2935 = vmatpush.msra.mxu0 %v2194
    %2936 = vmatpush.msra.mxu0 %v2162
    %2937 = vmatpush.msra.mxu0 %v2130
    %2938 = vmatpush.msra.mxu0 %v2098
    %2939 = vmatpush.msra.mxu0 %v2066
    %2940 = vmatpush.msra.mxu0 %v2034
    %2941 = vmatpush.msra.mxu0 %v2002
    %2942 = vmatpush.msra.mxu0 %v1970
    %2943 = vmatpush.msra.mxu0 %v1938
    %2944 = vmatmul.f32.gmra.mxu0 %v2431
    %v2945 = vpop.f32.mrf.mxu0
    %v2946 = vadd.f32 0.0, %v2945
    %2947 = vmatmul.f32.gmra.mxu0 %v2432
    %v2948 = vpop.f32.mrf.mxu0
    %v2949 = vadd.f32 0.0, %v2948
    %2950 = vmatmul.f32.gmra.mxu0 %v2433
    %v2951 = vpop.f32.mrf.mxu0
    %v2952 = vadd.f32 0.0, %v2951
    %2953 = vdwg.mxu0
    %2954 = vmatpush.msra.mxu0 %v2419
    %2955 = vmatpush.msra.mxu0 %v2387
    %2956 = vmatpush.msra.mxu0 %v2355
    %2957 = vmatpush.msra.mxu0 %v2323
    %2958 = vmatpush.msra.mxu0 %v2291
    %2959 = vmatpush.msra.mxu0 %v2259
    %2960 = vmatpush.msra.mxu0 %v2227
    %2961 = vmatpush.msra.mxu0 %v2195
    %2962 = vmatpush.msra.mxu0 %v2163
    %2963 = vmatpush.msra.mxu0 %v2131
    %2964 = vmatpush.msra.mxu0 %v2099
    %2965 = vmatpush.msra.mxu0 %v2067
    %2966 = vmatpush.msra.mxu0 %v2035
    %2967 = vmatpush.msra.mxu0 %v2003
    %2968 = vmatpush.msra.mxu0 %v1971
    %2969 = vmatpush.msra.mxu0 %v1939
    %2970 = vmatmul.f32.gmra.mxu0 %v2431
    %v2971 = vpop.f32.mrf.mxu0
    %v2972 = vadd.f32 0.0, %v2971
    %2973 = vmatmul.f32.gmra.mxu0 %v2432
    %v2974 = vpop.f32.mrf.mxu0
    %v2975 = vadd.f32 0.0, %v2974
    %2976 = vmatmul.f32.gmra.mxu0 %v2433
    %v2977 = vpop.f32.mrf.mxu0
    %v2978 = vadd.f32 0.0, %v2977
    %2979 = vdwg.mxu0
    %2980 = vmatpush.msra.mxu0 %v2420
    %2981 = vmatpush.msra.mxu0 %v2388
    %2982 = vmatpush.msra.mxu0 %v2356
    %2983 = vmatpush.msra.mxu0 %v2324
    %2984 = vmatpush.msra.mxu0 %v2292
    %2985 = vmatpush.msra.mxu0 %v2260
    %2986 = vmatpush.msra.mxu0 %v2228
    %2987 = vmatpush.msra.mxu0 %v2196
    %2988 = vmatpush.msra.mxu0 %v2164
    %2989 = vmatpush.msra.mxu0 %v2132
    %2990 = vmatpush.msra.mxu0 %v2100
    %2991 = vmatpush.msra.mxu0 %v2068
    %2992 = vmatpush.msra.mxu0 %v2036
    %2993 = vmatpush.msra.mxu0 %v2004
    %2994 = vmatpush.msra.mxu0 %v1972
    %2995 = vmatpush.msra.mxu0 %v1940
    %2996 = vmatmul.f32.gmra.mxu0 %v2431
    %v2997 = vpop.f32.mrf.mxu0
    %v2998 = vadd.f32 0.0, %v2997
    %2999 = vmatmul.f32.gmra.mxu0 %v2432
    %v3000 = vpop.f32.mrf.mxu0
    %v3001 = vadd.f32 0.0, %v3000
    %3002 = vmatmul.f32.gmra.mxu0 %v2433
    %v3003 = vpop.f32.mrf.mxu0
    %v3004 = vadd.f32 0.0, %v3003
    %3005 = vdwg.mxu0
    %3006 = vmatpush.msra.mxu0 %v2421
    %3007 = vmatpush.msra.mxu0 %v2389
    %3008 = vmatpush.msra.mxu0 %v2357
    %3009 = vmatpush.msra.mxu0 %v2325
    %3010 = vmatpush.msra.mxu0 %v2293
    %3011 = vmatpush.msra.mxu0 %v2261
    %3012 = vmatpush.msra.mxu0 %v2229
    %3013 = vmatpush.msra.mxu0 %v2197
    %3014 = vmatpush.msra.mxu0 %v2165
    %3015 = vmatpush.msra.mxu0 %v2133
    %3016 = vmatpush.msra.mxu0 %v2101
    %3017 = vmatpush.msra.mxu0 %v2069
    %3018 = vmatpush.msra.mxu0 %v2037
    %3019 = vmatpush.msra.mxu0 %v2005
    %3020 = vmatpush.msra.mxu0 %v1973
    %3021 = vmatpush.msra.mxu0 %v1941
    %3022 = vmatmul.f32.gmra.mxu0 %v2431
    %v3023 = vpop.f32.mrf.mxu0
    %v3024 = vadd.f32 0.0, %v3023
    %3025 = vmatmul.f32.gmra.mxu0 %v2432
    %v3026 = vpop.f32.mrf.mxu0
    %v3027 = vadd.f32 0.0, %v3026
    %3028 = vmatmul.f32.gmra.mxu0 %v2433
    %v3029 = vpop.f32.mrf.mxu0
    %v3030 = vadd.f32 0.0, %v3029
    %3031 = vdwg.mxu0
    %3032 = vmatpush.msra.mxu0 %v2422
    %3033 = vmatpush.msra.mxu0 %v2390
    %3034 = vmatpush.msra.mxu0 %v2358
    %3035 = vmatpush.msra.mxu0 %v2326
    %3036 = vmatpush.msra.mxu0 %v2294
    %3037 = vmatpush.msra.mxu0 %v2262
    %3038 = vmatpush.msra.mxu0 %v2230
    %3039 = vmatpush.msra.mxu0 %v2198
    %3040 = vmatpush.msra.mxu0 %v2166
    %3041 = vmatpush.msra.mxu0 %v2134
    %3042 = vmatpush.msra.mxu0 %v2102
    %3043 = vmatpush.msra.mxu0 %v2070
    %3044 = vmatpush.msra.mxu0 %v2038
    %3045 = vmatpush.msra.mxu0 %v2006
    %3046 = vmatpush.msra.mxu0 %v1974
    %3047 = vmatpush.msra.mxu0 %v1942
    %3048 = vmatmul.f32.gmra.mxu0 %v2431
    %v3049 = vpop.f32.mrf.mxu0
    %v3050 = vadd.f32 0.0, %v3049
    %3051 = vmatmul.f32.gmra.mxu0 %v2432
    %v3052 = vpop.f32.mrf.mxu0
    %v3053 = vadd.f32 0.0, %v3052
    %3054 = vmatmul.f32.gmra.mxu0 %v2433
    %v3055 = vpop.f32.mrf.mxu0
    %v3056 = vadd.f32 0.0, %v3055
    %3057 = vdwg.mxu0
    %3058 = vmatpush.msra.mxu0 %v2423
    %3059 = vmatpush.msra.mxu0 %v2391
    %3060 = vmatpush.msra.mxu0 %v2359
    %3061 = vmatpush.msra.mxu0 %v2327
    %3062 = vmatpush.msra.mxu0 %v2295
    %3063 = vmatpush.msra.mxu0 %v2263
    %3064 = vmatpush.msra.mxu0 %v2231
    %3065 = vmatpush.msra.mxu0 %v2199
    %3066 = vmatpush.msra.mxu0 %v2167
    %3067 = vmatpush.msra.mxu0 %v2135
    %3068 = vmatpush.msra.mxu0 %v2103
    %3069 = vmatpush.msra.mxu0 %v2071
    %3070 = vmatpush.msra.mxu0 %v2039
    %3071 = vmatpush.msra.mxu0 %v2007
    %3072 = vmatpush.msra.mxu0 %v1975
    %3073 = vmatpush.msra.mxu0 %v1943
    %3074 = vmatmul.f32.gmra.mxu0 %v2431
    %v3075 = vpop.f32.mrf.mxu0
    %v3076 = vadd.f32 0.0, %v3075
    %3077 = vmatmul.f32.gmra.mxu0 %v2432
    %v3078 = vpop.f32.mrf.mxu0
    %v3079 = vadd.f32 0.0, %v3078
    %3080 = vmatmul.f32.gmra.mxu0 %v2433
    %v3081 = vpop.f32.mrf.mxu0
    %v3082 = vadd.f32 0.0, %v3081
    %3083 = vdwg.mxu0
    %3084 = vmatpush.msra.mxu0 %v2424
    %3085 = vmatpush.msra.mxu0 %v2392
    %3086 = vmatpush.msra.mxu0 %v2360
    %3087 = vmatpush.msra.mxu0 %v2328
    %3088 = vmatpush.msra.mxu0 %v2296
    %3089 = vmatpush.msra.mxu0 %v2264
    %3090 = vmatpush.msra.mxu0 %v2232
    %3091 = vmatpush.msra.mxu0 %v2200
    %3092 = vmatpush.msra.mxu0 %v2168
    %3093 = vmatpush.msra.mxu0 %v2136
    %3094 = vmatpush.msra.mxu0 %v2104
    %3095 = vmatpush.msra.mxu0 %v2072
    %3096 = vmatpush.msra.mxu0 %v2040
    %3097 = vmatpush.msra.mxu0 %v2008
    %3098 = vmatpush.msra.mxu0 %v1976
    %3099 = vmatpush.msra.mxu0 %v1944
    %3100 = vmatmul.f32.gmra.mxu0 %v2431
    %v3101 = vpop.f32.mrf.mxu0
    %v3102 = vadd.f32 0.0, %v3101
    %3103 = vmatmul.f32.gmra.mxu0 %v2432
    %v3104 = vpop.f32.mrf.mxu0
    %v3105 = vadd.f32 0.0, %v3104
    %3106 = vmatmul.f32.gmra.mxu0 %v2433
    %v3107 = vpop.f32.mrf.mxu0
    %v3108 = vadd.f32 0.0, %v3107
    %3109 = vdwg.mxu0
    %3110 = vmatpush.msra.mxu0 %v2425
    %3111 = vmatpush.msra.mxu0 %v2393
    %3112 = vmatpush.msra.mxu0 %v2361
    %3113 = vmatpush.msra.mxu0 %v2329
    %3114 = vmatpush.msra.mxu0 %v2297
    %3115 = vmatpush.msra.mxu0 %v2265
    %3116 = vmatpush.msra.mxu0 %v2233
    %3117 = vmatpush.msra.mxu0 %v2201
    %3118 = vmatpush.msra.mxu0 %v2169
    %3119 = vmatpush.msra.mxu0 %v2137
    %3120 = vmatpush.msra.mxu0 %v2105
    %3121 = vmatpush.msra.mxu0 %v2073
    %3122 = vmatpush.msra.mxu0 %v2041
    %3123 = vmatpush.msra.mxu0 %v2009
    %3124 = vmatpush.msra.mxu0 %v1977
    %3125 = vmatpush.msra.mxu0 %v1945
    %3126 = vmatmul.f32.gmra.mxu0 %v2431
    %v3127 = vpop.f32.mrf.mxu0
    %v3128 = vadd.f32 0.0, %v3127
    %3129 = vmatmul.f32.gmra.mxu0 %v2432
    %v3130 = vpop.f32.mrf.mxu0
    %v3131 = vadd.f32 0.0, %v3130
    %3132 = vmatmul.f32.gmra.mxu0 %v2433
    %v3133 = vpop.f32.mrf.mxu0
    %v3134 = vadd.f32 0.0, %v3133
    %3135 = vdwg.mxu0
    %3136 = vmatpush.msra.mxu0 %v2426
    %3137 = vmatpush.msra.mxu0 %v2394
    %3138 = vmatpush.msra.mxu0 %v2362
    %3139 = vmatpush.msra.mxu0 %v2330
    %3140 = vmatpush.msra.mxu0 %v2298
    %3141 = vmatpush.msra.mxu0 %v2266
    %3142 = vmatpush.msra.mxu0 %v2234
    %3143 = vmatpush.msra.mxu0 %v2202
    %3144 = vmatpush.msra.mxu0 %v2170
    %3145 = vmatpush.msra.mxu0 %v2138
    %3146 = vmatpush.msra.mxu0 %v2106
    %3147 = vmatpush.msra.mxu0 %v2074
    %3148 = vmatpush.msra.mxu0 %v2042
    %3149 = vmatpush.msra.mxu0 %v2010
    %3150 = vmatpush.msra.mxu0 %v1978
    %3151 = vmatpush.msra.mxu0 %v1946
    %3152 = vmatmul.f32.gmra.mxu0 %v2431
    %v3153 = vpop.f32.mrf.mxu0
    %v3154 = vadd.f32 0.0, %v3153
    %3155 = vmatmul.f32.gmra.mxu0 %v2432
    %v3156 = vpop.f32.mrf.mxu0
    %v3157 = vadd.f32 0.0, %v3156
    %3158 = vmatmul.f32.gmra.mxu0 %v2433
    %v3159 = vpop.f32.mrf.mxu0
    %v3160 = vadd.f32 0.0, %v3159
    %3161 = vdwg.mxu0
    %3162 = vmatpush.msra.mxu0 %v2427
    %3163 = vmatpush.msra.mxu0 %v2395
    %3164 = vmatpush.msra.mxu0 %v2363
    %3165 = vmatpush.msra.mxu0 %v2331
    %3166 = vmatpush.msra.mxu0 %v2299
    %3167 = vmatpush.msra.mxu0 %v2267
    %3168 = vmatpush.msra.mxu0 %v2235
    %3169 = vmatpush.msra.mxu0 %v2203
    %3170 = vmatpush.msra.mxu0 %v2171
    %3171 = vmatpush.msra.mxu0 %v2139
    %3172 = vmatpush.msra.mxu0 %v2107
    %3173 = vmatpush.msra.mxu0 %v2075
    %3174 = vmatpush.msra.mxu0 %v2043
    %3175 = vmatpush.msra.mxu0 %v2011
    %3176 = vmatpush.msra.mxu0 %v1979
    %3177 = vmatpush.msra.mxu0 %v1947
    %3178 = vmatmul.f32.gmra.mxu0 %v2431
    %v3179 = vpop.f32.mrf.mxu0
    %v3180 = vadd.f32 0.0, %v3179
    %3181 = vmatmul.f32.gmra.mxu0 %v2432
    %v3182 = vpop.f32.mrf.mxu0
    %v3183 = vadd.f32 0.0, %v3182
    %3184 = vmatmul.f32.gmra.mxu0 %v2433
    %v3185 = vpop.f32.mrf.mxu0
    %v3186 = vadd.f32 0.0, %v3185
    %3187 = vdwg.mxu0
    %3188 = vmatpush.msra.mxu0 %v2428
    %3189 = vmatpush.msra.mxu0 %v2396
    %3190 = vmatpush.msra.mxu0 %v2364
    %3191 = vmatpush.msra.mxu0 %v2332
    %3192 = vmatpush.msra.mxu0 %v2300
    %3193 = vmatpush.msra.mxu0 %v2268
    %3194 = vmatpush.msra.mxu0 %v2236
    %3195 = vmatpush.msra.mxu0 %v2204
    %3196 = vmatpush.msra.mxu0 %v2172
    %3197 = vmatpush.msra.mxu0 %v2140
    %3198 = vmatpush.msra.mxu0 %v2108
    %3199 = vmatpush.msra.mxu0 %v2076
    %3200 = vmatpush.msra.mxu0 %v2044
    %3201 = vmatpush.msra.mxu0 %v2012
    %3202 = vmatpush.msra.mxu0 %v1980
    %3203 = vmatpush.msra.mxu0 %v1948
    %3204 = vmatmul.f32.gmra.mxu0 %v2431
    %v3205 = vpop.f32.mrf.mxu0
    %v3206 = vadd.f32 0.0, %v3205
    %3207 = vmatmul.f32.gmra.mxu0 %v2432
    %v3208 = vpop.f32.mrf.mxu0
    %v3209 = vadd.f32 0.0, %v3208
    %3210 = vmatmul.f32.gmra.mxu0 %v2433
    %v3211 = vpop.f32.mrf.mxu0
    %v3212 = vadd.f32 0.0, %v3211
    %3213 = vdwg.mxu0
    %3214 = vmatpush.msra.mxu0 %v2429
    %3215 = vmatpush.msra.mxu0 %v2397
    %3216 = vmatpush.msra.mxu0 %v2365
    %3217 = vmatpush.msra.mxu0 %v2333
    %3218 = vmatpush.msra.mxu0 %v2301
    %3219 = vmatpush.msra.mxu0 %v2269
    %3220 = vmatpush.msra.mxu0 %v2237
    %3221 = vmatpush.msra.mxu0 %v2205
    %3222 = vmatpush.msra.mxu0 %v2173
    %3223 = vmatpush.msra.mxu0 %v2141
    %3224 = vmatpush.msra.mxu0 %v2109
    %3225 = vmatpush.msra.mxu0 %v2077
    %3226 = vmatpush.msra.mxu0 %v2045
    %3227 = vmatpush.msra.mxu0 %v2013
    %3228 = vmatpush.msra.mxu0 %v1981
    %3229 = vmatpush.msra.mxu0 %v1949
    %3230 = vmatmul.f32.gmra.mxu0 %v2431
    %v3231 = vpop.f32.mrf.mxu0
    %v3232 = vadd.f32 0.0, %v3231
    %3233 = vmatmul.f32.gmra.mxu0 %v2432
    %v3234 = vpop.f32.mrf.mxu0
    %v3235 = vadd.f32 0.0, %v3234
    %3236 = vmatmul.f32.gmra.mxu0 %v2433
    %v3237 = vpop.f32.mrf.mxu0
    %v3238 = vadd.f32 0.0, %v3237
    %3239 = vdwg.mxu0
    %3240 = vmatpush.msra.mxu0 %v2430
    %3241 = vmatpush.msra.mxu0 %v2398
    %3242 = vmatpush.msra.mxu0 %v2366
    %3243 = vmatpush.msra.mxu0 %v2334
    %3244 = vmatpush.msra.mxu0 %v2302
    %3245 = vmatpush.msra.mxu0 %v2270
    %3246 = vmatpush.msra.mxu0 %v2238
    %3247 = vmatpush.msra.mxu0 %v2206
    %3248 = vmatpush.msra.mxu0 %v2174
    %3249 = vmatpush.msra.mxu0 %v2142
    %3250 = vmatpush.msra.mxu0 %v2110
    %3251 = vmatpush.msra.mxu0 %v2078
    %3252 = vmatpush.msra.mxu0 %v2046
    %3253 = vmatpush.msra.mxu0 %v2014
    %3254 = vmatpush.msra.mxu0 %v1982
    %3255 = vmatpush.msra.mxu0 %v1950
    %3256 = vmatmul.f32.gmra.mxu0 %v2431
    %v3257 = vpop.f32.mrf.mxu0
    %v3258 = vadd.f32 0.0, %v3257
    %3259 = vmatmul.f32.gmra.mxu0 %v2432
    %v3260 = vpop.f32.mrf.mxu0
    %v3261 = vadd.f32 0.0, %v3260
    %3262 = vmatmul.f32.gmra.mxu0 %v2433
    %v3263 = vpop.f32.mrf.mxu0
    %v3264 = vadd.f32 0.0, %v3263
    %3265 = vdwg.mxu0
    %v3266 = vperm.slane %v142, 3
    %v3267 = vperm.slane %v142, 7
    %v3268 = vperm.slane %v143, 3
    %v3269 = vperm.slane %v143, 7
    %v3270 = vperm.slane %v144, 3
    %v3271 = vperm.slane %v144, 7
    %v3272 = vperm.slane %v145, 3
    %v3273 = vperm.slane %v145, 7
    %v3274 = vperm.slane %v146, 3
    %v3275 = vperm.slane %v146, 7
    %v3276 = vperm.slane %v147, 3
    %v3277 = vperm.slane %v147, 7
    %v3278 = vperm.slane %v148, 3
    %v3279 = vperm.slane %v148, 7
    %v3280 = vperm.slane %v149, 3
    %v3281 = vperm.slane %v149, 7
    %v3282 = vperm.slane %v150, 3
    %v3283 = vperm.slane %v150, 7
    %v3284 = vperm.slane %v151, 3
    %v3285 = vperm.slane %v151, 7
    %v3286 = vperm.slane %v152, 3
    %v3287 = vperm.slane %v152, 7
    %v3288 = vperm.slane %v153, 3
    %v3289 = vperm.slane %v153, 7
    %v3290 = vperm.slane %v154, 3
    %v3291 = vperm.slane %v154, 7
    %v3292 = vperm.slane %v155, 3
    %v3293 = vperm.slane %v155, 7
    %v3294 = vperm.slane %v156, 3
    %v3295 = vperm.slane %v156, 7
    %v3296 = vperm.slane %v157, 3
    %v3297 = vperm.slane %v157, 7
    %v3298 = vperm.slane %v3266, 3
    %v3299 = vperm.slane %v3267, 3
    %v3300 = vperm.slane %v3268, 3
    %v3301 = vperm.slane %v3269, 3
    %v3302 = vperm.slane %v3270, 3
    %v3303 = vperm.slane %v3271, 3
    %v3304 = vperm.slane %v3272, 3
    %v3305 = vperm.slane %v3273, 3
    %v3306 = vperm.slane %v3274, 3
    %v3307 = vperm.slane %v3275, 3
    %v3308 = vperm.slane %v3276, 3
    %v3309 = vperm.slane %v3277, 3
    %v3310 = vperm.slane %v3278, 3
    %v3311 = vperm.slane %v3279, 3
    %v3312 = vperm.slane %v3280, 3
    %v3313 = vperm.slane %v3281, 3
    %v3314 = vperm.slane %v3282, 3
    %v3315 = vperm.slane %v3283, 3
    %v3316 = vperm.slane %v3284, 3
    %v3317 = vperm.slane %v3285, 3
    %v3318 = vperm.slane %v3286, 3
    %v3319 = vperm.slane %v3287, 3
    %v3320 = vperm.slane %v3288, 3
    %v3321 = vperm.slane %v3289, 3
    %v3322 = vperm.slane %v3290, 3
    %v3323 = vperm.slane %v3291, 3
    %v3324 = vperm.slane %v3292, 3
    %v3325 = vperm.slane %v3293, 3
    %v3326 = vperm.slane %v3294, 3
    %v3327 = vperm.slane %v3295, 3
    %v3328 = vperm.slane %v3296, 3
    %v3329 = vperm.slane %v3297, 3
    %vm3330 = vcmp.eq.s32.totalorder %v239, %v3298
    %vm3331 = vcmp.eq.s32.totalorder %v239, %v3299
    %vm3332 = vcmp.eq.s32.totalorder %v239, %v3300
    %vm3333 = vcmp.eq.s32.totalorder %v239, %v3301
    %vm3334 = vcmp.eq.s32.totalorder %v239, %v3302
    %vm3335 = vcmp.eq.s32.totalorder %v239, %v3303
    %vm3336 = vcmp.eq.s32.totalorder %v239, %v3304
    %vm3337 = vcmp.eq.s32.totalorder %v239, %v3305
    %vm3338 = vcmp.eq.s32.totalorder %v239, %v3306
    %vm3339 = vcmp.eq.s32.totalorder %v239, %v3307
    %vm3340 = vcmp.eq.s32.totalorder %v239, %v3308
    %vm3341 = vcmp.eq.s32.totalorder %v239, %v3309
    %vm3342 = vcmp.eq.s32.totalorder %v239, %v3310
    %vm3343 = vcmp.eq.s32.totalorder %v239, %v3311
    %vm3344 = vcmp.eq.s32.totalorder %v239, %v3312
    %vm3345 = vcmp.eq.s32.totalorder %v239, %v3313
    %vm3346 = vcmp.eq.s32.totalorder %v239, %v3314
    %vm3347 = vcmp.eq.s32.totalorder %v239, %v3315
    %vm3348 = vcmp.eq.s32.totalorder %v239, %v3316
    %vm3349 = vcmp.eq.s32.totalorder %v239, %v3317
    %vm3350 = vcmp.eq.s32.totalorder %v239, %v3318
    %vm3351 = vcmp.eq.s32.totalorder %v239, %v3319
    %vm3352 = vcmp.eq.s32.totalorder %v239, %v3320
    %vm3353 = vcmp.eq.s32.totalorder %v239, %v3321
    %vm3354 = vcmp.eq.s32.totalorder %v239, %v3322
    %vm3355 = vcmp.eq.s32.totalorder %v239, %v3323
    %vm3356 = vcmp.eq.s32.totalorder %v239, %v3324
    %vm3357 = vcmp.eq.s32.totalorder %v239, %v3325
    %vm3358 = vcmp.eq.s32.totalorder %v239, %v3326
    %vm3359 = vcmp.eq.s32.totalorder %v239, %v3327
    %vm3360 = vcmp.eq.s32.totalorder %v239, %v3328
    %vm3361 = vcmp.eq.s32.totalorder %v239, %v3329
    %vm3362 = vcmp.eq.s32.totalorder %v240, %v3298
    %vm3363 = vcmp.eq.s32.totalorder %v240, %v3299
    %vm3364 = vcmp.eq.s32.totalorder %v240, %v3300
    %vm3365 = vcmp.eq.s32.totalorder %v240, %v3301
    %vm3366 = vcmp.eq.s32.totalorder %v240, %v3302
    %vm3367 = vcmp.eq.s32.totalorder %v240, %v3303
    %vm3368 = vcmp.eq.s32.totalorder %v240, %v3304
    %vm3369 = vcmp.eq.s32.totalorder %v240, %v3305
    %vm3370 = vcmp.eq.s32.totalorder %v240, %v3306
    %vm3371 = vcmp.eq.s32.totalorder %v240, %v3307
    %vm3372 = vcmp.eq.s32.totalorder %v240, %v3308
    %vm3373 = vcmp.eq.s32.totalorder %v240, %v3309
    %vm3374 = vcmp.eq.s32.totalorder %v240, %v3310
    %vm3375 = vcmp.eq.s32.totalorder %v240, %v3311
    %vm3376 = vcmp.eq.s32.totalorder %v240, %v3312
    %vm3377 = vcmp.eq.s32.totalorder %v240, %v3313
    %vm3378 = vcmp.eq.s32.totalorder %v240, %v3314
    %vm3379 = vcmp.eq.s32.totalorder %v240, %v3315
    %vm3380 = vcmp.eq.s32.totalorder %v240, %v3316
    %vm3381 = vcmp.eq.s32.totalorder %v240, %v3317
    %vm3382 = vcmp.eq.s32.totalorder %v240, %v3318
    %vm3383 = vcmp.eq.s32.totalorder %v240, %v3319
    %vm3384 = vcmp.eq.s32.totalorder %v240, %v3320
    %vm3385 = vcmp.eq.s32.totalorder %v240, %v3321
    %vm3386 = vcmp.eq.s32.totalorder %v240, %v3322
    %vm3387 = vcmp.eq.s32.totalorder %v240, %v3323
    %vm3388 = vcmp.eq.s32.totalorder %v240, %v3324
    %vm3389 = vcmp.eq.s32.totalorder %v240, %v3325
    %vm3390 = vcmp.eq.s32.totalorder %v240, %v3326
    %vm3391 = vcmp.eq.s32.totalorder %v240, %v3327
    %vm3392 = vcmp.eq.s32.totalorder %v240, %v3328
    %vm3393 = vcmp.eq.s32.totalorder %v240, %v3329
    %vm3394 = vcmp.eq.s32.totalorder %v241, %v3298
    %vm3395 = vcmp.eq.s32.totalorder %v241, %v3299
    %vm3396 = vcmp.eq.s32.totalorder %v241, %v3300
    %vm3397 = vcmp.eq.s32.totalorder %v241, %v3301
    %vm3398 = vcmp.eq.s32.totalorder %v241, %v3302
    %vm3399 = vcmp.eq.s32.totalorder %v241, %v3303
    %vm3400 = vcmp.eq.s32.totalorder %v241, %v3304
    %vm3401 = vcmp.eq.s32.totalorder %v241, %v3305
    %vm3402 = vcmp.eq.s32.totalorder %v241, %v3306
    %vm3403 = vcmp.eq.s32.totalorder %v241, %v3307
    %vm3404 = vcmp.eq.s32.totalorder %v241, %v3308
    %vm3405 = vcmp.eq.s32.totalorder %v241, %v3309
    %vm3406 = vcmp.eq.s32.totalorder %v241, %v3310
    %vm3407 = vcmp.eq.s32.totalorder %v241, %v3311
    %vm3408 = vcmp.eq.s32.totalorder %v241, %v3312
    %vm3409 = vcmp.eq.s32.totalorder %v241, %v3313
    %vm3410 = vcmp.eq.s32.totalorder %v241, %v3314
    %vm3411 = vcmp.eq.s32.totalorder %v241, %v3315
    %vm3412 = vcmp.eq.s32.totalorder %v241, %v3316
    %vm3413 = vcmp.eq.s32.totalorder %v241, %v3317
    %vm3414 = vcmp.eq.s32.totalorder %v241, %v3318
    %vm3415 = vcmp.eq.s32.totalorder %v241, %v3319
    %vm3416 = vcmp.eq.s32.totalorder %v241, %v3320
    %vm3417 = vcmp.eq.s32.totalorder %v241, %v3321
    %vm3418 = vcmp.eq.s32.totalorder %v241, %v3322
    %vm3419 = vcmp.eq.s32.totalorder %v241, %v3323
    %vm3420 = vcmp.eq.s32.totalorder %v241, %v3324
    %vm3421 = vcmp.eq.s32.totalorder %v241, %v3325
    %vm3422 = vcmp.eq.s32.totalorder %v241, %v3326
    %vm3423 = vcmp.eq.s32.totalorder %v241, %v3327
    %vm3424 = vcmp.eq.s32.totalorder %v241, %v3328
    %vm3425 = vcmp.eq.s32.totalorder %v241, %v3329
    %v3426 = vadd.s32 %v142, 16
    %v3427 = vadd.s32 %v143, 16
    %v3428 = vadd.s32 %v144, 16
    %v3429 = vadd.s32 %v145, 16
    %v3430 = vadd.s32 %v146, 16
    %v3431 = vadd.s32 %v147, 16
    %v3432 = vadd.s32 %v148, 16
    %v3433 = vadd.s32 %v149, 16
    %v3434 = vadd.s32 %v150, 16
    %v3435 = vadd.s32 %v151, 16
    %v3436 = vadd.s32 %v152, 16
    %v3437 = vadd.s32 %v153, 16
    %v3438 = vadd.s32 %v154, 16
    %v3439 = vadd.s32 %v155, 16
    %v3440 = vadd.s32 %v156, 16
    %v3441 = vadd.s32 %v157, 16
    %v3442 = vperm.slane %v3426, 2
    %v3443 = vperm.slane %v3426, 6
    %v3444 = vperm.slane %v3427, 2
    %v3445 = vperm.slane %v3427, 6
    %v3446 = vperm.slane %v3428, 2
    %v3447 = vperm.slane %v3428, 6
    %v3448 = vperm.slane %v3429, 2
    %v3449 = vperm.slane %v3429, 6
    %v3450 = vperm.slane %v3430, 2
    %v3451 = vperm.slane %v3430, 6
    %v3452 = vperm.slane %v3431, 2
    %v3453 = vperm.slane %v3431, 6
    %v3454 = vperm.slane %v3432, 2
    %v3455 = vperm.slane %v3432, 6
    %v3456 = vperm.slane %v3433, 2
    %v3457 = vperm.slane %v3433, 6
    %v3458 = vperm.slane %v3434, 2
    %v3459 = vperm.slane %v3434, 6
    %v3460 = vperm.slane %v3435, 2
    %v3461 = vperm.slane %v3435, 6
    %v3462 = vperm.slane %v3436, 2
    %v3463 = vperm.slane %v3436, 6
    %v3464 = vperm.slane %v3437, 2
    %v3465 = vperm.slane %v3437, 6
    %v3466 = vperm.slane %v3438, 2
    %v3467 = vperm.slane %v3438, 6
    %v3468 = vperm.slane %v3439, 2
    %v3469 = vperm.slane %v3439, 6
    %v3470 = vperm.slane %v3440, 2
    %v3471 = vperm.slane %v3440, 6
    %v3472 = vperm.slane %v3441, 2
    %v3473 = vperm.slane %v3441, 6
    %v3474 = vperm.slane %v3442, 2
    %v3475 = vperm.slane %v3443, 2
    %v3476 = vperm.slane %v3444, 2
    %v3477 = vperm.slane %v3445, 2
    %v3478 = vperm.slane %v3446, 2
    %v3479 = vperm.slane %v3447, 2
    %v3480 = vperm.slane %v3448, 2
    %v3481 = vperm.slane %v3449, 2
    %v3482 = vperm.slane %v3450, 2
    %v3483 = vperm.slane %v3451, 2
    %v3484 = vperm.slane %v3452, 2
    %v3485 = vperm.slane %v3453, 2
    %v3486 = vperm.slane %v3454, 2
    %v3487 = vperm.slane %v3455, 2
    %v3488 = vperm.slane %v3456, 2
    %v3489 = vperm.slane %v3457, 2
    %v3490 = vperm.slane %v3458, 2
    %v3491 = vperm.slane %v3459, 2
    %v3492 = vperm.slane %v3460, 2
    %v3493 = vperm.slane %v3461, 2
    %v3494 = vperm.slane %v3462, 2
    %v3495 = vperm.slane %v3463, 2
    %v3496 = vperm.slane %v3464, 2
    %v3497 = vperm.slane %v3465, 2
    %v3498 = vperm.slane %v3466, 2
    %v3499 = vperm.slane %v3467, 2
    %v3500 = vperm.slane %v3468, 2
    %v3501 = vperm.slane %v3469, 2
    %v3502 = vperm.slane %v3470, 2
    %v3503 = vperm.slane %v3471, 2
    %v3504 = vperm.slane %v3472, 2
    %v3505 = vperm.slane %v3473, 2
    %vm3506 = vcmp.eq.s32.totalorder %v239, %v3474
    %vm3507 = vcmp.eq.s32.totalorder %v239, %v3475
    %vm3508 = vcmp.eq.s32.totalorder %v239, %v3476
    %vm3509 = vcmp.eq.s32.totalorder %v239, %v3477
    %vm3510 = vcmp.eq.s32.totalorder %v239, %v3478
    %vm3511 = vcmp.eq.s32.totalorder %v239, %v3479
    %vm3512 = vcmp.eq.s32.totalorder %v239, %v3480
    %vm3513 = vcmp.eq.s32.totalorder %v239, %v3481
    %vm3514 = vcmp.eq.s32.totalorder %v239, %v3482
    %vm3515 = vcmp.eq.s32.totalorder %v239, %v3483
    %vm3516 = vcmp.eq.s32.totalorder %v239, %v3484
    %vm3517 = vcmp.eq.s32.totalorder %v239, %v3485
    %vm3518 = vcmp.eq.s32.totalorder %v239, %v3486
    %vm3519 = vcmp.eq.s32.totalorder %v239, %v3487
    %vm3520 = vcmp.eq.s32.totalorder %v239, %v3488
    %vm3521 = vcmp.eq.s32.totalorder %v239, %v3489
    %vm3522 = vcmp.eq.s32.totalorder %v239, %v3490
    %vm3523 = vcmp.eq.s32.totalorder %v239, %v3491
    %vm3524 = vcmp.eq.s32.totalorder %v239, %v3492
    %vm3525 = vcmp.eq.s32.totalorder %v239, %v3493
    %vm3526 = vcmp.eq.s32.totalorder %v239, %v3494
    %vm3527 = vcmp.eq.s32.totalorder %v239, %v3495
    %vm3528 = vcmp.eq.s32.totalorder %v239, %v3496
    %vm3529 = vcmp.eq.s32.totalorder %v239, %v3497
    %vm3530 = vcmp.eq.s32.totalorder %v239, %v3498
    %vm3531 = vcmp.eq.s32.totalorder %v239, %v3499
    %vm3532 = vcmp.eq.s32.totalorder %v239, %v3500
    %vm3533 = vcmp.eq.s32.totalorder %v239, %v3501
    %vm3534 = vcmp.eq.s32.totalorder %v239, %v3502
    %vm3535 = vcmp.eq.s32.totalorder %v239, %v3503
    %vm3536 = vcmp.eq.s32.totalorder %v239, %v3504
    %vm3537 = vcmp.eq.s32.totalorder %v239, %v3505
    %vm3538 = vcmp.eq.s32.totalorder %v240, %v3474
    %vm3539 = vcmp.eq.s32.totalorder %v240, %v3475
    %vm3540 = vcmp.eq.s32.totalorder %v240, %v3476
    %vm3541 = vcmp.eq.s32.totalorder %v240, %v3477
    %vm3542 = vcmp.eq.s32.totalorder %v240, %v3478
    %vm3543 = vcmp.eq.s32.totalorder %v240, %v3479
    %vm3544 = vcmp.eq.s32.totalorder %v240, %v3480
    %vm3545 = vcmp.eq.s32.totalorder %v240, %v3481
    %vm3546 = vcmp.eq.s32.totalorder %v240, %v3482
    %vm3547 = vcmp.eq.s32.totalorder %v240, %v3483
    %vm3548 = vcmp.eq.s32.totalorder %v240, %v3484
    %vm3549 = vcmp.eq.s32.totalorder %v240, %v3485
    %vm3550 = vcmp.eq.s32.totalorder %v240, %v3486
    %vm3551 = vcmp.eq.s32.totalorder %v240, %v3487
    %vm3552 = vcmp.eq.s32.totalorder %v240, %v3488
    %vm3553 = vcmp.eq.s32.totalorder %v240, %v3489
    %vm3554 = vcmp.eq.s32.totalorder %v240, %v3490
    %vm3555 = vcmp.eq.s32.totalorder %v240, %v3491
    %vm3556 = vcmp.eq.s32.totalorder %v240, %v3492
    %vm3557 = vcmp.eq.s32.totalorder %v240, %v3493
    %vm3558 = vcmp.eq.s32.totalorder %v240, %v3494
    %vm3559 = vcmp.eq.s32.totalorder %v240, %v3495
    %vm3560 = vcmp.eq.s32.totalorder %v240, %v3496
    %vm3561 = vcmp.eq.s32.totalorder %v240, %v3497
    %vm3562 = vcmp.eq.s32.totalorder %v240, %v3498
    %vm3563 = vcmp.eq.s32.totalorder %v240, %v3499
    %vm3564 = vcmp.eq.s32.totalorder %v240, %v3500
    %vm3565 = vcmp.eq.s32.totalorder %v240, %v3501
    %vm3566 = vcmp.eq.s32.totalorder %v240, %v3502
    %vm3567 = vcmp.eq.s32.totalorder %v240, %v3503
    %vm3568 = vcmp.eq.s32.totalorder %v240, %v3504
    %vm3569 = vcmp.eq.s32.totalorder %v240, %v3505
    %vm3570 = vcmp.eq.s32.totalorder %v241, %v3474
    %vm3571 = vcmp.eq.s32.totalorder %v241, %v3475
    %vm3572 = vcmp.eq.s32.totalorder %v241, %v3476
    %vm3573 = vcmp.eq.s32.totalorder %v241, %v3477
    %vm3574 = vcmp.eq.s32.totalorder %v241, %v3478
    %vm3575 = vcmp.eq.s32.totalorder %v241, %v3479
    %vm3576 = vcmp.eq.s32.totalorder %v241, %v3480
    %vm3577 = vcmp.eq.s32.totalorder %v241, %v3481
    %vm3578 = vcmp.eq.s32.totalorder %v241, %v3482
    %vm3579 = vcmp.eq.s32.totalorder %v241, %v3483
    %vm3580 = vcmp.eq.s32.totalorder %v241, %v3484
    %vm3581 = vcmp.eq.s32.totalorder %v241, %v3485
    %vm3582 = vcmp.eq.s32.totalorder %v241, %v3486
    %vm3583 = vcmp.eq.s32.totalorder %v241, %v3487
    %vm3584 = vcmp.eq.s32.totalorder %v241, %v3488
    %vm3585 = vcmp.eq.s32.totalorder %v241, %v3489
    %vm3586 = vcmp.eq.s32.totalorder %v241, %v3490
    %vm3587 = vcmp.eq.s32.totalorder %v241, %v3491
    %vm3588 = vcmp.eq.s32.totalorder %v241, %v3492
    %vm3589 = vcmp.eq.s32.totalorder %v241, %v3493
    %vm3590 = vcmp.eq.s32.totalorder %v241, %v3494
    %vm3591 = vcmp.eq.s32.totalorder %v241, %v3495
    %vm3592 = vcmp.eq.s32.totalorder %v241, %v3496
    %vm3593 = vcmp.eq.s32.totalorder %v241, %v3497
    %vm3594 = vcmp.eq.s32.totalorder %v241, %v3498
    %vm3595 = vcmp.eq.s32.totalorder %v241, %v3499
    %vm3596 = vcmp.eq.s32.totalorder %v241, %v3500
    %vm3597 = vcmp.eq.s32.totalorder %v241, %v3501
    %vm3598 = vcmp.eq.s32.totalorder %v241, %v3502
    %vm3599 = vcmp.eq.s32.totalorder %v241, %v3503
    %vm3600 = vcmp.eq.s32.totalorder %v241, %v3504
    %vm3601 = vcmp.eq.s32.totalorder %v241, %v3505
    %vm3602 = vmor %vm3330, %vm3506
    %vm3603 = vmor %vm3331, %vm3507
    %vm3604 = vmor %vm3332, %vm3508
    %vm3605 = vmor %vm3333, %vm3509
    %vm3606 = vmor %vm3334, %vm3510
    %vm3607 = vmor %vm3335, %vm3511
    %vm3608 = vmor %vm3336, %vm3512
    %vm3609 = vmor %vm3337, %vm3513
    %vm3610 = vmor %vm3338, %vm3514
    %vm3611 = vmor %vm3339, %vm3515
    %vm3612 = vmor %vm3340, %vm3516
    %vm3613 = vmor %vm3341, %vm3517
    %vm3614 = vmor %vm3342, %vm3518
    %vm3615 = vmor %vm3343, %vm3519
    %vm3616 = vmor %vm3344, %vm3520
    %vm3617 = vmor %vm3345, %vm3521
    %vm3618 = vmor %vm3346, %vm3522
    %vm3619 = vmor %vm3347, %vm3523
    %vm3620 = vmor %vm3348, %vm3524
    %vm3621 = vmor %vm3349, %vm3525
    %vm3622 = vmor %vm3350, %vm3526
    %vm3623 = vmor %vm3351, %vm3527
    %vm3624 = vmor %vm3352, %vm3528
    %vm3625 = vmor %vm3353, %vm3529
    %vm3626 = vmor %vm3354, %vm3530
    %vm3627 = vmor %vm3355, %vm3531
    %vm3628 = vmor %vm3356, %vm3532
    %vm3629 = vmor %vm3357, %vm3533
    %vm3630 = vmor %vm3358, %vm3534
    %vm3631 = vmor %vm3359, %vm3535
    %vm3632 = vmor %vm3360, %vm3536
    %vm3633 = vmor %vm3361, %vm3537
    %vm3634 = vmor %vm3362, %vm3538
    %vm3635 = vmor %vm3363, %vm3539
    %vm3636 = vmor %vm3364, %vm3540
    %vm3637 = vmor %vm3365, %vm3541
    %vm3638 = vmor %vm3366, %vm3542
    %vm3639 = vmor %vm3367, %vm3543
    %vm3640 = vmor %vm3368, %vm3544
    %vm3641 = vmor %vm3369, %vm3545
    %vm3642 = vmor %vm3370, %vm3546
    %vm3643 = vmor %vm3371, %vm3547
    %vm3644 = vmor %vm3372, %vm3548
    %vm3645 = vmor %vm3373, %vm3549
    %vm3646 = vmor %vm3374, %vm3550
    %vm3647 = vmor %vm3375, %vm3551
    %vm3648 = vmor %vm3376, %vm3552
    %vm3649 = vmor %vm3377, %vm3553
    %vm3650 = vmor %vm3378, %vm3554
    %vm3651 = vmor %vm3379, %vm3555
    %vm3652 = vmor %vm3380, %vm3556
    %vm3653 = vmor %vm3381, %vm3557
    %vm3654 = vmor %vm3382, %vm3558
    %vm3655 = vmor %vm3383, %vm3559
    %vm3656 = vmor %vm3384, %vm3560
    %vm3657 = vmor %vm3385, %vm3561
    %vm3658 = vmor %vm3386, %vm3562
    %vm3659 = vmor %vm3387, %vm3563
    %vm3660 = vmor %vm3388, %vm3564
    %vm3661 = vmor %vm3389, %vm3565
    %vm3662 = vmor %vm3390, %vm3566
    %vm3663 = vmor %vm3391, %vm3567
    %vm3664 = vmor %vm3392, %vm3568
    %vm3665 = vmor %vm3393, %vm3569
    %vm3666 = vmor %vm3394, %vm3570
    %vm3667 = vmor %vm3395, %vm3571
    %vm3668 = vmor %vm3396, %vm3572
    %vm3669 = vmor %vm3397, %vm3573
    %vm3670 = vmor %vm3398, %vm3574
    %vm3671 = vmor %vm3399, %vm3575
    %vm3672 = vmor %vm3400, %vm3576
    %vm3673 = vmor %vm3401, %vm3577
    %vm3674 = vmor %vm3402, %vm3578
    %vm3675 = vmor %vm3403, %vm3579
    %vm3676 = vmor %vm3404, %vm3580
    %vm3677 = vmor %vm3405, %vm3581
    %vm3678 = vmor %vm3406, %vm3582
    %vm3679 = vmor %vm3407, %vm3583
    %vm3680 = vmor %vm3408, %vm3584
    %vm3681 = vmor %vm3409, %vm3585
    %vm3682 = vmor %vm3410, %vm3586
    %vm3683 = vmor %vm3411, %vm3587
    %vm3684 = vmor %vm3412, %vm3588
    %vm3685 = vmor %vm3413, %vm3589
    %vm3686 = vmor %vm3414, %vm3590
    %vm3687 = vmor %vm3415, %vm3591
    %vm3688 = vmor %vm3416, %vm3592
    %vm3689 = vmor %vm3417, %vm3593
    %vm3690 = vmor %vm3418, %vm3594
    %vm3691 = vmor %vm3419, %vm3595
    %vm3692 = vmor %vm3420, %vm3596
    %vm3693 = vmor %vm3421, %vm3597
    %vm3694 = vmor %vm3422, %vm3598
    %vm3695 = vmor %vm3423, %vm3599
    %vm3696 = vmor %vm3424, %vm3600
    %vm3697 = vmor %vm3425, %vm3601
    %v3698 = vadd.s32 %v3426, 2
    %v3699 = vadd.s32 %v3427, 2
    %v3700 = vadd.s32 %v3428, 2
    %v3701 = vadd.s32 %v3429, 2
    %v3702 = vadd.s32 %v3430, 2
    %v3703 = vadd.s32 %v3431, 2
    %v3704 = vadd.s32 %v3432, 2
    %v3705 = vadd.s32 %v3433, 2
    %v3706 = vadd.s32 %v3434, 2
    %v3707 = vadd.s32 %v3435, 2
    %v3708 = vadd.s32 %v3436, 2
    %v3709 = vadd.s32 %v3437, 2
    %v3710 = vadd.s32 %v3438, 2
    %v3711 = vadd.s32 %v3439, 2
    %v3712 = vadd.s32 %v3440, 2
    %v3713 = vadd.s32 %v3441, 2
    %v3714 = vperm.slane %v3698, 1
    %v3715 = vperm.slane %v3698, 5
    %v3716 = vperm.slane %v3699, 1
    %v3717 = vperm.slane %v3699, 5
    %v3718 = vperm.slane %v3700, 1
    %v3719 = vperm.slane %v3700, 5
    %v3720 = vperm.slane %v3701, 1
    %v3721 = vperm.slane %v3701, 5
    %v3722 = vperm.slane %v3702, 1
    %v3723 = vperm.slane %v3702, 5
    %v3724 = vperm.slane %v3703, 1
    %v3725 = vperm.slane %v3703, 5
    %v3726 = vperm.slane %v3704, 1
    %v3727 = vperm.slane %v3704, 5
    %v3728 = vperm.slane %v3705, 1
    %v3729 = vperm.slane %v3705, 5
    %v3730 = vperm.slane %v3706, 1
    %v3731 = vperm.slane %v3706, 5
    %v3732 = vperm.slane %v3707, 1
    %v3733 = vperm.slane %v3707, 5
    %v3734 = vperm.slane %v3708, 1
    %v3735 = vperm.slane %v3708, 5
    %v3736 = vperm.slane %v3709, 1
    %v3737 = vperm.slane %v3709, 5
    %v3738 = vperm.slane %v3710, 1
    %v3739 = vperm.slane %v3710, 5
    %v3740 = vperm.slane %v3711, 1
    %v3741 = vperm.slane %v3711, 5
    %v3742 = vperm.slane %v3712, 1
    %v3743 = vperm.slane %v3712, 5
    %v3744 = vperm.slane %v3713, 1
    %v3745 = vperm.slane %v3713, 5
    %v3746 = vperm.slane %v3714, 1
    %v3747 = vperm.slane %v3715, 1
    %v3748 = vperm.slane %v3716, 1
    %v3749 = vperm.slane %v3717, 1
    %v3750 = vperm.slane %v3718, 1
    %v3751 = vperm.slane %v3719, 1
    %v3752 = vperm.slane %v3720, 1
    %v3753 = vperm.slane %v3721, 1
    %v3754 = vperm.slane %v3722, 1
    %v3755 = vperm.slane %v3723, 1
    %v3756 = vperm.slane %v3724, 1
    %v3757 = vperm.slane %v3725, 1
    %v3758 = vperm.slane %v3726, 1
    %v3759 = vperm.slane %v3727, 1
    %v3760 = vperm.slane %v3728, 1
    %v3761 = vperm.slane %v3729, 1
    %v3762 = vperm.slane %v3730, 1
    %v3763 = vperm.slane %v3731, 1
    %v3764 = vperm.slane %v3732, 1
    %v3765 = vperm.slane %v3733, 1
    %v3766 = vperm.slane %v3734, 1
    %v3767 = vperm.slane %v3735, 1
    %v3768 = vperm.slane %v3736, 1
    %v3769 = vperm.slane %v3737, 1
    %v3770 = vperm.slane %v3738, 1
    %v3771 = vperm.slane %v3739, 1
    %v3772 = vperm.slane %v3740, 1
    %v3773 = vperm.slane %v3741, 1
    %v3774 = vperm.slane %v3742, 1
    %v3775 = vperm.slane %v3743, 1
    %v3776 = vperm.slane %v3744, 1
    %v3777 = vperm.slane %v3745, 1
    %vm3778 = vcmp.eq.s32.totalorder %v239, %v3746
    %vm3779 = vcmp.eq.s32.totalorder %v239, %v3747
    %vm3780 = vcmp.eq.s32.totalorder %v239, %v3748
    %vm3781 = vcmp.eq.s32.totalorder %v239, %v3749
    %vm3782 = vcmp.eq.s32.totalorder %v239, %v3750
    %vm3783 = vcmp.eq.s32.totalorder %v239, %v3751
    %vm3784 = vcmp.eq.s32.totalorder %v239, %v3752
    %vm3785 = vcmp.eq.s32.totalorder %v239, %v3753
    %vm3786 = vcmp.eq.s32.totalorder %v239, %v3754
    %vm3787 = vcmp.eq.s32.totalorder %v239, %v3755
    %vm3788 = vcmp.eq.s32.totalorder %v239, %v3756
    %vm3789 = vcmp.eq.s32.totalorder %v239, %v3757
    %vm3790 = vcmp.eq.s32.totalorder %v239, %v3758
    %vm3791 = vcmp.eq.s32.totalorder %v239, %v3759
    %vm3792 = vcmp.eq.s32.totalorder %v239, %v3760
    %vm3793 = vcmp.eq.s32.totalorder %v239, %v3761
    %vm3794 = vcmp.eq.s32.totalorder %v239, %v3762
    %vm3795 = vcmp.eq.s32.totalorder %v239, %v3763
    %vm3796 = vcmp.eq.s32.totalorder %v239, %v3764
    %vm3797 = vcmp.eq.s32.totalorder %v239, %v3765
    %vm3798 = vcmp.eq.s32.totalorder %v239, %v3766
    %vm3799 = vcmp.eq.s32.totalorder %v239, %v3767
    %vm3800 = vcmp.eq.s32.totalorder %v239, %v3768
    %vm3801 = vcmp.eq.s32.totalorder %v239, %v3769
    %vm3802 = vcmp.eq.s32.totalorder %v239, %v3770
    %vm3803 = vcmp.eq.s32.totalorder %v239, %v3771
    %vm3804 = vcmp.eq.s32.totalorder %v239, %v3772
    %vm3805 = vcmp.eq.s32.totalorder %v239, %v3773
    %vm3806 = vcmp.eq.s32.totalorder %v239, %v3774
    %vm3807 = vcmp.eq.s32.totalorder %v239, %v3775
    %vm3808 = vcmp.eq.s32.totalorder %v239, %v3776
    %vm3809 = vcmp.eq.s32.totalorder %v239, %v3777
    %vm3810 = vcmp.eq.s32.totalorder %v240, %v3746
    %vm3811 = vcmp.eq.s32.totalorder %v240, %v3747
    %vm3812 = vcmp.eq.s32.totalorder %v240, %v3748
    %vm3813 = vcmp.eq.s32.totalorder %v240, %v3749
    %vm3814 = vcmp.eq.s32.totalorder %v240, %v3750
    %vm3815 = vcmp.eq.s32.totalorder %v240, %v3751
    %vm3816 = vcmp.eq.s32.totalorder %v240, %v3752
    %vm3817 = vcmp.eq.s32.totalorder %v240, %v3753
    %vm3818 = vcmp.eq.s32.totalorder %v240, %v3754
    %vm3819 = vcmp.eq.s32.totalorder %v240, %v3755
    %vm3820 = vcmp.eq.s32.totalorder %v240, %v3756
    %vm3821 = vcmp.eq.s32.totalorder %v240, %v3757
    %vm3822 = vcmp.eq.s32.totalorder %v240, %v3758
    %vm3823 = vcmp.eq.s32.totalorder %v240, %v3759
    %vm3824 = vcmp.eq.s32.totalorder %v240, %v3760
    %vm3825 = vcmp.eq.s32.totalorder %v240, %v3761
    %vm3826 = vcmp.eq.s32.totalorder %v240, %v3762
    %vm3827 = vcmp.eq.s32.totalorder %v240, %v3763
    %vm3828 = vcmp.eq.s32.totalorder %v240, %v3764
    %vm3829 = vcmp.eq.s32.totalorder %v240, %v3765
    %vm3830 = vcmp.eq.s32.totalorder %v240, %v3766
    %vm3831 = vcmp.eq.s32.totalorder %v240, %v3767
    %vm3832 = vcmp.eq.s32.totalorder %v240, %v3768
    %vm3833 = vcmp.eq.s32.totalorder %v240, %v3769
    %vm3834 = vcmp.eq.s32.totalorder %v240, %v3770
    %vm3835 = vcmp.eq.s32.totalorder %v240, %v3771
    %vm3836 = vcmp.eq.s32.totalorder %v240, %v3772
    %vm3837 = vcmp.eq.s32.totalorder %v240, %v3773
    %vm3838 = vcmp.eq.s32.totalorder %v240, %v3774
    %vm3839 = vcmp.eq.s32.totalorder %v240, %v3775
    %vm3840 = vcmp.eq.s32.totalorder %v240, %v3776
    %vm3841 = vcmp.eq.s32.totalorder %v240, %v3777
    %vm3842 = vcmp.eq.s32.totalorder %v241, %v3746
    %vm3843 = vcmp.eq.s32.totalorder %v241, %v3747
    %vm3844 = vcmp.eq.s32.totalorder %v241, %v3748
    %vm3845 = vcmp.eq.s32.totalorder %v241, %v3749
    %vm3846 = vcmp.eq.s32.totalorder %v241, %v3750
    %vm3847 = vcmp.eq.s32.totalorder %v241, %v3751
    %vm3848 = vcmp.eq.s32.totalorder %v241, %v3752
    %vm3849 = vcmp.eq.s32.totalorder %v241, %v3753
    %vm3850 = vcmp.eq.s32.totalorder %v241, %v3754
    %vm3851 = vcmp.eq.s32.totalorder %v241, %v3755
    %vm3852 = vcmp.eq.s32.totalorder %v241, %v3756
    %vm3853 = vcmp.eq.s32.totalorder %v241, %v3757
    %vm3854 = vcmp.eq.s32.totalorder %v241, %v3758
    %vm3855 = vcmp.eq.s32.totalorder %v241, %v3759
    %vm3856 = vcmp.eq.s32.totalorder %v241, %v3760
    %vm3857 = vcmp.eq.s32.totalorder %v241, %v3761
    %vm3858 = vcmp.eq.s32.totalorder %v241, %v3762
    %vm3859 = vcmp.eq.s32.totalorder %v241, %v3763
    %vm3860 = vcmp.eq.s32.totalorder %v241, %v3764
    %vm3861 = vcmp.eq.s32.totalorder %v241, %v3765
    %vm3862 = vcmp.eq.s32.totalorder %v241, %v3766
    %vm3863 = vcmp.eq.s32.totalorder %v241, %v3767
    %vm3864 = vcmp.eq.s32.totalorder %v241, %v3768
    %vm3865 = vcmp.eq.s32.totalorder %v241, %v3769
    %vm3866 = vcmp.eq.s32.totalorder %v241, %v3770
    %vm3867 = vcmp.eq.s32.totalorder %v241, %v3771
    %vm3868 = vcmp.eq.s32.totalorder %v241, %v3772
    %vm3869 = vcmp.eq.s32.totalorder %v241, %v3773
    %vm3870 = vcmp.eq.s32.totalorder %v241, %v3774
    %vm3871 = vcmp.eq.s32.totalorder %v241, %v3775
    %vm3872 = vcmp.eq.s32.totalorder %v241, %v3776
    %vm3873 = vcmp.eq.s32.totalorder %v241, %v3777
    %vm3874 = vmor %vm3602, %vm3778
    %vm3875 = vmor %vm3603, %vm3779
    %vm3876 = vmor %vm3604, %vm3780
    %vm3877 = vmor %vm3605, %vm3781
    %vm3878 = vmor %vm3606, %vm3782
    %vm3879 = vmor %vm3607, %vm3783
    %vm3880 = vmor %vm3608, %vm3784
    %vm3881 = vmor %vm3609, %vm3785
    %vm3882 = vmor %vm3610, %vm3786
    %vm3883 = vmor %vm3611, %vm3787
    %vm3884 = vmor %vm3612, %vm3788
    %vm3885 = vmor %vm3613, %vm3789
    %vm3886 = vmor %vm3614, %vm3790
    %vm3887 = vmor %vm3615, %vm3791
    %vm3888 = vmor %vm3616, %vm3792
    %vm3889 = vmor %vm3617, %vm3793
    %vm3890 = vmor %vm3618, %vm3794
    %vm3891 = vmor %vm3619, %vm3795
    %vm3892 = vmor %vm3620, %vm3796
    %vm3893 = vmor %vm3621, %vm3797
    %vm3894 = vmor %vm3622, %vm3798
    %vm3895 = vmor %vm3623, %vm3799
    %vm3896 = vmor %vm3624, %vm3800
    %vm3897 = vmor %vm3625, %vm3801
    %vm3898 = vmor %vm3626, %vm3802
    %vm3899 = vmor %vm3627, %vm3803
    %vm3900 = vmor %vm3628, %vm3804
    %vm3901 = vmor %vm3629, %vm3805
    %vm3902 = vmor %vm3630, %vm3806
    %vm3903 = vmor %vm3631, %vm3807
    %vm3904 = vmor %vm3632, %vm3808
    %vm3905 = vmor %vm3633, %vm3809
    %vm3906 = vmor %vm3634, %vm3810
    %vm3907 = vmor %vm3635, %vm3811
    %vm3908 = vmor %vm3636, %vm3812
    %vm3909 = vmor %vm3637, %vm3813
    %vm3910 = vmor %vm3638, %vm3814
    %vm3911 = vmor %vm3639, %vm3815
    %vm3912 = vmor %vm3640, %vm3816
    %vm3913 = vmor %vm3641, %vm3817
    %vm3914 = vmor %vm3642, %vm3818
    %vm3915 = vmor %vm3643, %vm3819
    %vm3916 = vmor %vm3644, %vm3820
    %vm3917 = vmor %vm3645, %vm3821
    %vm3918 = vmor %vm3646, %vm3822
    %vm3919 = vmor %vm3647, %vm3823
    %vm3920 = vmor %vm3648, %vm3824
    %vm3921 = vmor %vm3649, %vm3825
    %vm3922 = vmor %vm3650, %vm3826
    %vm3923 = vmor %vm3651, %vm3827
    %vm3924 = vmor %vm3652, %vm3828
    %vm3925 = vmor %vm3653, %vm3829
    %vm3926 = vmor %vm3654, %vm3830
    %vm3927 = vmor %vm3655, %vm3831
    %vm3928 = vmor %vm3656, %vm3832
    %vm3929 = vmor %vm3657, %vm3833
    %vm3930 = vmor %vm3658, %vm3834
    %vm3931 = vmor %vm3659, %vm3835
    %vm3932 = vmor %vm3660, %vm3836
    %vm3933 = vmor %vm3661, %vm3837
    %vm3934 = vmor %vm3662, %vm3838
    %vm3935 = vmor %vm3663, %vm3839
    %vm3936 = vmor %vm3664, %vm3840
    %vm3937 = vmor %vm3665, %vm3841
    %vm3938 = vmor %vm3666, %vm3842
    %vm3939 = vmor %vm3667, %vm3843
    %vm3940 = vmor %vm3668, %vm3844
    %vm3941 = vmor %vm3669, %vm3845
    %vm3942 = vmor %vm3670, %vm3846
    %vm3943 = vmor %vm3671, %vm3847
    %vm3944 = vmor %vm3672, %vm3848
    %vm3945 = vmor %vm3673, %vm3849
    %vm3946 = vmor %vm3674, %vm3850
    %vm3947 = vmor %vm3675, %vm3851
    %vm3948 = vmor %vm3676, %vm3852
    %vm3949 = vmor %vm3677, %vm3853
    %vm3950 = vmor %vm3678, %vm3854
    %vm3951 = vmor %vm3679, %vm3855
    %vm3952 = vmor %vm3680, %vm3856
    %vm3953 = vmor %vm3681, %vm3857
    %vm3954 = vmor %vm3682, %vm3858
    %vm3955 = vmor %vm3683, %vm3859
    %vm3956 = vmor %vm3684, %vm3860
    %vm3957 = vmor %vm3685, %vm3861
    %vm3958 = vmor %vm3686, %vm3862
    %vm3959 = vmor %vm3687, %vm3863
    %vm3960 = vmor %vm3688, %vm3864
    %vm3961 = vmor %vm3689, %vm3865
    %vm3962 = vmor %vm3690, %vm3866
    %vm3963 = vmor %vm3691, %vm3867
    %vm3964 = vmor %vm3692, %vm3868
    %vm3965 = vmor %vm3693, %vm3869
    %vm3966 = vmor %vm3694, %vm3870
    %vm3967 = vmor %vm3695, %vm3871
    %vm3968 = vmor %vm3696, %vm3872
    %vm3969 = vmor %vm3697, %vm3873
    %vm3970 = vcmp.lt.s32.totalorder %v142, 16
    %vm3971 = vcmp.lt.s32.totalorder %v143, 16
    %vm3972 = vcmp.lt.s32.totalorder %v144, 16
    %vm3973 = vcmp.lt.s32.totalorder %v145, 16
    %vm3974 = vcmp.lt.s32.totalorder %v146, 16
    %vm3975 = vcmp.lt.s32.totalorder %v147, 16
    %vm3976 = vcmp.lt.s32.totalorder %v148, 16
    %vm3977 = vcmp.lt.s32.totalorder %v149, 16
    %vm3978 = vcmp.lt.s32.totalorder %v150, 16
    %vm3979 = vcmp.lt.s32.totalorder %v151, 16
    %vm3980 = vcmp.lt.s32.totalorder %v152, 16
    %vm3981 = vcmp.lt.s32.totalorder %v153, 16
    %vm3982 = vcmp.lt.s32.totalorder %v154, 16
    %vm3983 = vcmp.lt.s32.totalorder %v155, 16
    %vm3984 = vcmp.lt.s32.totalorder %v156, 16
    %vm3985 = vcmp.lt.s32.totalorder %v157, 16
    %v3986 = vsel %vm3970, 1, 0
    %v3987 = vsel %vm3971, 1, 0
    %v3988 = vsel %vm3972, 1, 0
    %v3989 = vsel %vm3973, 1, 0
    %v3990 = vsel %vm3974, 1, 0
    %v3991 = vsel %vm3975, 1, 0
    %v3992 = vsel %vm3976, 1, 0
    %v3993 = vsel %vm3977, 1, 0
    %v3994 = vsel %vm3978, 1, 0
    %v3995 = vsel %vm3979, 1, 0
    %v3996 = vsel %vm3980, 1, 0
    %v3997 = vsel %vm3981, 1, 0
    %v3998 = vsel %vm3982, 1, 0
    %v3999 = vsel %vm3983, 1, 0
    %v4000 = vsel %vm3984, 1, 0
    %v4001 = vsel %vm3985, 1, 0
    %v4002 = vrot.slane %v3986, 7
    %v4003 = vrot.slane %v4002, 4
    %v4004 = vrot.slane %v3987, 7
    %v4005 = vrot.slane %v4004, 4
    %v4006 = vrot.slane %v3988, 7
    %v4007 = vrot.slane %v4006, 4
    %v4008 = vrot.slane %v3989, 7
    %v4009 = vrot.slane %v4008, 4
    %v4010 = vrot.slane %v3990, 7
    %v4011 = vrot.slane %v4010, 4
    %v4012 = vrot.slane %v3991, 7
    %v4013 = vrot.slane %v4012, 4
    %v4014 = vrot.slane %v3992, 7
    %v4015 = vrot.slane %v4014, 4
    %v4016 = vrot.slane %v3993, 7
    %v4017 = vrot.slane %v4016, 4
    %v4018 = vrot.slane %v3994, 7
    %v4019 = vrot.slane %v4018, 4
    %v4020 = vrot.slane %v3995, 7
    %v4021 = vrot.slane %v4020, 4
    %v4022 = vrot.slane %v3996, 7
    %v4023 = vrot.slane %v4022, 4
    %v4024 = vrot.slane %v3997, 7
    %v4025 = vrot.slane %v4024, 4
    %v4026 = vrot.slane %v3998, 7
    %v4027 = vrot.slane %v4026, 4
    %v4028 = vrot.slane %v3999, 7
    %v4029 = vrot.slane %v4028, 4
    %v4030 = vrot.slane %v4000, 7
    %v4031 = vrot.slane %v4030, 4
    %v4032 = vrot.slane %v4001, 7
    %v4033 = vrot.slane %v4032, 4
    %vm4034 = vcmp.ne.s32.totalorder %v4003, 0
    %vm4035 = vcmp.ne.s32.totalorder %v4005, 0
    %vm4036 = vcmp.ne.s32.totalorder %v4007, 0
    %vm4037 = vcmp.ne.s32.totalorder %v4009, 0
    %vm4038 = vcmp.ne.s32.totalorder %v4011, 0
    %vm4039 = vcmp.ne.s32.totalorder %v4013, 0
    %vm4040 = vcmp.ne.s32.totalorder %v4015, 0
    %vm4041 = vcmp.ne.s32.totalorder %v4017, 0
    %vm4042 = vcmp.ne.s32.totalorder %v4019, 0
    %vm4043 = vcmp.ne.s32.totalorder %v4021, 0
    %vm4044 = vcmp.ne.s32.totalorder %v4023, 0
    %vm4045 = vcmp.ne.s32.totalorder %v4025, 0
    %vm4046 = vcmp.ne.s32.totalorder %v4027, 0
    %vm4047 = vcmp.ne.s32.totalorder %v4029, 0
    %vm4048 = vcmp.ne.s32.totalorder %v4031, 0
    %vm4049 = vcmp.ne.s32.totalorder %v4033, 0
    %vm4050 = vmand %vm3970, %vm4034
    %vm4051 = vmand %vm3971, %vm4035
    %vm4052 = vmand %vm3972, %vm4036
    %vm4053 = vmand %vm3973, %vm4037
    %vm4054 = vmand %vm3974, %vm4038
    %vm4055 = vmand %vm3975, %vm4039
    %vm4056 = vmand %vm3976, %vm4040
    %vm4057 = vmand %vm3977, %vm4041
    %vm4058 = vmand %vm3978, %vm4042
    %vm4059 = vmand %vm3979, %vm4043
    %vm4060 = vmand %vm3980, %vm4044
    %vm4061 = vmand %vm3981, %vm4045
    %vm4062 = vmand %vm3982, %vm4046
    %vm4063 = vmand %vm3983, %vm4047
    %vm4064 = vmand %vm3984, %vm4048
    %vm4065 = vmand %vm3985, %vm4049
    %v4066 = vsel %vm4050, 1, 0
    %v4067 = vsel %vm4051, 1, 0
    %v4068 = vsel %vm4052, 1, 0
    %v4069 = vsel %vm4053, 1, 0
    %v4070 = vsel %vm4054, 1, 0
    %v4071 = vsel %vm4055, 1, 0
    %v4072 = vsel %vm4056, 1, 0
    %v4073 = vsel %vm4057, 1, 0
    %v4074 = vsel %vm4058, 1, 0
    %v4075 = vsel %vm4059, 1, 0
    %v4076 = vsel %vm4060, 1, 0
    %v4077 = vsel %vm4061, 1, 0
    %v4078 = vsel %vm4062, 1, 0
    %v4079 = vsel %vm4063, 1, 0
    %v4080 = vsel %vm4064, 1, 0
    %v4081 = vsel %vm4065, 1, 0
    %v4082 = vperm.slane %v4066, 0
    %v4083 = vperm.slane %v4066, 4
    %v4084 = vperm.slane %v4067, 0
    %v4085 = vperm.slane %v4067, 4
    %v4086 = vperm.slane %v4068, 0
    %v4087 = vperm.slane %v4068, 4
    %v4088 = vperm.slane %v4069, 0
    %v4089 = vperm.slane %v4069, 4
    %v4090 = vperm.slane %v4070, 0
    %v4091 = vperm.slane %v4070, 4
    %v4092 = vperm.slane %v4071, 0
    %v4093 = vperm.slane %v4071, 4
    %v4094 = vperm.slane %v4072, 0
    %v4095 = vperm.slane %v4072, 4
    %v4096 = vperm.slane %v4073, 0
    %v4097 = vperm.slane %v4073, 4
    %v4098 = vperm.slane %v4074, 0
    %v4099 = vperm.slane %v4074, 4
    %v4100 = vperm.slane %v4075, 0
    %v4101 = vperm.slane %v4075, 4
    %v4102 = vperm.slane %v4076, 0
    %v4103 = vperm.slane %v4076, 4
    %v4104 = vperm.slane %v4077, 0
    %v4105 = vperm.slane %v4077, 4
    %v4106 = vperm.slane %v4078, 0
    %v4107 = vperm.slane %v4078, 4
    %v4108 = vperm.slane %v4079, 0
    %v4109 = vperm.slane %v4079, 4
    %v4110 = vperm.slane %v4080, 0
    %v4111 = vperm.slane %v4080, 4
    %v4112 = vperm.slane %v4081, 0
    %v4113 = vperm.slane %v4081, 4
    %v4114 = vperm.slane %v4082, 0
    %v4115 = vperm.slane %v4083, 0
    %v4116 = vperm.slane %v4084, 0
    %v4117 = vperm.slane %v4085, 0
    %v4118 = vperm.slane %v4086, 0
    %v4119 = vperm.slane %v4087, 0
    %v4120 = vperm.slane %v4088, 0
    %v4121 = vperm.slane %v4089, 0
    %v4122 = vperm.slane %v4090, 0
    %v4123 = vperm.slane %v4091, 0
    %v4124 = vperm.slane %v4092, 0
    %v4125 = vperm.slane %v4093, 0
    %v4126 = vperm.slane %v4094, 0
    %v4127 = vperm.slane %v4095, 0
    %v4128 = vperm.slane %v4096, 0
    %v4129 = vperm.slane %v4097, 0
    %v4130 = vperm.slane %v4098, 0
    %v4131 = vperm.slane %v4099, 0
    %v4132 = vperm.slane %v4100, 0
    %v4133 = vperm.slane %v4101, 0
    %v4134 = vperm.slane %v4102, 0
    %v4135 = vperm.slane %v4103, 0
    %v4136 = vperm.slane %v4104, 0
    %v4137 = vperm.slane %v4105, 0
    %v4138 = vperm.slane %v4106, 0
    %v4139 = vperm.slane %v4107, 0
    %v4140 = vperm.slane %v4108, 0
    %v4141 = vperm.slane %v4109, 0
    %v4142 = vperm.slane %v4110, 0
    %v4143 = vperm.slane %v4111, 0
    %v4144 = vperm.slane %v4112, 0
    %v4145 = vperm.slane %v4113, 0
    %vm4146 = vcmp.eq.s32.totalorder %v4114, 1
    %vm4147 = vcmp.eq.s32.totalorder %v4115, 1
    %vm4148 = vcmp.eq.s32.totalorder %v4116, 1
    %vm4149 = vcmp.eq.s32.totalorder %v4117, 1
    %vm4150 = vcmp.eq.s32.totalorder %v4118, 1
    %vm4151 = vcmp.eq.s32.totalorder %v4119, 1
    %vm4152 = vcmp.eq.s32.totalorder %v4120, 1
    %vm4153 = vcmp.eq.s32.totalorder %v4121, 1
    %vm4154 = vcmp.eq.s32.totalorder %v4122, 1
    %vm4155 = vcmp.eq.s32.totalorder %v4123, 1
    %vm4156 = vcmp.eq.s32.totalorder %v4124, 1
    %vm4157 = vcmp.eq.s32.totalorder %v4125, 1
    %vm4158 = vcmp.eq.s32.totalorder %v4126, 1
    %vm4159 = vcmp.eq.s32.totalorder %v4127, 1
    %vm4160 = vcmp.eq.s32.totalorder %v4128, 1
    %vm4161 = vcmp.eq.s32.totalorder %v4129, 1
    %vm4162 = vcmp.eq.s32.totalorder %v4130, 1
    %vm4163 = vcmp.eq.s32.totalorder %v4131, 1
    %vm4164 = vcmp.eq.s32.totalorder %v4132, 1
    %vm4165 = vcmp.eq.s32.totalorder %v4133, 1
    %vm4166 = vcmp.eq.s32.totalorder %v4134, 1
    %vm4167 = vcmp.eq.s32.totalorder %v4135, 1
    %vm4168 = vcmp.eq.s32.totalorder %v4136, 1
    %vm4169 = vcmp.eq.s32.totalorder %v4137, 1
    %vm4170 = vcmp.eq.s32.totalorder %v4138, 1
    %vm4171 = vcmp.eq.s32.totalorder %v4139, 1
    %vm4172 = vcmp.eq.s32.totalorder %v4140, 1
    %vm4173 = vcmp.eq.s32.totalorder %v4141, 1
    %vm4174 = vcmp.eq.s32.totalorder %v4142, 1
    %vm4175 = vcmp.eq.s32.totalorder %v4143, 1
    %vm4176 = vcmp.eq.s32.totalorder %v4144, 1
    %vm4177 = vcmp.eq.s32.totalorder %v4145, 1
    %vm4178 = vmand %vm3874, %vm4146
    %vm4179 = vmand %vm3875, %vm4147
    %vm4180 = vmand %vm3876, %vm4148
    %vm4181 = vmand %vm3877, %vm4149
    %vm4182 = vmand %vm3878, %vm4150
    %vm4183 = vmand %vm3879, %vm4151
    %vm4184 = vmand %vm3880, %vm4152
    %vm4185 = vmand %vm3881, %vm4153
    %vm4186 = vmand %vm3882, %vm4154
    %vm4187 = vmand %vm3883, %vm4155
    %vm4188 = vmand %vm3884, %vm4156
    %vm4189 = vmand %vm3885, %vm4157
    %vm4190 = vmand %vm3886, %vm4158
    %vm4191 = vmand %vm3887, %vm4159
    %vm4192 = vmand %vm3888, %vm4160
    %vm4193 = vmand %vm3889, %vm4161
    %vm4194 = vmand %vm3890, %vm4162
    %vm4195 = vmand %vm3891, %vm4163
    %vm4196 = vmand %vm3892, %vm4164
    %vm4197 = vmand %vm3893, %vm4165
    %vm4198 = vmand %vm3894, %vm4166
    %vm4199 = vmand %vm3895, %vm4167
    %vm4200 = vmand %vm3896, %vm4168
    %vm4201 = vmand %vm3897, %vm4169
    %vm4202 = vmand %vm3898, %vm4170
    %vm4203 = vmand %vm3899, %vm4171
    %vm4204 = vmand %vm3900, %vm4172
    %vm4205 = vmand %vm3901, %vm4173
    %vm4206 = vmand %vm3902, %vm4174
    %vm4207 = vmand %vm3903, %vm4175
    %vm4208 = vmand %vm3904, %vm4176
    %vm4209 = vmand %vm3905, %vm4177
    %vm4210 = vmand %vm3906, %vm4146
    %vm4211 = vmand %vm3907, %vm4147
    %vm4212 = vmand %vm3908, %vm4148
    %vm4213 = vmand %vm3909, %vm4149
    %vm4214 = vmand %vm3910, %vm4150
    %vm4215 = vmand %vm3911, %vm4151
    %vm4216 = vmand %vm3912, %vm4152
    %vm4217 = vmand %vm3913, %vm4153
    %vm4218 = vmand %vm3914, %vm4154
    %vm4219 = vmand %vm3915, %vm4155
    %vm4220 = vmand %vm3916, %vm4156
    %vm4221 = vmand %vm3917, %vm4157
    %vm4222 = vmand %vm3918, %vm4158
    %vm4223 = vmand %vm3919, %vm4159
    %vm4224 = vmand %vm3920, %vm4160
    %vm4225 = vmand %vm3921, %vm4161
    %vm4226 = vmand %vm3922, %vm4162
    %vm4227 = vmand %vm3923, %vm4163
    %vm4228 = vmand %vm3924, %vm4164
    %vm4229 = vmand %vm3925, %vm4165
    %vm4230 = vmand %vm3926, %vm4166
    %vm4231 = vmand %vm3927, %vm4167
    %vm4232 = vmand %vm3928, %vm4168
    %vm4233 = vmand %vm3929, %vm4169
    %vm4234 = vmand %vm3930, %vm4170
    %vm4235 = vmand %vm3931, %vm4171
    %vm4236 = vmand %vm3932, %vm4172
    %vm4237 = vmand %vm3933, %vm4173
    %vm4238 = vmand %vm3934, %vm4174
    %vm4239 = vmand %vm3935, %vm4175
    %vm4240 = vmand %vm3936, %vm4176
    %vm4241 = vmand %vm3937, %vm4177
    %vm4242 = vmand %vm3938, %vm4146
    %vm4243 = vmand %vm3939, %vm4147
    %vm4244 = vmand %vm3940, %vm4148
    %vm4245 = vmand %vm3941, %vm4149
    %vm4246 = vmand %vm3942, %vm4150
    %vm4247 = vmand %vm3943, %vm4151
    %vm4248 = vmand %vm3944, %vm4152
    %vm4249 = vmand %vm3945, %vm4153
    %vm4250 = vmand %vm3946, %vm4154
    %vm4251 = vmand %vm3947, %vm4155
    %vm4252 = vmand %vm3948, %vm4156
    %vm4253 = vmand %vm3949, %vm4157
    %vm4254 = vmand %vm3950, %vm4158
    %vm4255 = vmand %vm3951, %vm4159
    %vm4256 = vmand %vm3952, %vm4160
    %vm4257 = vmand %vm3953, %vm4161
    %vm4258 = vmand %vm3954, %vm4162
    %vm4259 = vmand %vm3955, %vm4163
    %vm4260 = vmand %vm3956, %vm4164
    %vm4261 = vmand %vm3957, %vm4165
    %vm4262 = vmand %vm3958, %vm4166
    %vm4263 = vmand %vm3959, %vm4167
    %vm4264 = vmand %vm3960, %vm4168
    %vm4265 = vmand %vm3961, %vm4169
    %vm4266 = vmand %vm3962, %vm4170
    %vm4267 = vmand %vm3963, %vm4171
    %vm4268 = vmand %vm3964, %vm4172
    %vm4269 = vmand %vm3965, %vm4173
    %vm4270 = vmand %vm3966, %vm4174
    %vm4271 = vmand %vm3967, %vm4175
    %vm4272 = vmand %vm3968, %vm4176
    %vm4273 = vmand %vm3969, %vm4177
    %v4274 = vsel %vm4178, -0.00025, 0.0
    %v4275 = vsel %vm4179, -0.00025, 0.0
    %v4276 = vsel %vm4180, -0.00025, 0.0
    %v4277 = vsel %vm4181, -0.00025, 0.0
    %v4278 = vsel %vm4182, -0.00025, 0.0
    %v4279 = vsel %vm4183, -0.00025, 0.0
    %v4280 = vsel %vm4184, -0.00025, 0.0
    %v4281 = vsel %vm4185, -0.00025, 0.0
    %v4282 = vsel %vm4186, -0.00025, 0.0
    %v4283 = vsel %vm4187, -0.00025, 0.0
    %v4284 = vsel %vm4188, -0.00025, 0.0
    %v4285 = vsel %vm4189, -0.00025, 0.0
    %v4286 = vsel %vm4190, -0.00025, 0.0
    %v4287 = vsel %vm4191, -0.00025, 0.0
    %v4288 = vsel %vm4192, -0.00025, 0.0
    %v4289 = vsel %vm4193, -0.00025, 0.0
    %v4290 = vsel %vm4194, -0.00025, 0.0
    %v4291 = vsel %vm4195, -0.00025, 0.0
    %v4292 = vsel %vm4196, -0.00025, 0.0
    %v4293 = vsel %vm4197, -0.00025, 0.0
    %v4294 = vsel %vm4198, -0.00025, 0.0
    %v4295 = vsel %vm4199, -0.00025, 0.0
    %v4296 = vsel %vm4200, -0.00025, 0.0
    %v4297 = vsel %vm4201, -0.00025, 0.0
    %v4298 = vsel %vm4202, -0.00025, 0.0
    %v4299 = vsel %vm4203, -0.00025, 0.0
    %v4300 = vsel %vm4204, -0.00025, 0.0
    %v4301 = vsel %vm4205, -0.00025, 0.0
    %v4302 = vsel %vm4206, -0.00025, 0.0
    %v4303 = vsel %vm4207, -0.00025, 0.0
    %v4304 = vsel %vm4208, -0.00025, 0.0
    %v4305 = vsel %vm4209, -0.00025, 0.0
    %v4306 = vsel %vm4210, -0.00025, 0.0
    %v4307 = vsel %vm4211, -0.00025, 0.0
    %v4308 = vsel %vm4212, -0.00025, 0.0
    %v4309 = vsel %vm4213, -0.00025, 0.0
    %v4310 = vsel %vm4214, -0.00025, 0.0
    %v4311 = vsel %vm4215, -0.00025, 0.0
    %v4312 = vsel %vm4216, -0.00025, 0.0
    %v4313 = vsel %vm4217, -0.00025, 0.0
    %v4314 = vsel %vm4218, -0.00025, 0.0
    %v4315 = vsel %vm4219, -0.00025, 0.0
    %v4316 = vsel %vm4220, -0.00025, 0.0
    %v4317 = vsel %vm4221, -0.00025, 0.0
    %v4318 = vsel %vm4222, -0.00025, 0.0
    %v4319 = vsel %vm4223, -0.00025, 0.0
    %v4320 = vsel %vm4224, -0.00025, 0.0
    %v4321 = vsel %vm4225, -0.00025, 0.0
    %v4322 = vsel %vm4226, -0.00025, 0.0
    %v4323 = vsel %vm4227, -0.00025, 0.0
    %v4324 = vsel %vm4228, -0.00025, 0.0
    %v4325 = vsel %vm4229, -0.00025, 0.0
    %v4326 = vsel %vm4230, -0.00025, 0.0
    %v4327 = vsel %vm4231, -0.00025, 0.0
    %v4328 = vsel %vm4232, -0.00025, 0.0
    %v4329 = vsel %vm4233, -0.00025, 0.0
    %v4330 = vsel %vm4234, -0.00025, 0.0
    %v4331 = vsel %vm4235, -0.00025, 0.0
    %v4332 = vsel %vm4236, -0.00025, 0.0
    %v4333 = vsel %vm4237, -0.00025, 0.0
    %v4334 = vsel %vm4238, -0.00025, 0.0
    %v4335 = vsel %vm4239, -0.00025, 0.0
    %v4336 = vsel %vm4240, -0.00025, 0.0
    %v4337 = vsel %vm4241, -0.00025, 0.0
    %v4338 = vsel %vm4242, -0.00025, 0.0
    %v4339 = vsel %vm4243, -0.00025, 0.0
    %v4340 = vsel %vm4244, -0.00025, 0.0
    %v4341 = vsel %vm4245, -0.00025, 0.0
    %v4342 = vsel %vm4246, -0.00025, 0.0
    %v4343 = vsel %vm4247, -0.00025, 0.0
    %v4344 = vsel %vm4248, -0.00025, 0.0
    %v4345 = vsel %vm4249, -0.00025, 0.0
    %v4346 = vsel %vm4250, -0.00025, 0.0
    %v4347 = vsel %vm4251, -0.00025, 0.0
    %v4348 = vsel %vm4252, -0.00025, 0.0
    %v4349 = vsel %vm4253, -0.00025, 0.0
    %v4350 = vsel %vm4254, -0.00025, 0.0
    %v4351 = vsel %vm4255, -0.00025, 0.0
    %v4352 = vsel %vm4256, -0.00025, 0.0
    %v4353 = vsel %vm4257, -0.00025, 0.0
    %v4354 = vsel %vm4258, -0.00025, 0.0
    %v4355 = vsel %vm4259, -0.00025, 0.0
    %v4356 = vsel %vm4260, -0.00025, 0.0
    %v4357 = vsel %vm4261, -0.00025, 0.0
    %v4358 = vsel %vm4262, -0.00025, 0.0
    %v4359 = vsel %vm4263, -0.00025, 0.0
    %v4360 = vsel %vm4264, -0.00025, 0.0
    %v4361 = vsel %vm4265, -0.00025, 0.0
    %v4362 = vsel %vm4266, -0.00025, 0.0
    %v4363 = vsel %vm4267, -0.00025, 0.0
    %v4364 = vsel %vm4268, -0.00025, 0.0
    %v4365 = vsel %vm4269, -0.00025, 0.0
    %v4366 = vsel %vm4270, -0.00025, 0.0
    %v4367 = vsel %vm4271, -0.00025, 0.0
    %v4368 = vsel %vm4272, -0.00025, 0.0
    %v4369 = vsel %vm4273, -0.00025, 0.0
    %v4370 = vld [vmem:[#allocation2] sm:$0xff]
    %v4371 = vld [vmem:[#allocation2 + $0x8] sm:$0xff]
    %v4372 = vld [vmem:[#allocation2 + $0x10] sm:$0xff]
    %v4373 = vld [vmem:[#allocation2 + $0x18] sm:$0xff]
    %v4374 = vld [vmem:[#allocation2 + $0x20] sm:$0xff]
    %v4375 = vld [vmem:[#allocation2 + $0x28] sm:$0xff]
    %v4376 = vld [vmem:[#allocation2 + $0x30] sm:$0xff]
    %v4377 = vld [vmem:[#allocation2 + $0x38] sm:$0xff]
    %v4378 = vld [vmem:[#allocation2 + $0x40] sm:$0xff]
    %v4379 = vld [vmem:[#allocation2 + $0x48] sm:$0xff]
    %v4380 = vld [vmem:[#allocation2 + $0x50] sm:$0xff]
    %v4381 = vld [vmem:[#allocation2 + $0x58] sm:$0xff]
    %v4382 = vld [vmem:[#allocation2 + $0x60] sm:$0xff]
    %v4383 = vld [vmem:[#allocation2 + $0x68] sm:$0xff]
    %v4384 = vld [vmem:[#allocation2 + $0x70] sm:$0xff]
    %v4385 = vld [vmem:[#allocation2 + $0x78] sm:$0xff]
    %v4386 = vld [vmem:[#allocation2 + $0x80] sm:$0xff]
    %v4387 = vld [vmem:[#allocation2 + $0x88] sm:$0xff]
    %v4388 = vld [vmem:[#allocation2 + $0x90] sm:$0xff]
    %v4389 = vld [vmem:[#allocation2 + $0x98] sm:$0xff]
    %v4390 = vld [vmem:[#allocation2 + $0xa0] sm:$0xff]
    %v4391 = vld [vmem:[#allocation2 + $0xa8] sm:$0xff]
    %v4392 = vld [vmem:[#allocation2 + $0xb0] sm:$0xff]
    %v4393 = vld [vmem:[#allocation2 + $0xb8] sm:$0xff]
    %v4394 = vld [vmem:[#allocation2 + $0xc0] sm:$0xff]
    %v4395 = vld [vmem:[#allocation2 + $0xc8] sm:$0xff]
    %v4396 = vld [vmem:[#allocation2 + $0xd0] sm:$0xff]
    %v4397 = vld [vmem:[#allocation2 + $0xd8] sm:$0xff]
    %v4398 = vld [vmem:[#allocation2 + $0xe0] sm:$0xff]
    %v4399 = vld [vmem:[#allocation2 + $0xe8] sm:$0xff]
    %v4400 = vld [vmem:[#allocation2 + $0xf0] sm:$0xff]
    %v4401 = vld [vmem:[#allocation2 + $0xf8] sm:$0xff]
    %v4402 = vld [vmem:[#allocation2 + $0x100] sm:$0xff]
    %v4403 = vld [vmem:[#allocation2 + $0x108] sm:$0xff]
    %v4404 = vld [vmem:[#allocation2 + $0x110] sm:$0xff]
    %v4405 = vld [vmem:[#allocation2 + $0x118] sm:$0xff]
    %v4406 = vld [vmem:[#allocation2 + $0x120] sm:$0xff]
    %v4407 = vld [vmem:[#allocation2 + $0x128] sm:$0xff]
    %v4408 = vld [vmem:[#allocation2 + $0x130] sm:$0xff]
    %v4409 = vld [vmem:[#allocation2 + $0x138] sm:$0xff]
    %v4410 = vld [vmem:[#allocation2 + $0x140] sm:$0xff]
    %v4411 = vld [vmem:[#allocation2 + $0x148] sm:$0xff]
    %v4412 = vld [vmem:[#allocation2 + $0x150] sm:$0xff]
    %v4413 = vld [vmem:[#allocation2 + $0x158] sm:$0xff]
    %v4414 = vld [vmem:[#allocation2 + $0x160] sm:$0xff]
    %v4415 = vld [vmem:[#allocation2 + $0x168] sm:$0xff]
    %v4416 = vld [vmem:[#allocation2 + $0x170] sm:$0xff]
    %v4417 = vld [vmem:[#allocation2 + $0x178] sm:$0xff]
    %v4418 = vld [vmem:[#allocation2 + $0x180] sm:$0xff]
    %v4419 = vld [vmem:[#allocation2 + $0x188] sm:$0xff]
    %v4420 = vld [vmem:[#allocation2 + $0x190] sm:$0xff]
    %v4421 = vld [vmem:[#allocation2 + $0x198] sm:$0xff]
    %v4422 = vld [vmem:[#allocation2 + $0x1a0] sm:$0xff]
    %v4423 = vld [vmem:[#allocation2 + $0x1a8] sm:$0xff]
    %v4424 = vld [vmem:[#allocation2 + $0x1b0] sm:$0xff]
    %v4425 = vld [vmem:[#allocation2 + $0x1b8] sm:$0xff]
    %v4426 = vld [vmem:[#allocation2 + $0x1c0] sm:$0xff]
    %v4427 = vld [vmem:[#allocation2 + $0x1c8] sm:$0xff]
    %v4428 = vld [vmem:[#allocation2 + $0x1d0] sm:$0xff]
    %v4429 = vld [vmem:[#allocation2 + $0x1d8] sm:$0xff]
    %v4430 = vld [vmem:[#allocation2 + $0x1e0] sm:$0xff]
    %v4431 = vld [vmem:[#allocation2 + $0x1e8] sm:$0xff]
    %v4432 = vld [vmem:[#allocation2 + $0x1f0] sm:$0xff]
    %v4433 = vld [vmem:[#allocation2 + $0x1f8] sm:$0xff]
    %v4434 = vld [vmem:[#allocation2 + $0x200] sm:$0xff]
    %v4435 = vld [vmem:[#allocation2 + $0x208] sm:$0xff]
    %v4436 = vld [vmem:[#allocation2 + $0x210] sm:$0xff]
    %v4437 = vld [vmem:[#allocation2 + $0x218] sm:$0xff]
    %v4438 = vld [vmem:[#allocation2 + $0x220] sm:$0xff]
    %v4439 = vld [vmem:[#allocation2 + $0x228] sm:$0xff]
    %v4440 = vld [vmem:[#allocation2 + $0x230] sm:$0xff]
    %v4441 = vld [vmem:[#allocation2 + $0x238] sm:$0xff]
    %v4442 = vld [vmem:[#allocation2 + $0x240] sm:$0xff]
    %v4443 = vld [vmem:[#allocation2 + $0x248] sm:$0xff]
    %v4444 = vld [vmem:[#allocation2 + $0x250] sm:$0xff]
    %v4445 = vld [vmem:[#allocation2 + $0x258] sm:$0xff]
    %v4446 = vld [vmem:[#allocation2 + $0x260] sm:$0xff]
    %v4447 = vld [vmem:[#allocation2 + $0x268] sm:$0xff]
    %v4448 = vld [vmem:[#allocation2 + $0x270] sm:$0xff]
    %v4449 = vld [vmem:[#allocation2 + $0x278] sm:$0xff]
    %v4450 = vld [vmem:[#allocation2 + $0x280] sm:$0xff]
    %v4451 = vld [vmem:[#allocation2 + $0x288] sm:$0xff]
    %v4452 = vld [vmem:[#allocation2 + $0x290] sm:$0xff]
    %v4453 = vld [vmem:[#allocation2 + $0x298] sm:$0xff]
    %v4454 = vld [vmem:[#allocation2 + $0x2a0] sm:$0xff]
    %v4455 = vld [vmem:[#allocation2 + $0x2a8] sm:$0xff]
    %v4456 = vld [vmem:[#allocation2 + $0x2b0] sm:$0xff]
    %v4457 = vld [vmem:[#allocation2 + $0x2b8] sm:$0xff]
    %v4458 = vld [vmem:[#allocation2 + $0x2c0] sm:$0xff]
    %v4459 = vld [vmem:[#allocation2 + $0x2c8] sm:$0xff]
    %v4460 = vld [vmem:[#allocation2 + $0x2d0] sm:$0xff]
    %v4461 = vld [vmem:[#allocation2 + $0x2d8] sm:$0xff]
    %v4462 = vld [vmem:[#allocation2 + $0x2e0] sm:$0xff]
    %v4463 = vld [vmem:[#allocation2 + $0x2e8] sm:$0xff]
    %v4464 = vld [vmem:[#allocation2 + $0x2f0] sm:$0xff]
    %v4465 = vld [vmem:[#allocation2 + $0x2f8] sm:$0xff]
    %v4466 = vmul.f32 %v2452, %v4274
    %v4467 = vmul.f32 %v2478, %v4275
    %v4468 = vmul.f32 %v2504, %v4276
    %v4469 = vmul.f32 %v2530, %v4277
    %v4470 = vmul.f32 %v2556, %v4278
    %v4471 = vmul.f32 %v2582, %v4279
    %v4472 = vmul.f32 %v2608, %v4280
    %v4473 = vmul.f32 %v2634, %v4281
    %v4474 = vmul.f32 %v2660, %v4282
    %v4475 = vmul.f32 %v2686, %v4283
    %v4476 = vmul.f32 %v2712, %v4284
    %v4477 = vmul.f32 %v2738, %v4285
    %v4478 = vmul.f32 %v2764, %v4286
    %v4479 = vmul.f32 %v2790, %v4287
    %v4480 = vmul.f32 %v2816, %v4288
    %v4481 = vmul.f32 %v2842, %v4289
    %v4482 = vmul.f32 %v2868, %v4290
    %v4483 = vmul.f32 %v2894, %v4291
    %v4484 = vmul.f32 %v2920, %v4292
    %v4485 = vmul.f32 %v2946, %v4293
    %v4486 = vmul.f32 %v2972, %v4294
    %v4487 = vmul.f32 %v2998, %v4295
    %v4488 = vmul.f32 %v3024, %v4296
    %v4489 = vmul.f32 %v3050, %v4297
    %v4490 = vmul.f32 %v3076, %v4298
    %v4491 = vmul.f32 %v3102, %v4299
    %v4492 = vmul.f32 %v3128, %v4300
    %v4493 = vmul.f32 %v3154, %v4301
    %v4494 = vmul.f32 %v3180, %v4302
    %v4495 = vmul.f32 %v3206, %v4303
    %v4496 = vmul.f32 %v3232, %v4304
    %v4497 = vmul.f32 %v3258, %v4305
    %v4498 = vmul.f32 %v2455, %v4306
    %v4499 = vmul.f32 %v2481, %v4307
    %v4500 = vmul.f32 %v2507, %v4308
    %v4501 = vmul.f32 %v2533, %v4309
    %v4502 = vmul.f32 %v2559, %v4310
    %v4503 = vmul.f32 %v2585, %v4311
    %v4504 = vmul.f32 %v2611, %v4312
    %v4505 = vmul.f32 %v2637, %v4313
    %v4506 = vmul.f32 %v2663, %v4314
    %v4507 = vmul.f32 %v2689, %v4315
    %v4508 = vmul.f32 %v2715, %v4316
    %v4509 = vmul.f32 %v2741, %v4317
    %v4510 = vmul.f32 %v2767, %v4318
    %v4511 = vmul.f32 %v2793, %v4319
    %v4512 = vmul.f32 %v2819, %v4320
    %v4513 = vmul.f32 %v2845, %v4321
    %v4514 = vmul.f32 %v2871, %v4322
    %v4515 = vmul.f32 %v2897, %v4323
    %v4516 = vmul.f32 %v2923, %v4324
    %v4517 = vmul.f32 %v2949, %v4325
    %v4518 = vmul.f32 %v2975, %v4326
    %v4519 = vmul.f32 %v3001, %v4327
    %v4520 = vmul.f32 %v3027, %v4328
    %v4521 = vmul.f32 %v3053, %v4329
    %v4522 = vmul.f32 %v3079, %v4330
    %v4523 = vmul.f32 %v3105, %v4331
    %v4524 = vmul.f32 %v3131, %v4332
    %v4525 = vmul.f32 %v3157, %v4333
    %v4526 = vmul.f32 %v3183, %v4334
    %v4527 = vmul.f32 %v3209, %v4335
    %v4528 = vmul.f32 %v3235, %v4336
    %v4529 = vmul.f32 %v3261, %v4337
    %v4530 = vmul.f32 %v2458, %v4338
    %v4531 = vmul.f32 %v2484, %v4339
    %v4532 = vmul.f32 %v2510, %v4340
    %v4533 = vmul.f32 %v2536, %v4341
    %v4534 = vmul.f32 %v2562, %v4342
    %v4535 = vmul.f32 %v2588, %v4343
    %v4536 = vmul.f32 %v2614, %v4344
    %v4537 = vmul.f32 %v2640, %v4345
    %v4538 = vmul.f32 %v2666, %v4346
    %v4539 = vmul.f32 %v2692, %v4347
    %v4540 = vmul.f32 %v2718, %v4348
    %v4541 = vmul.f32 %v2744, %v4349
    %v4542 = vmul.f32 %v2770, %v4350
    %v4543 = vmul.f32 %v2796, %v4351
    %v4544 = vmul.f32 %v2822, %v4352
    %v4545 = vmul.f32 %v2848, %v4353
    %v4546 = vmul.f32 %v2874, %v4354
    %v4547 = vmul.f32 %v2900, %v4355
    %v4548 = vmul.f32 %v2926, %v4356
    %v4549 = vmul.f32 %v2952, %v4357
    %v4550 = vmul.f32 %v2978, %v4358
    %v4551 = vmul.f32 %v3004, %v4359
    %v4552 = vmul.f32 %v3030, %v4360
    %v4553 = vmul.f32 %v3056, %v4361
    %v4554 = vmul.f32 %v3082, %v4362
    %v4555 = vmul.f32 %v3108, %v4363
    %v4556 = vmul.f32 %v3134, %v4364
    %v4557 = vmul.f32 %v3160, %v4365
    %v4558 = vmul.f32 %v3186, %v4366
    %v4559 = vmul.f32 %v3212, %v4367
    %v4560 = vmul.f32 %v3238, %v4368
    %v4561 = vmul.f32 %v3264, %v4369
    %v4562 = vadd.f32 %v4370, %v4466
    %v4563 = vadd.f32 %v4371, %v4467
    %v4564 = vadd.f32 %v4372, %v4468
    %v4565 = vadd.f32 %v4373, %v4469
    %v4566 = vadd.f32 %v4374, %v4470
    %v4567 = vadd.f32 %v4375, %v4471
    %v4568 = vadd.f32 %v4376, %v4472
    %v4569 = vadd.f32 %v4377, %v4473
    %v4570 = vadd.f32 %v4378, %v4474
    %v4571 = vadd.f32 %v4379, %v4475
    %v4572 = vadd.f32 %v4380, %v4476
    %v4573 = vadd.f32 %v4381, %v4477
    %v4574 = vadd.f32 %v4382, %v4478
    %v4575 = vadd.f32 %v4383, %v4479
    %v4576 = vadd.f32 %v4384, %v4480
    %v4577 = vadd.f32 %v4385, %v4481
    %v4578 = vadd.f32 %v4386, %v4482
    %v4579 = vadd.f32 %v4387, %v4483
    %v4580 = vadd.f32 %v4388, %v4484
    %v4581 = vadd.f32 %v4389, %v4485
    %v4582 = vadd.f32 %v4390, %v4486
    %v4583 = vadd.f32 %v4391, %v4487
    %v4584 = vadd.f32 %v4392, %v4488
    %v4585 = vadd.f32 %v4393, %v4489
    %v4586 = vadd.f32 %v4394, %v4490
    %v4587 = vadd.f32 %v4395, %v4491
    %v4588 = vadd.f32 %v4396, %v4492
    %v4589 = vadd.f32 %v4397, %v4493
    %v4590 = vadd.f32 %v4398, %v4494
    %v4591 = vadd.f32 %v4399, %v4495
    %v4592 = vadd.f32 %v4400, %v4496
    %v4593 = vadd.f32 %v4401, %v4497
    %v4594 = vadd.f32 %v4402, %v4498
    %v4595 = vadd.f32 %v4403, %v4499
    %v4596 = vadd.f32 %v4404, %v4500
    %v4597 = vadd.f32 %v4405, %v4501
    %v4598 = vadd.f32 %v4406, %v4502
    %v4599 = vadd.f32 %v4407, %v4503
    %v4600 = vadd.f32 %v4408, %v4504
    %v4601 = vadd.f32 %v4409, %v4505
    %v4602 = vadd.f32 %v4410, %v4506
    %v4603 = vadd.f32 %v4411, %v4507
    %v4604 = vadd.f32 %v4412, %v4508
    %v4605 = vadd.f32 %v4413, %v4509
    %v4606 = vadd.f32 %v4414, %v4510
    %v4607 = vadd.f32 %v4415, %v4511
    %v4608 = vadd.f32 %v4416, %v4512
    %v4609 = vadd.f32 %v4417, %v4513
    %v4610 = vadd.f32 %v4418, %v4514
    %v4611 = vadd.f32 %v4419, %v4515
    %v4612 = vadd.f32 %v4420, %v4516
    %v4613 = vadd.f32 %v4421, %v4517
    %v4614 = vadd.f32 %v4422, %v4518
    %v4615 = vadd.f32 %v4423, %v4519
    %v4616 = vadd.f32 %v4424, %v4520
    %v4617 = vadd.f32 %v4425, %v4521
    %v4618 = vadd.f32 %v4426, %v4522
    %v4619 = vadd.f32 %v4427, %v4523
    %v4620 = vadd.f32 %v4428, %v4524
    %v4621 = vadd.f32 %v4429, %v4525
    %v4622 = vadd.f32 %v4430, %v4526
    %v4623 = vadd.f32 %v4431, %v4527
    %v4624 = vadd.f32 %v4432, %v4528
    %v4625 = vadd.f32 %v4433, %v4529
    %v4626 = vadd.f32 %v4434, %v4530
    %v4627 = vadd.f32 %v4435, %v4531
    %v4628 = vadd.f32 %v4436, %v4532
    %v4629 = vadd.f32 %v4437, %v4533
    %v4630 = vadd.f32 %v4438, %v4534
    %v4631 = vadd.f32 %v4439, %v4535
    %v4632 = vadd.f32 %v4440, %v4536
    %v4633 = vadd.f32 %v4441, %v4537
    %v4634 = vadd.f32 %v4442, %v4538
    %v4635 = vadd.f32 %v4443, %v4539
    %v4636 = vadd.f32 %v4444, %v4540
    %v4637 = vadd.f32 %v4445, %v4541
    %v4638 = vadd.f32 %v4446, %v4542
    %v4639 = vadd.f32 %v4447, %v4543
    %v4640 = vadd.f32 %v4448, %v4544
    %v4641 = vadd.f32 %v4449, %v4545
    %v4642 = vadd.f32 %v4450, %v4546
    %v4643 = vadd.f32 %v4451, %v4547
    %v4644 = vadd.f32 %v4452, %v4548
    %v4645 = vadd.f32 %v4453, %v4549
    %v4646 = vadd.f32 %v4454, %v4550
    %v4647 = vadd.f32 %v4455, %v4551
    %v4648 = vadd.f32 %v4456, %v4552
    %v4649 = vadd.f32 %v4457, %v4553
    %v4650 = vadd.f32 %v4458, %v4554
    %v4651 = vadd.f32 %v4459, %v4555
    %v4652 = vadd.f32 %v4460, %v4556
    %v4653 = vadd.f32 %v4461, %v4557
    %v4654 = vadd.f32 %v4462, %v4558
    %v4655 = vadd.f32 %v4463, %v4559
    %v4656 = vadd.f32 %v4464, %v4560
    %v4657 = vadd.f32 %v4465, %v4561
    %4658 = vst [vmem:[#allocation2] sm:$0xff] %v4562
    %4659 = vst [vmem:[#allocation2 + $0x8] sm:$0xff] %v4563
    %4660 = vst [vmem:[#allocation2 + $0x10] sm:$0xff] %v4564
    %4661 = vst [vmem:[#allocation2 + $0x18] sm:$0xff] %v4565
    %4662 = vst [vmem:[#allocation2 + $0x20] sm:$0xff] %v4566
    %4663 = vst [vmem:[#allocation2 + $0x28] sm:$0xff] %v4567
    %4664 = vst [vmem:[#allocation2 + $0x30] sm:$0xff] %v4568
    %4665 = vst [vmem:[#allocation2 + $0x38] sm:$0xff] %v4569
    %4666 = vst [vmem:[#allocation2 + $0x40] sm:$0xff] %v4570
    %4667 = vst [vmem:[#allocation2 + $0x48] sm:$0xff] %v4571
    %4668 = vst [vmem:[#allocation2 + $0x50] sm:$0xff] %v4572
    %4669 = vst [vmem:[#allocation2 + $0x58] sm:$0xff] %v4573
    %4670 = vst [vmem:[#allocation2 + $0x60] sm:$0xff] %v4574
    %4671 = vst [vmem:[#allocation2 + $0x68] sm:$0xff] %v4575
    %4672 = vst [vmem:[#allocation2 + $0x70] sm:$0xff] %v4576
    %4673 = vst [vmem:[#allocation2 + $0x78] sm:$0xff] %v4577
    %4674 = vst [vmem:[#allocation2 + $0x80] sm:$0xff] %v4578
    %4675 = vst [vmem:[#allocation2 + $0x88] sm:$0xff] %v4579
    %4676 = vst [vmem:[#allocation2 + $0x90] sm:$0xff] %v4580
    %4677 = vst [vmem:[#allocation2 + $0x98] sm:$0xff] %v4581
    %4678 = vst [vmem:[#allocation2 + $0xa0] sm:$0xff] %v4582
    %4679 = vst [vmem:[#allocation2 + $0xa8] sm:$0xff] %v4583
    %4680 = vst [vmem:[#allocation2 + $0xb0] sm:$0xff] %v4584
    %4681 = vst [vmem:[#allocation2 + $0xb8] sm:$0xff] %v4585
    %4682 = vst [vmem:[#allocation2 + $0xc0] sm:$0xff] %v4586
    %4683 = vst [vmem:[#allocation2 + $0xc8] sm:$0xff] %v4587
    %4684 = vst [vmem:[#allocation2 + $0xd0] sm:$0xff] %v4588
    %4685 = vst [vmem:[#allocation2 + $0xd8] sm:$0xff] %v4589
    %4686 = vst [vmem:[#allocation2 + $0xe0] sm:$0xff] %v4590
    %4687 = vst [vmem:[#allocation2 + $0xe8] sm:$0xff] %v4591
    %4688 = vst [vmem:[#allocation2 + $0xf0] sm:$0xff] %v4592
    %4689 = vst [vmem:[#allocation2 + $0xf8] sm:$0xff] %v4593
    %4690 = vst [vmem:[#allocation2 + $0x100] sm:$0xff] %v4594
    %4691 = vst [vmem:[#allocation2 + $0x108] sm:$0xff] %v4595
    %4692 = vst [vmem:[#allocation2 + $0x110] sm:$0xff] %v4596
    %4693 = vst [vmem:[#allocation2 + $0x118] sm:$0xff] %v4597
    %4694 = vst [vmem:[#allocation2 + $0x120] sm:$0xff] %v4598
    %4695 = vst [vmem:[#allocation2 + $0x128] sm:$0xff] %v4599
    %4696 = vst [vmem:[#allocation2 + $0x130] sm:$0xff] %v4600
    %4697 = vst [vmem:[#allocation2 + $0x138] sm:$0xff] %v4601
    %4698 = vst [vmem:[#allocation2 + $0x140] sm:$0xff] %v4602
    %4699 = vst [vmem:[#allocation2 + $0x148] sm:$0xff] %v4603
    %4700 = vst [vmem:[#allocation2 + $0x150] sm:$0xff] %v4604
    %4701 = vst [vmem:[#allocation2 + $0x158] sm:$0xff] %v4605
    %4702 = vst [vmem:[#allocation2 + $0x160] sm:$0xff] %v4606
    %4703 = vst [vmem:[#allocation2 + $0x168] sm:$0xff] %v4607
    %4704 = vst [vmem:[#allocation2 + $0x170] sm:$0xff] %v4608
    %4705 = vst [vmem:[#allocation2 + $0x178] sm:$0xff] %v4609
    %4706 = vst [vmem:[#allocation2 + $0x180] sm:$0xff] %v4610
    %4707 = vst [vmem:[#allocation2 + $0x188] sm:$0xff] %v4611
    %4708 = vst [vmem:[#allocation2 + $0x190] sm:$0xff] %v4612
    %4709 = vst [vmem:[#allocation2 + $0x198] sm:$0xff] %v4613
    %4710 = vst [vmem:[#allocation2 + $0x1a0] sm:$0xff] %v4614
    %4711 = vst [vmem:[#allocation2 + $0x1a8] sm:$0xff] %v4615
    %4712 = vst [vmem:[#allocation2 + $0x1b0] sm:$0xff] %v4616
    %4713 = vst [vmem:[#allocation2 + $0x1b8] sm:$0xff] %v4617
    %4714 = vst [vmem:[#allocation2 + $0x1c0] sm:$0xff] %v4618
    %4715 = vst [vmem:[#allocation2 + $0x1c8] sm:$0xff] %v4619
    %4716 = vst [vmem:[#allocation2 + $0x1d0] sm:$0xff] %v4620
    %4717 = vst [vmem:[#allocation2 + $0x1d8] sm:$0xff] %v4621
    %4718 = vst [vmem:[#allocation2 + $0x1e0] sm:$0xff] %v4622
    %4719 = vst [vmem:[#allocation2 + $0x1e8] sm:$0xff] %v4623
    %4720 = vst [vmem:[#allocation2 + $0x1f0] sm:$0xff] %v4624
    %4721 = vst [vmem:[#allocation2 + $0x1f8] sm:$0xff] %v4625
    %4722 = vst [vmem:[#allocation2 + $0x200] sm:$0xff] %v4626
    %4723 = vst [vmem:[#allocation2 + $0x208] sm:$0xff] %v4627
    %4724 = vst [vmem:[#allocation2 + $0x210] sm:$0xff] %v4628
    %4725 = vst [vmem:[#allocation2 + $0x218] sm:$0xff] %v4629
    %4726 = vst [vmem:[#allocation2 + $0x220] sm:$0xff] %v4630
    %4727 = vst [vmem:[#allocation2 + $0x228] sm:$0xff] %v4631
    %4728 = vst [vmem:[#allocation2 + $0x230] sm:$0xff] %v4632
    %4729 = vst [vmem:[#allocation2 + $0x238] sm:$0xff] %v4633
    %4730 = vst [vmem:[#allocation2 + $0x240] sm:$0xff] %v4634
    %4731 = vst [vmem:[#allocation2 + $0x248] sm:$0xff] %v4635
    %4732 = vst [vmem:[#allocation2 + $0x250] sm:$0xff] %v4636
    %4733 = vst [vmem:[#allocation2 + $0x258] sm:$0xff] %v4637
    %4734 = vst [vmem:[#allocation2 + $0x260] sm:$0xff] %v4638
    %4735 = vst [vmem:[#allocation2 + $0x268] sm:$0xff] %v4639
    %4736 = vst [vmem:[#allocation2 + $0x270] sm:$0xff] %v4640
    %4737 = vst [vmem:[#allocation2 + $0x278] sm:$0xff] %v4641
    %4738 = vst [vmem:[#allocation2 + $0x280] sm:$0xff] %v4642
    %4739 = vst [vmem:[#allocation2 + $0x288] sm:$0xff] %v4643
    %4740 = vst [vmem:[#allocation2 + $0x290] sm:$0xff] %v4644
    %4741 = vst [vmem:[#allocation2 + $0x298] sm:$0xff] %v4645
    %4742 = vst [vmem:[#allocation2 + $0x2a0] sm:$0xff] %v4646
    %4743 = vst [vmem:[#allocation2 + $0x2a8] sm:$0xff] %v4647
    %4744 = vst [vmem:[#allocation2 + $0x2b0] sm:$0xff] %v4648
    %4745 = vst [vmem:[#allocation2 + $0x2b8] sm:$0xff] %v4649
    %4746 = vst [vmem:[#allocation2 + $0x2c0] sm:$0xff] %v4650
    %4747 = vst [vmem:[#allocation2 + $0x2c8] sm:$0xff] %v4651
    %4748 = vst [vmem:[#allocation2 + $0x2d0] sm:$0xff] %v4652
    %4749 = vst [vmem:[#allocation2 + $0x2d8] sm:$0xff] %v4653
    %4750 = vst [vmem:[#allocation2 + $0x2e0] sm:$0xff] %v4654
    %4751 = vst [vmem:[#allocation2 + $0x2e8] sm:$0xff] %v4655
    %4752 = vst [vmem:[#allocation2 + $0x2f0] sm:$0xff] %v4656
    %4753 = vst [vmem:[#allocation2 + $0x2f8] sm:$0xff] %v4657
    // Predicated region
    $region22: #{tpu_custom_call.1} parent=1 // pred_check
      %p4754 = pneg %p42
    $region23: #{tpu_custom_call.1} parent=1 // pred_check_branch
      %4756 = sbr.rel (%p4754) target = $region25
    $region24: #{tpu_custom_call.1} parent=1 // pred_region
      %v4757 = vld [vmem:[#allocation2] sm:$0xff]
      %v4758 = vld [vmem:[#allocation2 + $0x8] sm:$0xff]
      %v4759 = vld [vmem:[#allocation2 + $0x10] sm:$0xff]
      %v4760 = vld [vmem:[#allocation2 + $0x18] sm:$0xff]
      %v4761 = vld [vmem:[#allocation2 + $0x20] sm:$0xff]
      %v4762 = vld [vmem:[#allocation2 + $0x28] sm:$0xff]
      %v4763 = vld [vmem:[#allocation2 + $0x30] sm:$0xff]
      %v4764 = vld [vmem:[#allocation2 + $0x38] sm:$0xff]
      %v4765 = vld [vmem:[#allocation2 + $0x40] sm:$0xff]
      %v4766 = vld [vmem:[#allocation2 + $0x48] sm:$0xff]
      %v4767 = vld [vmem:[#allocation2 + $0x50] sm:$0xff]
      %v4768 = vld [vmem:[#allocation2 + $0x58] sm:$0xff]
      %v4769 = vld [vmem:[#allocation2 + $0x60] sm:$0xff]
      %v4770 = vld [vmem:[#allocation2 + $0x68] sm:$0xff]
      %v4771 = vld [vmem:[#allocation2 + $0x70] sm:$0xff]
      %v4772 = vld [vmem:[#allocation2 + $0x78] sm:$0xff]
      %v4773 = vld [vmem:[#allocation2 + $0x80] sm:$0xff]
      %v4774 = vld [vmem:[#allocation2 + $0x88] sm:$0xff]
      %v4775 = vld [vmem:[#allocation2 + $0x90] sm:$0xff]
      %v4776 = vld [vmem:[#allocation2 + $0x98] sm:$0xff]
      %v4777 = vld [vmem:[#allocation2 + $0xa0] sm:$0xff]
      %v4778 = vld [vmem:[#allocation2 + $0xa8] sm:$0xff]
      %v4779 = vld [vmem:[#allocation2 + $0xb0] sm:$0xff]
      %v4780 = vld [vmem:[#allocation2 + $0xb8] sm:$0xff]
      %v4781 = vld [vmem:[#allocation2 + $0xc0] sm:$0xff]
      %v4782 = vld [vmem:[#allocation2 + $0xc8] sm:$0xff]
      %v4783 = vld [vmem:[#allocation2 + $0xd0] sm:$0xff]
      %v4784 = vld [vmem:[#allocation2 + $0xd8] sm:$0xff]
      %v4785 = vld [vmem:[#allocation2 + $0xe0] sm:$0xff]
      %v4786 = vld [vmem:[#allocation2 + $0xe8] sm:$0xff]
      %v4787 = vld [vmem:[#allocation2 + $0xf0] sm:$0xff]
      %v4788 = vld [vmem:[#allocation2 + $0xf8] sm:$0xff]
      %v4789 = vld [vmem:[#allocation2 + $0x100] sm:$0xff]
      %v4790 = vld [vmem:[#allocation2 + $0x108] sm:$0xff]
      %v4791 = vld [vmem:[#allocation2 + $0x110] sm:$0xff]
      %v4792 = vld [vmem:[#allocation2 + $0x118] sm:$0xff]
      %v4793 = vld [vmem:[#allocation2 + $0x120] sm:$0xff]
      %v4794 = vld [vmem:[#allocation2 + $0x128] sm:$0xff]
      %v4795 = vld [vmem:[#allocation2 + $0x130] sm:$0xff]
      %v4796 = vld [vmem:[#allocation2 + $0x138] sm:$0xff]
      %v4797 = vld [vmem:[#allocation2 + $0x140] sm:$0xff]
      %v4798 = vld [vmem:[#allocation2 + $0x148] sm:$0xff]
      %v4799 = vld [vmem:[#allocation2 + $0x150] sm:$0xff]
      %v4800 = vld [vmem:[#allocation2 + $0x158] sm:$0xff]
      %v4801 = vld [vmem:[#allocation2 + $0x160] sm:$0xff]
      %v4802 = vld [vmem:[#allocation2 + $0x168] sm:$0xff]
      %v4803 = vld [vmem:[#allocation2 + $0x170] sm:$0xff]
      %v4804 = vld [vmem:[#allocation2 + $0x178] sm:$0xff]
      %v4805 = vld [vmem:[#allocation2 + $0x180] sm:$0xff]
      %v4806 = vld [vmem:[#allocation2 + $0x188] sm:$0xff]
      %v4807 = vld [vmem:[#allocation2 + $0x190] sm:$0xff]
      %v4808 = vld [vmem:[#allocation2 + $0x198] sm:$0xff]
      %v4809 = vld [vmem:[#allocation2 + $0x1a0] sm:$0xff]
      %v4810 = vld [vmem:[#allocation2 + $0x1a8] sm:$0xff]
      %v4811 = vld [vmem:[#allocation2 + $0x1b0] sm:$0xff]
      %v4812 = vld [vmem:[#allocation2 + $0x1b8] sm:$0xff]
      %v4813 = vld [vmem:[#allocation2 + $0x1c0] sm:$0xff]
      %v4814 = vld [vmem:[#allocation2 + $0x1c8] sm:$0xff]
      %v4815 = vld [vmem:[#allocation2 + $0x1d0] sm:$0xff]
      %v4816 = vld [vmem:[#allocation2 + $0x1d8] sm:$0xff]
      %v4817 = vld [vmem:[#allocation2 + $0x1e0] sm:$0xff]
      %v4818 = vld [vmem:[#allocation2 + $0x1e8] sm:$0xff]
      %v4819 = vld [vmem:[#allocation2 + $0x1f0] sm:$0xff]
      %v4820 = vld [vmem:[#allocation2 + $0x1f8] sm:$0xff]
      %v4821 = vld [vmem:[#allocation2 + $0x200] sm:$0xff]
      %v4822 = vld [vmem:[#allocation2 + $0x208] sm:$0xff]
      %v4823 = vld [vmem:[#allocation2 + $0x210] sm:$0xff]
      %v4824 = vld [vmem:[#allocation2 + $0x218] sm:$0xff]
      %v4825 = vld [vmem:[#allocation2 + $0x220] sm:$0xff]
      %v4826 = vld [vmem:[#allocation2 + $0x228] sm:$0xff]
      %v4827 = vld [vmem:[#allocation2 + $0x230] sm:$0xff]
      %v4828 = vld [vmem:[#allocation2 + $0x238] sm:$0xff]
      %v4829 = vld [vmem:[#allocation2 + $0x240] sm:$0xff]
      %v4830 = vld [vmem:[#allocation2 + $0x248] sm:$0xff]
      %v4831 = vld [vmem:[#allocation2 + $0x250] sm:$0xff]
      %v4832 = vld [vmem:[#allocation2 + $0x258] sm:$0xff]
      %v4833 = vld [vmem:[#allocation2 + $0x260] sm:$0xff]
      %v4834 = vld [vmem:[#allocation2 + $0x268] sm:$0xff]
      %v4835 = vld [vmem:[#allocation2 + $0x270] sm:$0xff]
      %v4836 = vld [vmem:[#allocation2 + $0x278] sm:$0xff]
      %v4837 = vld [vmem:[#allocation2 + $0x280] sm:$0xff]
      %v4838 = vld [vmem:[#allocation2 + $0x288] sm:$0xff]
      %v4839 = vld [vmem:[#allocation2 + $0x290] sm:$0xff]
      %v4840 = vld [vmem:[#allocation2 + $0x298] sm:$0xff]
      %v4841 = vld [vmem:[#allocation2 + $0x2a0] sm:$0xff]
      %v4842 = vld [vmem:[#allocation2 + $0x2a8] sm:$0xff]
      %v4843 = vld [vmem:[#allocation2 + $0x2b0] sm:$0xff]
      %v4844 = vld [vmem:[#allocation2 + $0x2b8] sm:$0xff]
      %v4845 = vld [vmem:[#allocation2 + $0x2c0] sm:$0xff]
      %v4846 = vld [vmem:[#allocation2 + $0x2c8] sm:$0xff]
      %v4847 = vld [vmem:[#allocation2 + $0x2d0] sm:$0xff]
      %v4848 = vld [vmem:[#allocation2 + $0x2d8] sm:$0xff]
      %v4849 = vld [vmem:[#allocation2 + $0x2e0] sm:$0xff]
      %v4850 = vld [vmem:[#allocation2 + $0x2e8] sm:$0xff]
      %v4851 = vld [vmem:[#allocation2 + $0x2f0] sm:$0xff]
      %v4852 = vld [vmem:[#allocation2 + $0x2f8] sm:$0xff]
      %v4853 = vadd.f32 %v4757, %v4758
      %v4854 = vadd.f32 %v4853, %v4759
      %v4855 = vadd.f32 %v4854, %v4760
      %v4856 = vadd.f32 %v4855, %v4761
      %v4857 = vadd.f32 %v4856, %v4762
      %v4858 = vadd.f32 %v4857, %v4763
      %v4859 = vadd.f32 %v4858, %v4764
      %v4860 = vadd.f32 %v4859, %v4765
      %v4861 = vadd.f32 %v4860, %v4766
      %v4862 = vadd.f32 %v4861, %v4767
      %v4863 = vadd.f32 %v4862, %v4768
      %v4864 = vadd.f32 %v4863, %v4769
      %v4865 = vadd.f32 %v4864, %v4770
      %v4866 = vadd.f32 %v4865, %v4771
      %v4867 = vadd.f32 %v4866, %v4772
      %v4868 = vadd.f32 %v4867, %v4773
      %v4869 = vadd.f32 %v4868, %v4774
      %v4870 = vadd.f32 %v4869, %v4775
      %v4871 = vadd.f32 %v4870, %v4776
      %v4872 = vadd.f32 %v4871, %v4777
      %v4873 = vadd.f32 %v4872, %v4778
      %v4874 = vadd.f32 %v4873, %v4779
      %v4875 = vadd.f32 %v4874, %v4780
      %v4876 = vadd.f32 %v4875, %v4781
      %v4877 = vadd.f32 %v4876, %v4782
      %v4878 = vadd.f32 %v4877, %v4783
      %v4879 = vadd.f32 %v4878, %v4784
      %v4880 = vadd.f32 %v4879, %v4785
      %v4881 = vadd.f32 %v4880, %v4786
      %v4882 = vadd.f32 %v4881, %v4787
      %v4883 = vadd.f32 %v4882, %v4788
      %v4884 = vadd.f32 %v4883, %v4789
      %v4885 = vadd.f32 %v4884, %v4790
      %v4886 = vadd.f32 %v4885, %v4791
      %v4887 = vadd.f32 %v4886, %v4792
      %v4888 = vadd.f32 %v4887, %v4793
      %v4889 = vadd.f32 %v4888, %v4794
      %v4890 = vadd.f32 %v4889, %v4795
      %v4891 = vadd.f32 %v4890, %v4796
      %v4892 = vadd.f32 %v4891, %v4797
      %v4893 = vadd.f32 %v4892, %v4798
      %v4894 = vadd.f32 %v4893, %v4799
      %v4895 = vadd.f32 %v4894, %v4800
      %v4896 = vadd.f32 %v4895, %v4801
      %v4897 = vadd.f32 %v4896, %v4802
      %v4898 = vadd.f32 %v4897, %v4803
      %v4899 = vadd.f32 %v4898, %v4804
      %v4900 = vadd.f32 %v4899, %v4805
      %v4901 = vadd.f32 %v4900, %v4806
      %v4902 = vadd.f32 %v4901, %v4807
      %v4903 = vadd.f32 %v4902, %v4808
      %v4904 = vadd.f32 %v4903, %v4809
      %v4905 = vadd.f32 %v4904, %v4810
      %v4906 = vadd.f32 %v4905, %v4811
      %v4907 = vadd.f32 %v4906, %v4812
      %v4908 = vadd.f32 %v4907, %v4813
      %v4909 = vadd.f32 %v4908, %v4814
      %v4910 = vadd.f32 %v4909, %v4815
      %v4911 = vadd.f32 %v4910, %v4816
      %v4912 = vadd.f32 %v4911, %v4817
      %v4913 = vadd.f32 %v4912, %v4818
      %v4914 = vadd.f32 %v4913, %v4819
      %v4915 = vadd.f32 %v4914, %v4820
      %v4916 = vadd.f32 %v4915, %v4821
      %v4917 = vadd.f32 %v4916, %v4822
      %v4918 = vadd.f32 %v4917, %v4823
      %v4919 = vadd.f32 %v4918, %v4824
      %v4920 = vadd.f32 %v4919, %v4825
      %v4921 = vadd.f32 %v4920, %v4826
      %v4922 = vadd.f32 %v4921, %v4827
      %v4923 = vadd.f32 %v4922, %v4828
      %v4924 = vadd.f32 %v4923, %v4829
      %v4925 = vadd.f32 %v4924, %v4830
      %v4926 = vadd.f32 %v4925, %v4831
      %v4927 = vadd.f32 %v4926, %v4832
      %v4928 = vadd.f32 %v4927, %v4833
      %v4929 = vadd.f32 %v4928, %v4834
      %v4930 = vadd.f32 %v4929, %v4835
      %v4931 = vadd.f32 %v4930, %v4836
      %v4932 = vadd.f32 %v4931, %v4837
      %v4933 = vadd.f32 %v4932, %v4838
      %v4934 = vadd.f32 %v4933, %v4839
      %v4935 = vadd.f32 %v4934, %v4840
      %v4936 = vadd.f32 %v4935, %v4841
      %v4937 = vadd.f32 %v4936, %v4842
      %v4938 = vadd.f32 %v4937, %v4843
      %v4939 = vadd.f32 %v4938, %v4844
      %v4940 = vadd.f32 %v4939, %v4845
      %v4941 = vadd.f32 %v4940, %v4846
      %v4942 = vadd.f32 %v4941, %v4847
      %v4943 = vadd.f32 %v4942, %v4848
      %v4944 = vadd.f32 %v4943, %v4849
      %v4945 = vadd.f32 %v4944, %v4850
      %v4946 = vadd.f32 %v4945, %v4851
      %v4947 = vadd.f32 %v4946, %v4852
      %4948 = vadd.xlane.f32.xlu0 %v4947
      %v4949 = vpop.xlane.xlu0 %4948
      %v4950 = vrot.slane %v4949, 4
      %v4951 = vadd.f32 %v4949, %v4950
      %v4952 = vrot.slane %v4951, 2
      %v4953 = vadd.f32 %v4951, %v4952
      %v4954 = vrot.slane %v4953, 1
      %v4955 = vadd.f32 %v4953, %v4954
      %s4956 = vtos %v4955
      %v4957 = vstv %s4956
      %vm4958 = vcmask 0
      %4959 = vst.msk [vmem:[#allocation8] sm:$0x1] %vm4958, %v4957
    $region25: #{tpu_custom_call.1} parent=1 // pred_fallthru
      _
    // Predicated region
    $region26: #{tpu_custom_call.1} parent=1 // pred_check
      _
    $region27: #{tpu_custom_call.1} parent=1 // pred_check_branch
      %4961 = sbr.rel (0) target = $region29
    $region28: #{tpu_custom_call.1} parent=1 // pred_region
      %4963 = vsyncadd [#allocation5], 0
      %s4965 = sshll.u32 [#allocation8], 4
      %s4966 = int_to_ptr.vmem [resolvable:$true] %s4965
      %s4967 = sshll.u32 %s2, 4
      %s4968 = int_to_ptr.hbm [resolvable:$true] %s4967
      %4970 = dma.vmem_to_hbm [thread:$0]  %s4966, 16, %s4968, [#allocation5]
    $region29: #{tpu_custom_call.1} parent=1 // pred_fallthru
      _
    // Predicated region
    $region30: #{tpu_custom_call.1} parent=1 // pred_check
      _
    $region31: #{tpu_custom_call.1} parent=1 // pred_check_branch
      %4972 = sbr.rel (0) target = $region33
    $region32: #{tpu_custom_call.1} parent=1 // pred_region
      %4974 = dma.done [#allocation5], 16
    $region33: #{tpu_custom_call.1} parent=1 // pred_fallthru
      _
    %4975 = vsyncpa [#allocation4], 1
    %4976 = vsyncpa [#allocation7], 1
    %4977 = vsyncpa [#allocation5], 1

</llo_original>
